<compile_context>
chip_gen: v7x
topology: tpu7x:2x2x1
jax: 0.10.0
libtpu: 0.0.40
codegen_flags: <defaults>
</compile_context>

<pallas_src>
import jax
import jax.numpy as jnp
from jax.experimental import pallas as pl
from jax.experimental.pallas import tpu as pltpu

EPS = 1e-5


def _ln_relu(h, gamma_ref, beta_ref):
    """LayerNorm([C, N]) over one batch element's full (C, N) tile, then ReLU.

    Single-pass statistics (sum & sum-of-squares together) kept as (1, 1)
    keepdims vregs; variance clamped to >= 0 before rsqrt.  gamma/beta are
    read from their refs at point of use (no long live ranges across the
    unrolled batch loop).
    """
    cnt = h.shape[0] * h.shape[1]
    inv = 1.0 / cnt
    s = jnp.sum(h, axis=(0, 1), keepdims=True)           # (1, 1)
    ss = jnp.sum(h * h, axis=(0, 1), keepdims=True)      # (1, 1)
    mean = s * inv
    var = jnp.maximum(ss * inv - mean * mean, 0.0)
    rstd = jax.lax.rsqrt(var + EPS)
    return jnp.maximum((h - mean) * rstd * gamma_ref[...] + beta_ref[...], 0.0)


def extr_point_feat_kernel(x_ref,
                           w1_ref, b1_ref, g1_ref, be1_ref,
                           w2_ref, b2_ref, g2_ref, be2_ref,
                           w3_ref, b3_ref, g3_ref, be3_ref,
                           maxv_ref, argmax_ref):
    bt, cin, n = x_ref.shape

    # Tiny per-layer matmul weights / biases (loaded once per grid step).
    w1 = w1_ref[...]                                      # (C1, Cin)
    b1 = b1_ref[...]                                      # (C1, 1)
    w2 = w2_ref[...]                                      # (C2, C1)
    b2 = b2_ref[...]
    w3 = w3_ref[...]                                      # (C3, C2)
    b3 = b3_ref[...]

    # (1, N) int32 iota for the first-occurrence argmax; broadcast across
    # sublanes inside jnp.where (only N*4 bytes live across the batch loop).
    iota = jax.lax.broadcasted_iota(jnp.int32, (1, n), 1)

    for i in range(bt):                                   # bt is static & small
        x = x_ref[i]                                      # (Cin, N) f32

        # Layer 1: K = Cin (= 4) is tiny -> rank-1 VPU accumulation; keeps the
        # MXU slot free instead of a badly underfilled padded contraction.
        h = b1 + w1[:, 0:1] * x[0:1, :]
        for k in range(1, cin):
            h = h + w1[:, k:k + 1] * x[k:k + 1, :]
        h = _ln_relu(h, g1_ref, be1_ref)

        # Layers 2 & 3: f32 MXU matmuls, f32 accumulate.
        h = jnp.dot(w2, h, preferred_element_type=jnp.float32) + b2
        h = _ln_relu(h, g2_ref, be2_ref)
        h = jnp.dot(w3, h, preferred_element_type=jnp.float32) + b3
        h = _ln_relu(h, g3_ref, be3_ref)                  # (C_last, N)

        # torch.max(x, 2): values + first-occurrence argmax over N.
        # (Tie-break is first occurrence, matching jnp.argmax; PyTorch does
        #  not guarantee a particular index on exact ties.)
        vmax = jnp.max(h, axis=1, keepdims=True)          # (C_last, 1)
        idx = jnp.min(jnp.where(h == vmax, iota, n), axis=1)   # (C_last,)

        # Store rows directly into the (bt, c3) output blocks; the dense
        # lane-aligned HBM writeback slab is unchanged (out BlockSpec).
        maxv_ref[i, :] = vmax[:, 0]
        argmax_ref[i, :] = idx.astype(jnp.int32)


def _batch_tiling(b):
    """Return (padded batch, batch tile).

    Batches > 8 are padded to a multiple of 8 and processed in 8-row
    sublane-aligned blocks (>= 2 "parallel" grid steps -> both v7x
    TensorCores get work).  Tiny batches keep one fat full-batch block —
    padding them to 16 would waste more compute than a second TC recovers.
    """
    if b <= 8:
        return b, b
    b_pad = ((b + 7) // 8) * 8
    return b_pad, 8


def _param_spec(shape):
    """Whole-array, grid-invariant, single-buffered param BlockSpec."""
    ndim = len(shape)

    def idx(g, _nd=ndim):
        return (0,) * _nd

    try:
        return pl.BlockSpec(tuple(shape), idx, pipeline_mode=pl.Buffered(1))
    except TypeError:  # older pallas without pipeline_mode: fall back
        return pl.BlockSpec(tuple(shape), idx)


def _vmem_cap_bytes():
    """~75% of physical VMEM (≈96 MiB v5e/v6e, ≈48 MiB v7x); safe fallback."""
    try:
        info = pltpu.get_tpu_info()
        phys = getattr(info, "vmem_capacity_bytes", None)
        if phys:
            return int(phys * 3 // 4)
    except Exception:
        pass
    return 48 << 20


def extr_point_feat(x, params):
    """x: (B, Cin, N) f32; params: 3 tuples (w (Co,Ci), b (Co,1), gamma (Co,N), beta (Co,N)).

    Returns (max values (B, C_last) f32, argmax indices (B, C_last) int32).
    """
    B, Cin, N = x.shape
    c1 = params[0][0].shape[0]
    c2 = params[1][0].shape[0]
    c3 = params[2][0].shape[0]
    (w1, b1, g1, be1), (w2, b2, g2, be2), (w3, b3, g3, be3) = params

    flat = [w1, b1, g1, be1, w2, b2, g2, be2, w3, b3, g3, be3]
    flat = [a.astype(jnp.float32) for a in flat]

    b_pad, bt = _batch_tiling(B)
    if b_pad != B:
        # Zero padding is safe: LN variance is clamped >= 0 and EPS keeps
        # rsqrt finite; padded rows are sliced off below.
        x = jnp.pad(x, ((0, b_pad - B), (0, 0), (0, 0)))
    grid = (b_pad // bt,)

    in_specs = [pl.BlockSpec((bt, Cin, N), lambda g: (g, 0, 0))]
    in_specs += [_param_spec(a.shape) for a in flat]
    out_specs = [pl.BlockSpec((bt, c3), lambda g: (g, 0)),
                 pl.BlockSpec((bt, c3), lambda g: (g, 0))]
    out_shape = (jax.ShapeDtypeStruct((b_pad, c3), jnp.float32),
                 jax.ShapeDtypeStruct((b_pad, c3), jnp.int32))

    # VMEM budget: single-buffered params + double-buffered x/output blocks +
    # a handful of live (C, N) f32 intermediates + headroom for compiler
    # scratch.  Clamped below ~75% of physical VMEM for the current chip.
    param_bytes = sum(int(a.size) * a.dtype.itemsize for a in flat)
    blk_bytes = bt * Cin * N * 4 + bt * c3 * 8
    interm_bytes = 6 * max(c1, c2, c3) * N * 4
    vmem_needed = param_bytes + 2 * blk_bytes + interm_bytes + (2 << 20)
    vmem_limit = int(min(max(vmem_needed, 16 << 20), _vmem_cap_bytes()))

    matmul_flops = 2 * b_pad * N * (c1 * Cin + c2 * c1 + c3 * c2)
    elem_flops = 10 * b_pad * N * (c1 + c2 + c3)
    cost = pl.CostEstimate(
        flops=matmul_flops + elem_flops,
        transcendentals=3 * b_pad,
        bytes_accessed=int(x.size) * 4 + param_bytes + b_pad * c3 * 8)

    maxv, argmax = pl.pallas_call(
        extr_point_feat_kernel,
        out_shape=out_shape,
        grid_spec=pltpu.PrefetchScalarGridSpec(
            num_scalar_prefetch=0,
            grid=grid,
            in_specs=in_specs,
            out_specs=out_specs,
        ),
        compiler_params=pltpu.CompilerParams(
            dimension_semantics=("parallel",),
            vmem_limit_bytes=vmem_limit,
        ),
        cost_estimate=cost,
    )(x, *flat)

    if b_pad != B:
        maxv = maxv[:B]
        argmax = argmax[:B]
    return maxv, argmax


def reference(x, params):
    """Pure-JAX reference matching the PyTorch module (f32, two-pass LN)."""
    h = x
    for (w, b, g, be) in params:
        h = jnp.einsum('oc,bcn->bon', w, h) + b[None]
        mean = jnp.mean(h, axis=(1, 2), keepdims=True)
        var = jnp.mean((h - mean) ** 2, axis=(1, 2), keepdims=True)
        h = jnp.maximum((h - mean) / jnp.sqrt(var + EPS) * g[None] + be[None],
                        0.0)
    return jnp.max(h, axis=2), jnp.argmax(h, axis=2).astype(jnp.int32), h


if __name__ == "__main__":
    # Small shapes consistent with the module (in_channels=4, layer_list and N
    # scaled down).
    B, Cin, N = 2, 4, 256
    layer_list = [32, 64, 128]

    key = jax.random.PRNGKey(0)
    keys = jax.random.split(key, 1 + 4 * len(layer_list))
    x = jax.random.normal(keys[0], (B, Cin, N), dtype=jnp.float32)

    params = []
    prev = Cin
    ki = 1
    for c in layer_list:
        w = 0.2 * jax.random.normal(keys[ki], (c, prev), dtype=jnp.float32)
        b = 0.1 * jax.random.normal(keys[ki + 1], (c, 1), dtype=jnp.float32)
        gamma = 1.0 + 0.1 * jax.random.normal(keys[ki + 2], (c, N),
                                              dtype=jnp.float32)
        beta = 0.1 * jax.random.normal(keys[ki + 3], (c, N), dtype=jnp.float32)
        params.append((w, b, gamma, beta))
        prev = c
        ki += 4

    ref_v, ref_i, _ = reference(x, params)

    maxv, argmax = extr_point_feat(x, params)
    jax.block_until_ready((maxv, argmax))

    assert maxv.shape == (B, layer_list[-1]) and argmax.shape == (B, layer_list[-1])
    assert jnp.allclose(maxv, ref_v, atol=1e-4, rtol=1e-4), "max values mismatch"
    assert jnp.array_equal(argmax, ref_i), "argmax mismatch"

    print("KERNEL_OK")
</pallas_src>

<mosaic_0001>
module attributes {stable_mosaic.version = 11 : i64} {
  func.func @extr_point_feat_kernel(%arg0: i32, %arg1: memref<2x4x256xf32, #tpu.memory_space<vmem>>, %arg2: memref<32x4xf32, #tpu.memory_space<vmem>>, %arg3: memref<32x1xf32, #tpu.memory_space<vmem>>, %arg4: memref<32x256xf32, #tpu.memory_space<vmem>>, %arg5: memref<32x256xf32, #tpu.memory_space<vmem>>, %arg6: memref<64x32xf32, #tpu.memory_space<vmem>>, %arg7: memref<64x1xf32, #tpu.memory_space<vmem>>, %arg8: memref<64x256xf32, #tpu.memory_space<vmem>>, %arg9: memref<64x256xf32, #tpu.memory_space<vmem>>, %arg10: memref<128x64xf32, #tpu.memory_space<vmem>>, %arg11: memref<128x1xf32, #tpu.memory_space<vmem>>, %arg12: memref<128x256xf32, #tpu.memory_space<vmem>>, %arg13: memref<128x256xf32, #tpu.memory_space<vmem>>, %arg14: memref<2x128xf32, #tpu.memory_space<vmem>>, %arg15: memref<2x128xi32, #tpu.memory_space<vmem>>) attributes {dimension_semantics = [#tpu.dimension_semantics<parallel>], iteration_bounds = array<i64: 1>, scalar_prefetch = 0 : i64, scratch_operands = 0 : i64, tpu.core_type = #tpu.core_type<tc>, window_params = [{transform_indices = @transform_0, window_bounds = array<i64: 2, 4, 256>}, {pipeline_mode = #tpu.pipeline_mode<synchronous>, transform_indices = @transform_1, window_bounds = array<i64: 32, 4>}, {pipeline_mode = #tpu.pipeline_mode<synchronous>, transform_indices = @transform_2, window_bounds = array<i64: 32, 1>}, {pipeline_mode = #tpu.pipeline_mode<synchronous>, transform_indices = @transform_3, window_bounds = array<i64: 32, 256>}, {pipeline_mode = #tpu.pipeline_mode<synchronous>, transform_indices = @transform_4, window_bounds = array<i64: 32, 256>}, {pipeline_mode = #tpu.pipeline_mode<synchronous>, transform_indices = @transform_5, window_bounds = array<i64: 64, 32>}, {pipeline_mode = #tpu.pipeline_mode<synchronous>, transform_indices = @transform_6, window_bounds = array<i64: 64, 1>}, {pipeline_mode = #tpu.pipeline_mode<synchronous>, transform_indices = @transform_7, window_bounds = array<i64: 64, 256>}, {pipeline_mode = #tpu.pipeline_mode<synchronous>, transform_indices = @transform_8, window_bounds = array<i64: 64, 256>}, {pipeline_mode = #tpu.pipeline_mode<synchronous>, transform_indices = @transform_9, window_bounds = array<i64: 128, 64>}, {pipeline_mode = #tpu.pipeline_mode<synchronous>, transform_indices = @transform_10, window_bounds = array<i64: 128, 1>}, {pipeline_mode = #tpu.pipeline_mode<synchronous>, transform_indices = @transform_11, window_bounds = array<i64: 128, 256>}, {pipeline_mode = #tpu.pipeline_mode<synchronous>, transform_indices = @transform_12, window_bounds = array<i64: 128, 256>}, {transform_indices = @transform_13, window_bounds = array<i64: 2, 128>}, {transform_indices = @transform_14, window_bounds = array<i64: 2, 128>}]} {
    %c0 = arith.constant 0 : index
    %c0_0 = arith.constant 0 : index
    %0 = vector.load %arg2[%c0, %c0_0] : memref<32x4xf32, #tpu.memory_space<vmem>>, vector<32x4xf32>
    %c0_1 = arith.constant 0 : index
    %c0_2 = arith.constant 0 : index
    %1 = vector.load %arg3[%c0_1, %c0_2] : memref<32x1xf32, #tpu.memory_space<vmem>>, vector<32x1xf32>
    %c0_3 = arith.constant 0 : index
    %c0_4 = arith.constant 0 : index
    %2 = vector.load %arg6[%c0_3, %c0_4] : memref<64x32xf32, #tpu.memory_space<vmem>>, vector<64x32xf32>
    %c0_5 = arith.constant 0 : index
    %c0_6 = arith.constant 0 : index
    %3 = vector.load %arg7[%c0_5, %c0_6] : memref<64x1xf32, #tpu.memory_space<vmem>>, vector<64x1xf32>
    %c0_7 = arith.constant 0 : index
    %c0_8 = arith.constant 0 : index
    %4 = vector.load %arg10[%c0_7, %c0_8] : memref<128x64xf32, #tpu.memory_space<vmem>>, vector<128x64xf32>
    %c0_9 = arith.constant 0 : index
    %c0_10 = arith.constant 0 : index
    %5 = vector.load %arg11[%c0_9, %c0_10] : memref<128x1xf32, #tpu.memory_space<vmem>>, vector<128x1xf32>
    %6 = tpu.iota {dimensions = array<i32: 1>} : vector<1x256xi32>
    %c0_11 = arith.constant 0 : index
    %c0_12 = arith.constant 0 : index
    %c0_13 = arith.constant 0 : index
    %7 = vector.load %arg1[%c0_11, %c0_12, %c0_13] : memref<2x4x256xf32, #tpu.memory_space<vmem>>, vector<1x4x256xf32>
    %8 = vector.shape_cast %7 : vector<1x4x256xf32> to vector<4x256xf32>
    %9 = vector.extract_strided_slice %0 {offsets = [0, 0], sizes = [32, 1], strides = [1, 1]} : vector<32x4xf32> to vector<32x1xf32>
    %10 = vector.extract_strided_slice %8 {offsets = [0, 0], sizes = [1, 256], strides = [1, 1]} : vector<4x256xf32> to vector<1x256xf32>
    %11 = vector.broadcast %9 : vector<32x1xf32> to vector<32x256xf32>
    %12 = vector.broadcast %10 : vector<1x256xf32> to vector<32x256xf32>
    %13 = arith.mulf %11, %12 : vector<32x256xf32>
    %14 = vector.broadcast %1 : vector<32x1xf32> to vector<32x256xf32>
    %15 = arith.addf %14, %13 : vector<32x256xf32>
    %16 = vector.extract_strided_slice %0 {offsets = [0, 1], sizes = [32, 1], strides = [1, 1]} : vector<32x4xf32> to vector<32x1xf32>
    %17 = vector.extract_strided_slice %8 {offsets = [1, 0], sizes = [1, 256], strides = [1, 1]} : vector<4x256xf32> to vector<1x256xf32>
    %18 = vector.broadcast %16 : vector<32x1xf32> to vector<32x256xf32>
    %19 = vector.broadcast %17 : vector<1x256xf32> to vector<32x256xf32>
    %20 = arith.mulf %18, %19 : vector<32x256xf32>
    %21 = arith.addf %15, %20 : vector<32x256xf32>
    %22 = vector.extract_strided_slice %0 {offsets = [0, 2], sizes = [32, 1], strides = [1, 1]} : vector<32x4xf32> to vector<32x1xf32>
    %23 = vector.extract_strided_slice %8 {offsets = [2, 0], sizes = [1, 256], strides = [1, 1]} : vector<4x256xf32> to vector<1x256xf32>
    %24 = vector.broadcast %22 : vector<32x1xf32> to vector<32x256xf32>
    %25 = vector.broadcast %23 : vector<1x256xf32> to vector<32x256xf32>
    %26 = arith.mulf %24, %25 : vector<32x256xf32>
    %27 = arith.addf %21, %26 : vector<32x256xf32>
    %28 = vector.extract_strided_slice %0 {offsets = [0, 3], sizes = [32, 1], strides = [1, 1]} : vector<32x4xf32> to vector<32x1xf32>
    %29 = vector.extract_strided_slice %8 {offsets = [3, 0], sizes = [1, 256], strides = [1, 1]} : vector<4x256xf32> to vector<1x256xf32>
    %30 = vector.broadcast %28 : vector<32x1xf32> to vector<32x256xf32>
    %31 = vector.broadcast %29 : vector<1x256xf32> to vector<32x256xf32>
    %32 = arith.mulf %30, %31 : vector<32x256xf32>
    %33 = arith.addf %27, %32 : vector<32x256xf32>
    %34 = vector.shape_cast %33 : vector<32x256xf32> to vector<1x32x256xf32>
    %cst = arith.constant dense<0.000000e+00> : vector<1xf32>
    %35 = vector.multi_reduction <add>, %34, %cst [1, 2] : vector<1x32x256xf32> to vector<1xf32>
    %36 = vector.shape_cast %35 : vector<1xf32> to vector<1x1x1xf32>
    %37 = vector.extract %36[0, 0, 0] : f32 from vector<1x1x1xf32>
    %38 = vector.broadcast %37 : f32 to vector<1x1xf32>
    %39 = arith.mulf %33, %33 : vector<32x256xf32>
    %40 = vector.shape_cast %39 : vector<32x256xf32> to vector<1x32x256xf32>
    %cst_14 = arith.constant dense<0.000000e+00> : vector<1xf32>
    %41 = vector.multi_reduction <add>, %40, %cst_14 [1, 2] : vector<1x32x256xf32> to vector<1xf32>
    %42 = vector.shape_cast %41 : vector<1xf32> to vector<1x1x1xf32>
    %43 = vector.extract %42[0, 0, 0] : f32 from vector<1x1x1xf32>
    %44 = vector.broadcast %43 : f32 to vector<1x1xf32>
    %cst_15 = arith.constant 1.22070313E-4 : f32
    %45 = vector.broadcast %cst_15 : f32 to vector<1x1xf32>
    %46 = arith.mulf %38, %45 : vector<1x1xf32>
    %cst_16 = arith.constant 1.22070313E-4 : f32
    %47 = vector.broadcast %cst_16 : f32 to vector<1x1xf32>
    %48 = arith.mulf %44, %47 : vector<1x1xf32>
    %49 = arith.mulf %46, %46 : vector<1x1xf32>
    %50 = arith.subf %48, %49 : vector<1x1xf32>
    %cst_17 = arith.constant 0.000000e+00 : f32
    %51 = vector.broadcast %cst_17 : f32 to vector<1x1xf32>
    %52 = arith.maximumf %50, %51 : vector<1x1xf32>
    %cst_18 = arith.constant 9.99999974E-6 : f32
    %53 = vector.broadcast %cst_18 : f32 to vector<1x1xf32>
    %54 = arith.addf %52, %53 : vector<1x1xf32>
    %55 = math.rsqrt %54 : vector<1x1xf32>
    %56 = vector.broadcast %46 : vector<1x1xf32> to vector<32x256xf32>
    %57 = arith.subf %33, %56 : vector<32x256xf32>
    %58 = vector.broadcast %55 : vector<1x1xf32> to vector<32x256xf32>
    %59 = arith.mulf %57, %58 : vector<32x256xf32>
    %c0_19 = arith.constant 0 : index
    %c0_20 = arith.constant 0 : index
    %60 = vector.load %arg4[%c0_19, %c0_20] : memref<32x256xf32, #tpu.memory_space<vmem>>, vector<32x256xf32>
    %61 = arith.mulf %59, %60 : vector<32x256xf32>
    %c0_21 = arith.constant 0 : index
    %c0_22 = arith.constant 0 : index
    %62 = vector.load %arg5[%c0_21, %c0_22] : memref<32x256xf32, #tpu.memory_space<vmem>>, vector<32x256xf32>
    %63 = arith.addf %61, %62 : vector<32x256xf32>
    %cst_23 = arith.constant 0.000000e+00 : f32
    %64 = vector.broadcast %cst_23 : f32 to vector<32x256xf32>
    %65 = arith.maximumf %63, %64 : vector<32x256xf32>
    %cst_24 = arith.constant dense<0.000000e+00> : vector<64x256xf32>
    %66 = tpu.matmul %2, %65, %cst_24 {dimension_numbers = #tpu.dot_dimension_numbers<[1], [0], [0], [1], [0, 0, 1, 1], [], []>} : vector<64x32xf32>, vector<32x256xf32>, vector<64x256xf32> -> vector<64x256xf32>
    %67 = vector.broadcast %3 : vector<64x1xf32> to vector<64x256xf32>
    %68 = arith.addf %66, %67 : vector<64x256xf32>
    %69 = vector.shape_cast %68 : vector<64x256xf32> to vector<1x64x256xf32>
    %cst_25 = arith.constant dense<0.000000e+00> : vector<1xf32>
    %70 = vector.multi_reduction <add>, %69, %cst_25 [1, 2] : vector<1x64x256xf32> to vector<1xf32>
    %71 = vector.shape_cast %70 : vector<1xf32> to vector<1x1x1xf32>
    %72 = vector.extract %71[0, 0, 0] : f32 from vector<1x1x1xf32>
    %73 = vector.broadcast %72 : f32 to vector<1x1xf32>
    %74 = arith.mulf %68, %68 : vector<64x256xf32>
    %75 = vector.shape_cast %74 : vector<64x256xf32> to vector<1x64x256xf32>
    %cst_26 = arith.constant dense<0.000000e+00> : vector<1xf32>
    %76 = vector.multi_reduction <add>, %75, %cst_26 [1, 2] : vector<1x64x256xf32> to vector<1xf32>
    %77 = vector.shape_cast %76 : vector<1xf32> to vector<1x1x1xf32>
    %78 = vector.extract %77[0, 0, 0] : f32 from vector<1x1x1xf32>
    %79 = vector.broadcast %78 : f32 to vector<1x1xf32>
    %cst_27 = arith.constant 6.10351563E-5 : f32
    %80 = vector.broadcast %cst_27 : f32 to vector<1x1xf32>
    %81 = arith.mulf %73, %80 : vector<1x1xf32>
    %cst_28 = arith.constant 6.10351563E-5 : f32
    %82 = vector.broadcast %cst_28 : f32 to vector<1x1xf32>
    %83 = arith.mulf %79, %82 : vector<1x1xf32>
    %84 = arith.mulf %81, %81 : vector<1x1xf32>
    %85 = arith.subf %83, %84 : vector<1x1xf32>
    %cst_29 = arith.constant 0.000000e+00 : f32
    %86 = vector.broadcast %cst_29 : f32 to vector<1x1xf32>
    %87 = arith.maximumf %85, %86 : vector<1x1xf32>
    %cst_30 = arith.constant 9.99999974E-6 : f32
    %88 = vector.broadcast %cst_30 : f32 to vector<1x1xf32>
    %89 = arith.addf %87, %88 : vector<1x1xf32>
    %90 = math.rsqrt %89 : vector<1x1xf32>
    %91 = vector.broadcast %81 : vector<1x1xf32> to vector<64x256xf32>
    %92 = arith.subf %68, %91 : vector<64x256xf32>
    %93 = vector.broadcast %90 : vector<1x1xf32> to vector<64x256xf32>
    %94 = arith.mulf %92, %93 : vector<64x256xf32>
    %c0_31 = arith.constant 0 : index
    %c0_32 = arith.constant 0 : index
    %95 = vector.load %arg8[%c0_31, %c0_32] : memref<64x256xf32, #tpu.memory_space<vmem>>, vector<64x256xf32>
    %96 = arith.mulf %94, %95 : vector<64x256xf32>
    %c0_33 = arith.constant 0 : index
    %c0_34 = arith.constant 0 : index
    %97 = vector.load %arg9[%c0_33, %c0_34] : memref<64x256xf32, #tpu.memory_space<vmem>>, vector<64x256xf32>
    %98 = arith.addf %96, %97 : vector<64x256xf32>
    %cst_35 = arith.constant 0.000000e+00 : f32
    %99 = vector.broadcast %cst_35 : f32 to vector<64x256xf32>
    %100 = arith.maximumf %98, %99 : vector<64x256xf32>
    %cst_36 = arith.constant dense<0.000000e+00> : vector<128x256xf32>
    %101 = tpu.matmul %4, %100, %cst_36 {dimension_numbers = #tpu.dot_dimension_numbers<[1], [0], [0], [1], [0, 0, 1, 1], [], []>} : vector<128x64xf32>, vector<64x256xf32>, vector<128x256xf32> -> vector<128x256xf32>
    %102 = vector.broadcast %5 : vector<128x1xf32> to vector<128x256xf32>
    %103 = arith.addf %101, %102 : vector<128x256xf32>
    %104 = vector.shape_cast %103 : vector<128x256xf32> to vector<1x128x256xf32>
    %cst_37 = arith.constant dense<0.000000e+00> : vector<1xf32>
    %105 = vector.multi_reduction <add>, %104, %cst_37 [1, 2] : vector<1x128x256xf32> to vector<1xf32>
    %106 = vector.shape_cast %105 : vector<1xf32> to vector<1x1x1xf32>
    %107 = vector.extract %106[0, 0, 0] : f32 from vector<1x1x1xf32>
    %108 = vector.broadcast %107 : f32 to vector<1x1xf32>
    %109 = arith.mulf %103, %103 : vector<128x256xf32>
    %110 = vector.shape_cast %109 : vector<128x256xf32> to vector<1x128x256xf32>
    %cst_38 = arith.constant dense<0.000000e+00> : vector<1xf32>
    %111 = vector.multi_reduction <add>, %110, %cst_38 [1, 2] : vector<1x128x256xf32> to vector<1xf32>
    %112 = vector.shape_cast %111 : vector<1xf32> to vector<1x1x1xf32>
    %113 = vector.extract %112[0, 0, 0] : f32 from vector<1x1x1xf32>
    %114 = vector.broadcast %113 : f32 to vector<1x1xf32>
    %cst_39 = arith.constant 3.05175781E-5 : f32
    %115 = vector.broadcast %cst_39 : f32 to vector<1x1xf32>
    %116 = arith.mulf %108, %115 : vector<1x1xf32>
    %cst_40 = arith.constant 3.05175781E-5 : f32
    %117 = vector.broadcast %cst_40 : f32 to vector<1x1xf32>
    %118 = arith.mulf %114, %117 : vector<1x1xf32>
    %119 = arith.mulf %116, %116 : vector<1x1xf32>
    %120 = arith.subf %118, %119 : vector<1x1xf32>
    %cst_41 = arith.constant 0.000000e+00 : f32
    %121 = vector.broadcast %cst_41 : f32 to vector<1x1xf32>
    %122 = arith.maximumf %120, %121 : vector<1x1xf32>
    %cst_42 = arith.constant 9.99999974E-6 : f32
    %123 = vector.broadcast %cst_42 : f32 to vector<1x1xf32>
    %124 = arith.addf %122, %123 : vector<1x1xf32>
    %125 = math.rsqrt %124 : vector<1x1xf32>
    %126 = vector.broadcast %116 : vector<1x1xf32> to vector<128x256xf32>
    %127 = arith.subf %103, %126 : vector<128x256xf32>
    %128 = vector.broadcast %125 : vector<1x1xf32> to vector<128x256xf32>
    %129 = arith.mulf %127, %128 : vector<128x256xf32>
    %c0_43 = arith.constant 0 : index
    %c0_44 = arith.constant 0 : index
    %130 = vector.load %arg12[%c0_43, %c0_44] : memref<128x256xf32, #tpu.memory_space<vmem>>, vector<128x256xf32>
    %131 = arith.mulf %129, %130 : vector<128x256xf32>
    %c0_45 = arith.constant 0 : index
    %c0_46 = arith.constant 0 : index
    %132 = vector.load %arg13[%c0_45, %c0_46] : memref<128x256xf32, #tpu.memory_space<vmem>>, vector<128x256xf32>
    %133 = arith.addf %131, %132 : vector<128x256xf32>
    %cst_47 = arith.constant 0.000000e+00 : f32
    %134 = vector.broadcast %cst_47 : f32 to vector<128x256xf32>
    %135 = arith.maximumf %133, %134 : vector<128x256xf32>
    %cst_48 = arith.constant dense<0xFF800000> : vector<128xf32>
    %136 = vector.multi_reduction <maximumf>, %135, %cst_48 [1] : vector<128x256xf32> to vector<128xf32>
    %137 = vector.shape_cast %136 : vector<128xf32> to vector<128x1xf32>
    %138 = vector.broadcast %137 : vector<128x1xf32> to vector<128x256xf32>
    %139 = arith.cmpf oeq, %135, %138 : vector<128x256xf32>
    %c256_i32 = arith.constant 256 : i32
    %140 = vector.shape_cast %6 : vector<1x256xi32> to vector<1x256xi32>
    %141 = vector.broadcast %140 : vector<1x256xi32> to vector<128x256xi32>
    %142 = vector.broadcast %c256_i32 : i32 to vector<128x256xi32>
    %143 = arith.select %139, %141, %142 : vector<128x256xi1>, vector<128x256xi32>
    %cst_49 = arith.constant dense<2147483647> : vector<128xi32>
    %144 = vector.multi_reduction <minsi>, %143, %cst_49 [1] : vector<128x256xi32> to vector<128xi32>
    %145 = vector.shape_cast %137 : vector<128x1xf32> to vector<128xf32>
    %c0_50 = arith.constant 0 : index
    %c0_51 = arith.constant 0 : index
    %146 = vector.load %arg14[%c0_50, %c0_51] : memref<2x128xf32, #tpu.memory_space<vmem>>, vector<1x128xf32>
    %147 = vector.shape_cast %146 : vector<1x128xf32> to vector<128xf32>
    %148 = vector.shape_cast %145 : vector<128xf32> to vector<1x128xf32>
    tpu.vector_store %arg14[%c0_50, %c0_51], %148 {strides = array<i32>} : memref<2x128xf32, #tpu.memory_space<vmem>>, vector<1x128xf32>,
    %c0_52 = arith.constant 0 : index
    %c0_53 = arith.constant 0 : index
    %149 = vector.load %arg15[%c0_52, %c0_53] : memref<2x128xi32, #tpu.memory_space<vmem>>, vector<1x128xi32>
    %150 = vector.shape_cast %149 : vector<1x128xi32> to vector<128xi32>
    %151 = vector.shape_cast %144 : vector<128xi32> to vector<1x128xi32>
    tpu.vector_store %arg15[%c0_52, %c0_53], %151 {strides = array<i32>} : memref<2x128xi32, #tpu.memory_space<vmem>>, vector<1x128xi32>,
    %c1 = arith.constant 1 : index
    %c0_54 = arith.constant 0 : index
    %c0_55 = arith.constant 0 : index
    %152 = vector.load %arg1[%c1, %c0_54, %c0_55] : memref<2x4x256xf32, #tpu.memory_space<vmem>>, vector<1x4x256xf32>
    %153 = vector.shape_cast %152 : vector<1x4x256xf32> to vector<4x256xf32>
    %154 = vector.extract_strided_slice %0 {offsets = [0, 0], sizes = [32, 1], strides = [1, 1]} : vector<32x4xf32> to vector<32x1xf32>
    %155 = vector.extract_strided_slice %153 {offsets = [0, 0], sizes = [1, 256], strides = [1, 1]} : vector<4x256xf32> to vector<1x256xf32>
    %156 = vector.broadcast %154 : vector<32x1xf32> to vector<32x256xf32>
    %157 = vector.broadcast %155 : vector<1x256xf32> to vector<32x256xf32>
    %158 = arith.mulf %156, %157 : vector<32x256xf32>
    %159 = vector.broadcast %1 : vector<32x1xf32> to vector<32x256xf32>
    %160 = arith.addf %159, %158 : vector<32x256xf32>
    %161 = vector.extract_strided_slice %0 {offsets = [0, 1], sizes = [32, 1], strides = [1, 1]} : vector<32x4xf32> to vector<32x1xf32>
    %162 = vector.extract_strided_slice %153 {offsets = [1, 0], sizes = [1, 256], strides = [1, 1]} : vector<4x256xf32> to vector<1x256xf32>
    %163 = vector.broadcast %161 : vector<32x1xf32> to vector<32x256xf32>
    %164 = vector.broadcast %162 : vector<1x256xf32> to vector<32x256xf32>
    %165 = arith.mulf %163, %164 : vector<32x256xf32>
    %166 = arith.addf %160, %165 : vector<32x256xf32>
    %167 = vector.extract_strided_slice %0 {offsets = [0, 2], sizes = [32, 1], strides = [1, 1]} : vector<32x4xf32> to vector<32x1xf32>
    %168 = vector.extract_strided_slice %153 {offsets = [2, 0], sizes = [1, 256], strides = [1, 1]} : vector<4x256xf32> to vector<1x256xf32>
    %169 = vector.broadcast %167 : vector<32x1xf32> to vector<32x256xf32>
    %170 = vector.broadcast %168 : vector<1x256xf32> to vector<32x256xf32>
    %171 = arith.mulf %169, %170 : vector<32x256xf32>
    %172 = arith.addf %166, %171 : vector<32x256xf32>
    %173 = vector.extract_strided_slice %0 {offsets = [0, 3], sizes = [32, 1], strides = [1, 1]} : vector<32x4xf32> to vector<32x1xf32>
    %174 = vector.extract_strided_slice %153 {offsets = [3, 0], sizes = [1, 256], strides = [1, 1]} : vector<4x256xf32> to vector<1x256xf32>
    %175 = vector.broadcast %173 : vector<32x1xf32> to vector<32x256xf32>
    %176 = vector.broadcast %174 : vector<1x256xf32> to vector<32x256xf32>
    %177 = arith.mulf %175, %176 : vector<32x256xf32>
    %178 = arith.addf %172, %177 : vector<32x256xf32>
    %179 = vector.shape_cast %178 : vector<32x256xf32> to vector<1x32x256xf32>
    %cst_56 = arith.constant dense<0.000000e+00> : vector<1xf32>
    %180 = vector.multi_reduction <add>, %179, %cst_56 [1, 2] : vector<1x32x256xf32> to vector<1xf32>
    %181 = vector.shape_cast %180 : vector<1xf32> to vector<1x1x1xf32>
    %182 = vector.extract %181[0, 0, 0] : f32 from vector<1x1x1xf32>
    %183 = vector.broadcast %182 : f32 to vector<1x1xf32>
    %184 = arith.mulf %178, %178 : vector<32x256xf32>
    %185 = vector.shape_cast %184 : vector<32x256xf32> to vector<1x32x256xf32>
    %cst_57 = arith.constant dense<0.000000e+00> : vector<1xf32>
    %186 = vector.multi_reduction <add>, %185, %cst_57 [1, 2] : vector<1x32x256xf32> to vector<1xf32>
    %187 = vector.shape_cast %186 : vector<1xf32> to vector<1x1x1xf32>
    %188 = vector.extract %187[0, 0, 0] : f32 from vector<1x1x1xf32>
    %189 = vector.broadcast %188 : f32 to vector<1x1xf32>
    %cst_58 = arith.constant 1.22070313E-4 : f32
    %190 = vector.broadcast %cst_58 : f32 to vector<1x1xf32>
    %191 = arith.mulf %183, %190 : vector<1x1xf32>
    %cst_59 = arith.constant 1.22070313E-4 : f32
    %192 = vector.broadcast %cst_59 : f32 to vector<1x1xf32>
    %193 = arith.mulf %189, %192 : vector<1x1xf32>
    %194 = arith.mulf %191, %191 : vector<1x1xf32>
    %195 = arith.subf %193, %194 : vector<1x1xf32>
    %cst_60 = arith.constant 0.000000e+00 : f32
    %196 = vector.broadcast %cst_60 : f32 to vector<1x1xf32>
    %197 = arith.maximumf %195, %196 : vector<1x1xf32>
    %cst_61 = arith.constant 9.99999974E-6 : f32
    %198 = vector.broadcast %cst_61 : f32 to vector<1x1xf32>
    %199 = arith.addf %197, %198 : vector<1x1xf32>
    %200 = math.rsqrt %199 : vector<1x1xf32>
    %201 = vector.broadcast %191 : vector<1x1xf32> to vector<32x256xf32>
    %202 = arith.subf %178, %201 : vector<32x256xf32>
    %203 = vector.broadcast %200 : vector<1x1xf32> to vector<32x256xf32>
    %204 = arith.mulf %202, %203 : vector<32x256xf32>
    %c0_62 = arith.constant 0 : index
    %c0_63 = arith.constant 0 : index
    %205 = vector.load %arg4[%c0_62, %c0_63] : memref<32x256xf32, #tpu.memory_space<vmem>>, vector<32x256xf32>
    %206 = arith.mulf %204, %205 : vector<32x256xf32>
    %c0_64 = arith.constant 0 : index
    %c0_65 = arith.constant 0 : index
    %207 = vector.load %arg5[%c0_64, %c0_65] : memref<32x256xf32, #tpu.memory_space<vmem>>, vector<32x256xf32>
    %208 = arith.addf %206, %207 : vector<32x256xf32>
    %cst_66 = arith.constant 0.000000e+00 : f32
    %209 = vector.broadcast %cst_66 : f32 to vector<32x256xf32>
    %210 = arith.maximumf %208, %209 : vector<32x256xf32>
    %cst_67 = arith.constant dense<0.000000e+00> : vector<64x256xf32>
    %211 = tpu.matmul %2, %210, %cst_67 {dimension_numbers = #tpu.dot_dimension_numbers<[1], [0], [0], [1], [0, 0, 1, 1], [], []>} : vector<64x32xf32>, vector<32x256xf32>, vector<64x256xf32> -> vector<64x256xf32>
    %212 = vector.broadcast %3 : vector<64x1xf32> to vector<64x256xf32>
    %213 = arith.addf %211, %212 : vector<64x256xf32>
    %214 = vector.shape_cast %213 : vector<64x256xf32> to vector<1x64x256xf32>
    %cst_68 = arith.constant dense<0.000000e+00> : vector<1xf32>
    %215 = vector.multi_reduction <add>, %214, %cst_68 [1, 2] : vector<1x64x256xf32> to vector<1xf32>
    %216 = vector.shape_cast %215 : vector<1xf32> to vector<1x1x1xf32>
    %217 = vector.extract %216[0, 0, 0] : f32 from vector<1x1x1xf32>
    %218 = vector.broadcast %217 : f32 to vector<1x1xf32>
    %219 = arith.mulf %213, %213 : vector<64x256xf32>
    %220 = vector.shape_cast %219 : vector<64x256xf32> to vector<1x64x256xf32>
    %cst_69 = arith.constant dense<0.000000e+00> : vector<1xf32>
    %221 = vector.multi_reduction <add>, %220, %cst_69 [1, 2] : vector<1x64x256xf32> to vector<1xf32>
    %222 = vector.shape_cast %221 : vector<1xf32> to vector<1x1x1xf32>
    %223 = vector.extract %222[0, 0, 0] : f32 from vector<1x1x1xf32>
    %224 = vector.broadcast %223 : f32 to vector<1x1xf32>
    %cst_70 = arith.constant 6.10351563E-5 : f32
    %225 = vector.broadcast %cst_70 : f32 to vector<1x1xf32>
    %226 = arith.mulf %218, %225 : vector<1x1xf32>
    %cst_71 = arith.constant 6.10351563E-5 : f32
    %227 = vector.broadcast %cst_71 : f32 to vector<1x1xf32>
    %228 = arith.mulf %224, %227 : vector<1x1xf32>
    %229 = arith.mulf %226, %226 : vector<1x1xf32>
    %230 = arith.subf %228, %229 : vector<1x1xf32>
    %cst_72 = arith.constant 0.000000e+00 : f32
    %231 = vector.broadcast %cst_72 : f32 to vector<1x1xf32>
    %232 = arith.maximumf %230, %231 : vector<1x1xf32>
    %cst_73 = arith.constant 9.99999974E-6 : f32
    %233 = vector.broadcast %cst_73 : f32 to vector<1x1xf32>
    %234 = arith.addf %232, %233 : vector<1x1xf32>
    %235 = math.rsqrt %234 : vector<1x1xf32>
    %236 = vector.broadcast %226 : vector<1x1xf32> to vector<64x256xf32>
    %237 = arith.subf %213, %236 : vector<64x256xf32>
    %238 = vector.broadcast %235 : vector<1x1xf32> to vector<64x256xf32>
    %239 = arith.mulf %237, %238 : vector<64x256xf32>
    %c0_74 = arith.constant 0 : index
    %c0_75 = arith.constant 0 : index
    %240 = vector.load %arg8[%c0_74, %c0_75] : memref<64x256xf32, #tpu.memory_space<vmem>>, vector<64x256xf32>
    %241 = arith.mulf %239, %240 : vector<64x256xf32>
    %c0_76 = arith.constant 0 : index
    %c0_77 = arith.constant 0 : index
    %242 = vector.load %arg9[%c0_76, %c0_77] : memref<64x256xf32, #tpu.memory_space<vmem>>, vector<64x256xf32>
    %243 = arith.addf %241, %242 : vector<64x256xf32>
    %cst_78 = arith.constant 0.000000e+00 : f32
    %244 = vector.broadcast %cst_78 : f32 to vector<64x256xf32>
    %245 = arith.maximumf %243, %244 : vector<64x256xf32>
    %cst_79 = arith.constant dense<0.000000e+00> : vector<128x256xf32>
    %246 = tpu.matmul %4, %245, %cst_79 {dimension_numbers = #tpu.dot_dimension_numbers<[1], [0], [0], [1], [0, 0, 1, 1], [], []>} : vector<128x64xf32>, vector<64x256xf32>, vector<128x256xf32> -> vector<128x256xf32>
    %247 = vector.broadcast %5 : vector<128x1xf32> to vector<128x256xf32>
    %248 = arith.addf %246, %247 : vector<128x256xf32>
    %249 = vector.shape_cast %248 : vector<128x256xf32> to vector<1x128x256xf32>
    %cst_80 = arith.constant dense<0.000000e+00> : vector<1xf32>
    %250 = vector.multi_reduction <add>, %249, %cst_80 [1, 2] : vector<1x128x256xf32> to vector<1xf32>
    %251 = vector.shape_cast %250 : vector<1xf32> to vector<1x1x1xf32>
    %252 = vector.extract %251[0, 0, 0] : f32 from vector<1x1x1xf32>
    %253 = vector.broadcast %252 : f32 to vector<1x1xf32>
    %254 = arith.mulf %248, %248 : vector<128x256xf32>
    %255 = vector.shape_cast %254 : vector<128x256xf32> to vector<1x128x256xf32>
    %cst_81 = arith.constant dense<0.000000e+00> : vector<1xf32>
    %256 = vector.multi_reduction <add>, %255, %cst_81 [1, 2] : vector<1x128x256xf32> to vector<1xf32>
    %257 = vector.shape_cast %256 : vector<1xf32> to vector<1x1x1xf32>
    %258 = vector.extract %257[0, 0, 0] : f32 from vector<1x1x1xf32>
    %259 = vector.broadcast %258 : f32 to vector<1x1xf32>
    %cst_82 = arith.constant 3.05175781E-5 : f32
    %260 = vector.broadcast %cst_82 : f32 to vector<1x1xf32>
    %261 = arith.mulf %253, %260 : vector<1x1xf32>
    %cst_83 = arith.constant 3.05175781E-5 : f32
    %262 = vector.broadcast %cst_83 : f32 to vector<1x1xf32>
    %263 = arith.mulf %259, %262 : vector<1x1xf32>
    %264 = arith.mulf %261, %261 : vector<1x1xf32>
    %265 = arith.subf %263, %264 : vector<1x1xf32>
    %cst_84 = arith.constant 0.000000e+00 : f32
    %266 = vector.broadcast %cst_84 : f32 to vector<1x1xf32>
    %267 = arith.maximumf %265, %266 : vector<1x1xf32>
    %cst_85 = arith.constant 9.99999974E-6 : f32
    %268 = vector.broadcast %cst_85 : f32 to vector<1x1xf32>
    %269 = arith.addf %267, %268 : vector<1x1xf32>
    %270 = math.rsqrt %269 : vector<1x1xf32>
    %271 = vector.broadcast %261 : vector<1x1xf32> to vector<128x256xf32>
    %272 = arith.subf %248, %271 : vector<128x256xf32>
    %273 = vector.broadcast %270 : vector<1x1xf32> to vector<128x256xf32>
    %274 = arith.mulf %272, %273 : vector<128x256xf32>
    %c0_86 = arith.constant 0 : index
    %c0_87 = arith.constant 0 : index
    %275 = vector.load %arg12[%c0_86, %c0_87] : memref<128x256xf32, #tpu.memory_space<vmem>>, vector<128x256xf32>
    %276 = arith.mulf %274, %275 : vector<128x256xf32>
    %c0_88 = arith.constant 0 : index
    %c0_89 = arith.constant 0 : index
    %277 = vector.load %arg13[%c0_88, %c0_89] : memref<128x256xf32, #tpu.memory_space<vmem>>, vector<128x256xf32>
    %278 = arith.addf %276, %277 : vector<128x256xf32>
    %cst_90 = arith.constant 0.000000e+00 : f32
    %279 = vector.broadcast %cst_90 : f32 to vector<128x256xf32>
    %280 = arith.maximumf %278, %279 : vector<128x256xf32>
    %cst_91 = arith.constant dense<0xFF800000> : vector<128xf32>
    %281 = vector.multi_reduction <maximumf>, %280, %cst_91 [1] : vector<128x256xf32> to vector<128xf32>
    %282 = vector.shape_cast %281 : vector<128xf32> to vector<128x1xf32>
    %283 = vector.broadcast %282 : vector<128x1xf32> to vector<128x256xf32>
    %284 = arith.cmpf oeq, %280, %283 : vector<128x256xf32>
    %c256_i32_92 = arith.constant 256 : i32
    %285 = vector.shape_cast %6 : vector<1x256xi32> to vector<1x256xi32>
    %286 = vector.broadcast %285 : vector<1x256xi32> to vector<128x256xi32>
    %287 = vector.broadcast %c256_i32_92 : i32 to vector<128x256xi32>
    %288 = arith.select %284, %286, %287 : vector<128x256xi1>, vector<128x256xi32>
    %cst_93 = arith.constant dense<2147483647> : vector<128xi32>
    %289 = vector.multi_reduction <minsi>, %288, %cst_93 [1] : vector<128x256xi32> to vector<128xi32>
    %290 = vector.shape_cast %282 : vector<128x1xf32> to vector<128xf32>
    %c1_94 = arith.constant 1 : index
    %c0_95 = arith.constant 0 : index
    %291 = vector.load %arg14[%c1_94, %c0_95] : memref<2x128xf32, #tpu.memory_space<vmem>>, vector<1x128xf32>
    %292 = vector.shape_cast %291 : vector<1x128xf32> to vector<128xf32>
    %293 = vector.shape_cast %290 : vector<128xf32> to vector<1x128xf32>
    tpu.vector_store %arg14[%c1_94, %c0_95], %293 {strides = array<i32>} : memref<2x128xf32, #tpu.memory_space<vmem>>, vector<1x128xf32>,
    %c1_96 = arith.constant 1 : index
    %c0_97 = arith.constant 0 : index
    %294 = vector.load %arg15[%c1_96, %c0_97] : memref<2x128xi32, #tpu.memory_space<vmem>>, vector<1x128xi32>
    %295 = vector.shape_cast %294 : vector<1x128xi32> to vector<128xi32>
    %296 = vector.shape_cast %289 : vector<128xi32> to vector<1x128xi32>
    tpu.vector_store %arg15[%c1_96, %c0_97], %296 {strides = array<i32>} : memref<2x128xi32, #tpu.memory_space<vmem>>, vector<1x128xi32>,
    return
  }
  func.func @transform_0(%arg0: i32) -> (i32, i32, i32) {
    %c0_i32 = arith.constant 0 : i32
    %c0_i32_0 = arith.constant 0 : i32
    %c0_i32_1 = arith.constant 0 : i32
    return %arg0, %c0_i32, %c0_i32_0 : i32, i32, i32
  }
  func.func @transform_1(%arg0: i32) -> (i32, i32) {
    %c0_i32 = arith.constant 0 : i32
    %c0_i32_0 = arith.constant 0 : i32
    %c0_i32_1 = arith.constant 0 : i32
    return %c0_i32, %c0_i32_0 : i32, i32
  }
  func.func @transform_2(%arg0: i32) -> (i32, i32) {
    %c0_i32 = arith.constant 0 : i32
    %c0_i32_0 = arith.constant 0 : i32
    %c0_i32_1 = arith.constant 0 : i32
    return %c0_i32, %c0_i32_0 : i32, i32
  }
  func.func @transform_3(%arg0: i32) -> (i32, i32) {
    %c0_i32 = arith.constant 0 : i32
    %c0_i32_0 = arith.constant 0 : i32
    %c0_i32_1 = arith.constant 0 : i32
    return %c0_i32, %c0_i32_0 : i32, i32
  }
  func.func @transform_4(%arg0: i32) -> (i32, i32) {
    %c0_i32 = arith.constant 0 : i32
    %c0_i32_0 = arith.constant 0 : i32
    %c0_i32_1 = arith.constant 0 : i32
    return %c0_i32, %c0_i32_0 : i32, i32
  }
  func.func @transform_5(%arg0: i32) -> (i32, i32) {
    %c0_i32 = arith.constant 0 : i32
    %c0_i32_0 = arith.constant 0 : i32
    %c0_i32_1 = arith.constant 0 : i32
    return %c0_i32, %c0_i32_0 : i32, i32
  }
  func.func @transform_6(%arg0: i32) -> (i32, i32) {
    %c0_i32 = arith.constant 0 : i32
    %c0_i32_0 = arith.constant 0 : i32
    %c0_i32_1 = arith.constant 0 : i32
    return %c0_i32, %c0_i32_0 : i32, i32
  }
  func.func @transform_7(%arg0: i32) -> (i32, i32) {
    %c0_i32 = arith.constant 0 : i32
    %c0_i32_0 = arith.constant 0 : i32
    %c0_i32_1 = arith.constant 0 : i32
    return %c0_i32, %c0_i32_0 : i32, i32
  }
  func.func @transform_8(%arg0: i32) -> (i32, i32) {
    %c0_i32 = arith.constant 0 : i32
    %c0_i32_0 = arith.constant 0 : i32
    %c0_i32_1 = arith.constant 0 : i32
    return %c0_i32, %c0_i32_0 : i32, i32
  }
  func.func @transform_9(%arg0: i32) -> (i32, i32) {
    %c0_i32 = arith.constant 0 : i32
    %c0_i32_0 = arith.constant 0 : i32
    %c0_i32_1 = arith.constant 0 : i32
    return %c0_i32, %c0_i32_0 : i32, i32
  }
  func.func @transform_10(%arg0: i32) -> (i32, i32) {
    %c0_i32 = arith.constant 0 : i32
    %c0_i32_0 = arith.constant 0 : i32
    %c0_i32_1 = arith.constant 0 : i32
    return %c0_i32, %c0_i32_0 : i32, i32
  }
  func.func @transform_11(%arg0: i32) -> (i32, i32) {
    %c0_i32 = arith.constant 0 : i32
    %c0_i32_0 = arith.constant 0 : i32
    %c0_i32_1 = arith.constant 0 : i32
    return %c0_i32, %c0_i32_0 : i32, i32
  }
  func.func @transform_12(%arg0: i32) -> (i32, i32) {
    %c0_i32 = arith.constant 0 : i32
    %c0_i32_0 = arith.constant 0 : i32
    %c0_i32_1 = arith.constant 0 : i32
    return %c0_i32, %c0_i32_0 : i32, i32
  }
  func.func @transform_13(%arg0: i32) -> (i32, i32) {
    %c0_i32 = arith.constant 0 : i32
    %c0_i32_0 = arith.constant 0 : i32
    return %arg0, %c0_i32 : i32, i32
  }
  func.func @transform_14(%arg0: i32) -> (i32, i32) {
    %c0_i32 = arith.constant 0 : i32
    %c0_i32_0 = arith.constant 0 : i32
    return %arg0, %c0_i32 : i32, i32
  }
}

</mosaic_0001>

<llo_original>
// kernel: tpu_custom_call.1
$region0: #{tpu_custom_call.1}
  #allocation0 [shape = 'u32[]', space=smem, size = 0x4, offset = 0x4, fixed_abs, tag = 'smem constant byte address 0x4 - core index']
  #allocation1 [shape = 'u32[144,128]{1,0:T(1,128)}', space=vmem, size = 0x12000, scoped, tag = 'internal scratch']
  %s0 = inlined_call_operand.hbm [shape: f32[2,4,256], index: 0, kind: input, shape index: {}]
  %s1 = inlined_call_operand.vmem [shape: f32[32,4], index: 1, kind: input, shape index: {}]
  %s2 = inlined_call_operand.vmem [shape: f32[32,1], index: 2, kind: input, shape index: {}]
  %s3 = inlined_call_operand.hbm [shape: f32[32,256], index: 3, kind: input, shape index: {}]
  %s4 = inlined_call_operand.hbm [shape: f32[32,256], index: 4, kind: input, shape index: {}]
  %s5 = inlined_call_operand.vmem [shape: f32[64,32], index: 5, kind: input, shape index: {}]
  %s6 = inlined_call_operand.vmem [shape: f32[64,1], index: 6, kind: input, shape index: {}]
  %s7 = inlined_call_operand.hbm [shape: f32[64,256], index: 7, kind: input, shape index: {}]
  %s8 = inlined_call_operand.hbm [shape: f32[64,256], index: 8, kind: input, shape index: {}]
  %s9 = inlined_call_operand.vmem [shape: f32[128,64], index: 9, kind: input, shape index: {}]
  %s10 = inlined_call_operand.vmem [shape: f32[128,1], index: 10, kind: input, shape index: {}]
  %s11 = inlined_call_operand.vmem [shape: f32[128,256], index: 11, kind: input, shape index: {}]
  %s12 = inlined_call_operand.vmem [shape: f32[128,256], index: 12, kind: input, shape index: {}]
  %s13 = inlined_call_operand.hbm [shape: f32[2,128], index: 13, kind: output, shape index: {0}]
  %s14 = inlined_call_operand.hbm [shape: s32[2,128], index: 14, kind: output, shape index: {1}]
  %15 = xla_tuple %s13, %s14
  %s16 = sld [smem:[#allocation0]]
  $region90: #{tpu_custom_call.1} parent=0
    _
  %s18 = ssub.s32 1, %s16
  %s19 = scalar_select 0, %s18, %s16
  $region1: #{tpu_custom_call.1} parent=0
    #allocation2 [shape = 'u8[8192]{0}', space=vmem, size = 0x2000, scoped, tag = 'input window, operand 0, single buffered']
    #allocation3 [shape = 's32[1]{0}', space=sflag, size = 0x4, scoped, tag = 'scoped memory for tpu_custom_call.1']
    #allocation4 [shape = 's32[1]{0}', space=sflag, size = 0x4, scoped, tag = 'scoped memory for tpu_custom_call.1']
    #allocation5 [shape = 'u8[32768]{0}', space=vmem, size = 0x8000, scoped, tag = 'input window, operand 3, single buffered']
    #allocation6 [shape = 's32[1]{0}', space=sflag, size = 0x4, scoped, tag = 'scoped memory for tpu_custom_call.1']
    #allocation7 [shape = 'u8[32768]{0}', space=vmem, size = 0x8000, scoped, tag = 'input window, operand 4, single buffered']
    #allocation8 [shape = 'u8[65536]{0}', space=vmem, size = 0x10000, scoped, tag = 'input window, operand 7, single buffered']
    #allocation9 [shape = 's32[1]{0}', space=sflag, size = 0x4, scoped, tag = 'scoped memory for tpu_custom_call.1']
    #allocation10 [shape = 'u8[65536]{0}', space=vmem, size = 0x10000, scoped, tag = 'input window, operand 8, single buffered']
    #allocation11 [shape = 'u8[1024]{0}', space=vmem, size = 0x400, scoped, tag = 'output window, operand 0, single buffered']
    #allocation12 [shape = 'u8[1024]{0}', space=vmem, size = 0x400, scoped, tag = 'output window, operand 1, single buffered']
    #allocation13 [shape = 's32[1]{0}', space=sflag, size = 0x4, scoped, tag = 'scoped memory for tpu_custom_call.1']
    %20 = vsyncpa [#allocation3], 0
    %21 = vsyncpa [#allocation6], 0
    %22 = vsyncpa [#allocation9], 0
    %23 = vsyncpa [#allocation4], 0
    %24 = vsyncpa [#allocation13], 0
    // Predicated region
    $region2: #{tpu_custom_call.1} parent=1 // pred_check
      _
    $region3: #{tpu_custom_call.1} parent=1 // pred_check_branch
      %26 = sbr.rel (0) target = $region5
    $region4: #{tpu_custom_call.1} parent=1 // pred_region
      %s28 = ssub.s32 256, 256
      %29 = vsyncadd [#allocation3], %s28
      %s30 = sshll.u32 [#allocation2], 4
      %s31 = int_to_ptr.vmem [resolvable:$true] %s30
      %36 = dma.hbm_to_vmem [thread:$0]  %s0, 256, %s31, [#allocation3], 128, 128, 8
    $region5: #{tpu_custom_call.1} parent=1 // pred_fallthru
      _
    // Predicated region
    $region6: #{tpu_custom_call.1} parent=1 // pred_check
      _
    $region7: #{tpu_custom_call.1} parent=1 // pred_check_branch
      %38 = sbr.rel (0) target = $region9
    $region8: #{tpu_custom_call.1} parent=1 // pred_region
      _
    $region9: #{tpu_custom_call.1} parent=1 // pred_fallthru
      _
    // Predicated region
    $region10: #{tpu_custom_call.1} parent=1 // pred_check
      _
    $region11: #{tpu_custom_call.1} parent=1 // pred_check_branch
      %40 = sbr.rel (0) target = $region13
    $region12: #{tpu_custom_call.1} parent=1 // pred_region
      _
    $region13: #{tpu_custom_call.1} parent=1 // pred_fallthru
      _
    // Predicated region
    $region14: #{tpu_custom_call.1} parent=1 // pred_check
      _
    $region15: #{tpu_custom_call.1} parent=1 // pred_check_branch
      %42 = sbr.rel (0) target = $region17
    $region16: #{tpu_custom_call.1} parent=1 // pred_region
      %s44 = ssub.s32 1024, 1024
      %45 = vsyncadd [#allocation6], %s44
      %s46 = sshll.u32 [#allocation5], 4
      %s47 = int_to_ptr.vmem [resolvable:$true] %s46
      %52 = dma.hbm_to_vmem [thread:$0]  %s3, 1024, %s47, [#allocation6], 256, 256, 16
    $region17: #{tpu_custom_call.1} parent=1 // pred_fallthru
      _
    // Predicated region
    $region18: #{tpu_custom_call.1} parent=1 // pred_check
      _
    $region19: #{tpu_custom_call.1} parent=1 // pred_check_branch
      %54 = sbr.rel (0) target = $region21
    $region20: #{tpu_custom_call.1} parent=1 // pred_region
      %s56 = ssub.s32 1024, 1024
      %57 = vsyncadd [#allocation6], %s56
      %s58 = sshll.u32 [#allocation7], 4
      %s59 = int_to_ptr.vmem [resolvable:$true] %s58
      %64 = dma.hbm_to_vmem [thread:$0]  %s4, 1024, %s59, [#allocation6], 256, 256, 16
    $region21: #{tpu_custom_call.1} parent=1 // pred_fallthru
      _
    // Predicated region
    $region22: #{tpu_custom_call.1} parent=1 // pred_check
      _
    $region23: #{tpu_custom_call.1} parent=1 // pred_check_branch
      %66 = sbr.rel (0) target = $region25
    $region24: #{tpu_custom_call.1} parent=1 // pred_region
      _
    $region25: #{tpu_custom_call.1} parent=1 // pred_fallthru
      _
    // Predicated region
    $region26: #{tpu_custom_call.1} parent=1 // pred_check
      _
    $region27: #{tpu_custom_call.1} parent=1 // pred_check_branch
      %68 = sbr.rel (0) target = $region29
    $region28: #{tpu_custom_call.1} parent=1 // pred_region
      _
    $region29: #{tpu_custom_call.1} parent=1 // pred_fallthru
      _
    // Predicated region
    $region30: #{tpu_custom_call.1} parent=1 // pred_check
      _
    $region31: #{tpu_custom_call.1} parent=1 // pred_check_branch
      %70 = sbr.rel (0) target = $region33
    $region32: #{tpu_custom_call.1} parent=1 // pred_region
      %s72 = ssub.s32 2048, 2048
      %73 = vsyncadd [#allocation9], %s72
      %s74 = sshll.u32 [#allocation8], 4
      %s75 = int_to_ptr.vmem [resolvable:$true] %s74
      %80 = dma.hbm_to_vmem [thread:$0]  %s7, 2048, %s75, [#allocation9], 256, 256, 16
    $region33: #{tpu_custom_call.1} parent=1 // pred_fallthru
      _
    // Predicated region
    $region34: #{tpu_custom_call.1} parent=1 // pred_check
      _
    $region35: #{tpu_custom_call.1} parent=1 // pred_check_branch
      %82 = sbr.rel (0) target = $region37
    $region36: #{tpu_custom_call.1} parent=1 // pred_region
      %s84 = ssub.s32 2048, 2048
      %85 = vsyncadd [#allocation9], %s84
      %s86 = sshll.u32 [#allocation10], 4
      %s87 = int_to_ptr.vmem [resolvable:$true] %s86
      %92 = dma.hbm_to_vmem [thread:$0]  %s8, 2048, %s87, [#allocation9], 256, 256, 16
    $region37: #{tpu_custom_call.1} parent=1 // pred_fallthru
      _
    // Predicated region
    $region38: #{tpu_custom_call.1} parent=1 // pred_check
      _
    $region39: #{tpu_custom_call.1} parent=1 // pred_check_branch
      %94 = sbr.rel (0) target = $region41
    $region40: #{tpu_custom_call.1} parent=1 // pred_region
      _
    $region41: #{tpu_custom_call.1} parent=1 // pred_fallthru
      _
    // Predicated region
    $region42: #{tpu_custom_call.1} parent=1 // pred_check
      _
    $region43: #{tpu_custom_call.1} parent=1 // pred_check_branch
      %96 = sbr.rel (0) target = $region45
    $region44: #{tpu_custom_call.1} parent=1 // pred_region
      _
    $region45: #{tpu_custom_call.1} parent=1 // pred_fallthru
      _
    // Predicated region
    $region46: #{tpu_custom_call.1} parent=1 // pred_check
      _
    $region47: #{tpu_custom_call.1} parent=1 // pred_check_branch
      %98 = sbr.rel (0) target = $region49
    $region48: #{tpu_custom_call.1} parent=1 // pred_region
      _
    $region49: #{tpu_custom_call.1} parent=1 // pred_fallthru
      _
    // Predicated region
    $region50: #{tpu_custom_call.1} parent=1 // pred_check
      _
    $region51: #{tpu_custom_call.1} parent=1 // pred_check_branch
      %100 = sbr.rel (0) target = $region53
    $region52: #{tpu_custom_call.1} parent=1 // pred_region
      _
    $region53: #{tpu_custom_call.1} parent=1 // pred_fallthru
      _
    // Predicated region
    $region54: #{tpu_custom_call.1} parent=1 // pred_check
      _
    $region55: #{tpu_custom_call.1} parent=1 // pred_check_branch
      %102 = sbr.rel (0) target = $region57
    $region56: #{tpu_custom_call.1} parent=1 // pred_region
      %103 = dma.done [#allocation3], 256
    $region57: #{tpu_custom_call.1} parent=1 // pred_fallthru
      _
    // Predicated region
    $region58: #{tpu_custom_call.1} parent=1 // pred_check
      _
    $region59: #{tpu_custom_call.1} parent=1 // pred_check_branch
      %105 = sbr.rel (0) target = $region61
    $region60: #{tpu_custom_call.1} parent=1 // pred_region
      %106 = dma.done [#allocation6], 1024
    $region61: #{tpu_custom_call.1} parent=1 // pred_fallthru
      _
    // Predicated region
    $region62: #{tpu_custom_call.1} parent=1 // pred_check
      _
    $region63: #{tpu_custom_call.1} parent=1 // pred_check_branch
      %108 = sbr.rel (0) target = $region65
    $region64: #{tpu_custom_call.1} parent=1 // pred_region
      %109 = dma.done [#allocation6], 1024
    $region65: #{tpu_custom_call.1} parent=1 // pred_fallthru
      _
    // Predicated region
    $region66: #{tpu_custom_call.1} parent=1 // pred_check
      _
    $region67: #{tpu_custom_call.1} parent=1 // pred_check_branch
      %111 = sbr.rel (0) target = $region69
    $region68: #{tpu_custom_call.1} parent=1 // pred_region
      %112 = dma.done [#allocation9], 2048
    $region69: #{tpu_custom_call.1} parent=1 // pred_fallthru
      _
    // Predicated region
    $region70: #{tpu_custom_call.1} parent=1 // pred_check
      _
    $region71: #{tpu_custom_call.1} parent=1 // pred_check_branch
      %114 = sbr.rel (0) target = $region73
    $region72: #{tpu_custom_call.1} parent=1 // pred_region
      %115 = dma.done [#allocation9], 2048
    $region73: #{tpu_custom_call.1} parent=1 // pred_fallthru
      _
    %v116 = vld [vmem:[%s1] sm:$0xff]
    %v117 = vld [vmem:[%s1 + $0x8] sm:$0xff]
    %v118 = vld [vmem:[%s1 + $0x10] sm:$0xff]
    %v119 = vld [vmem:[%s1 + $0x18] sm:$0xff]
    %v120 = vld [vmem:[%s2] sm:$0xff]
    %v121 = vld [vmem:[%s2 + $0x8] sm:$0xff]
    %v122 = vld [vmem:[%s2 + $0x10] sm:$0xff]
    %v123 = vld [vmem:[%s2 + $0x18] sm:$0xff]
    %v124 = vld [vmem:[%s5] sm:$0xff]
    %v125 = vld [vmem:[%s5 + $0x8] sm:$0xff]
    %v126 = vld [vmem:[%s5 + $0x10] sm:$0xff]
    %v127 = vld [vmem:[%s5 + $0x18] sm:$0xff]
    %v128 = vld [vmem:[%s5 + $0x20] sm:$0xff]
    %v129 = vld [vmem:[%s5 + $0x28] sm:$0xff]
    %v130 = vld [vmem:[%s5 + $0x30] sm:$0xff]
    %v131 = vld [vmem:[%s5 + $0x38] sm:$0xff]
    %v132 = vld [vmem:[%s6] sm:$0xff]
    %v133 = vld [vmem:[%s6 + $0x8] sm:$0xff]
    %v134 = vld [vmem:[%s6 + $0x10] sm:$0xff]
    %v135 = vld [vmem:[%s6 + $0x18] sm:$0xff]
    %v136 = vld [vmem:[%s6 + $0x20] sm:$0xff]
    %v137 = vld [vmem:[%s6 + $0x28] sm:$0xff]
    %v138 = vld [vmem:[%s6 + $0x30] sm:$0xff]
    %v139 = vld [vmem:[%s6 + $0x38] sm:$0xff]
    %v140 = vld [vmem:[%s9] sm:$0xff]
    %v141 = vld [vmem:[%s9 + $0x8] sm:$0xff]
    %v142 = vld [vmem:[%s9 + $0x10] sm:$0xff]
    %v143 = vld [vmem:[%s9 + $0x18] sm:$0xff]
    %v144 = vld [vmem:[%s9 + $0x20] sm:$0xff]
    %v145 = vld [vmem:[%s9 + $0x28] sm:$0xff]
    %v146 = vld [vmem:[%s9 + $0x30] sm:$0xff]
    %v147 = vld [vmem:[%s9 + $0x38] sm:$0xff]
    %v148 = vld [vmem:[%s9 + $0x40] sm:$0xff]
    %v149 = vld [vmem:[%s9 + $0x48] sm:$0xff]
    %v150 = vld [vmem:[%s9 + $0x50] sm:$0xff]
    %v151 = vld [vmem:[%s9 + $0x58] sm:$0xff]
    %v152 = vld [vmem:[%s9 + $0x60] sm:$0xff]
    %v153 = vld [vmem:[%s9 + $0x68] sm:$0xff]
    %v154 = vld [vmem:[%s9 + $0x70] sm:$0xff]
    %v155 = vld [vmem:[%s9 + $0x78] sm:$0xff]
    %v156 = vld [vmem:[%s10] sm:$0xff]
    %v157 = vld [vmem:[%s10 + $0x8] sm:$0xff]
    %v158 = vld [vmem:[%s10 + $0x10] sm:$0xff]
    %v159 = vld [vmem:[%s10 + $0x18] sm:$0xff]
    %v160 = vld [vmem:[%s10 + $0x20] sm:$0xff]
    %v161 = vld [vmem:[%s10 + $0x28] sm:$0xff]
    %v162 = vld [vmem:[%s10 + $0x30] sm:$0xff]
    %v163 = vld [vmem:[%s10 + $0x38] sm:$0xff]
    %v164 = vld [vmem:[%s10 + $0x40] sm:$0xff]
    %v165 = vld [vmem:[%s10 + $0x48] sm:$0xff]
    %v166 = vld [vmem:[%s10 + $0x50] sm:$0xff]
    %v167 = vld [vmem:[%s10 + $0x58] sm:$0xff]
    %v168 = vld [vmem:[%s10 + $0x60] sm:$0xff]
    %v169 = vld [vmem:[%s10 + $0x68] sm:$0xff]
    %v170 = vld [vmem:[%s10 + $0x70] sm:$0xff]
    %v171 = vld [vmem:[%s10 + $0x78] sm:$0xff]
    %v172 = vlaneseq
    %v173 = vand.u32 %v172, 127
    %v174 = vadd.s32 %v173, 128
    %v175 = vld [vmem:[#allocation2] sm:$0xff]
    %177 = vset.pattern.permute.xlu0 0
    %178 = vperm.xlu0 %177, %v116
    %v179 = vpop.permute.xlu0 %178
    %182 = vset.pattern.permute.xlu0 0
    %183 = vperm.xlu0 %182, %v117
    %v184 = vpop.permute.xlu0 %183
    %187 = vset.pattern.permute.xlu0 0
    %188 = vperm.xlu0 %187, %v118
    %v189 = vpop.permute.xlu0 %188
    %192 = vset.pattern.permute.xlu0 0
    %193 = vperm.xlu0 %192, %v119
    %v194 = vpop.permute.xlu0 %193
    %v197 = vlaneseq
    %v198 = vshrl.u32 %v197, 7
    %v199 = vsub.s32 0, %v198
    %v200 = vrot.slane %v175, %v199
    %v201 = vlaneseq
    %v202 = vshrl.u32 %v201, 7
    %v203 = vsub.s32 4, %v202
    %v204 = vrot.slane %v175, %v203
    %v207 = vlaneseq
    %v208 = vshrl.u32 %v207, 7
    %v209 = vsub.s32 0, %v208
    %v210 = vrot.slane %v200, %v209
    %v211 = vlaneseq
    %v212 = vshrl.u32 %v211, 7
    %v213 = vsub.s32 0, %v212
    %v214 = vrot.slane %v204, %v213
    %v215 = vmul.f32 %v179, %v210
    %v216 = vmul.f32 %v179, %v214
    %v217 = vmul.f32 %v184, %v210
    %v218 = vmul.f32 %v184, %v214
    %v219 = vmul.f32 %v189, %v210
    %v220 = vmul.f32 %v189, %v214
    %v221 = vmul.f32 %v194, %v210
    %v222 = vmul.f32 %v194, %v214
    %224 = vset.pattern.permute.xlu0 0
    %225 = vperm.xlu0 %224, %v120
    %v226 = vpop.permute.xlu0 %225
    %229 = vset.pattern.permute.xlu0 0
    %230 = vperm.xlu0 %229, %v121
    %v231 = vpop.permute.xlu0 %230
    %234 = vset.pattern.permute.xlu0 0
    %235 = vperm.xlu0 %234, %v122
    %v236 = vpop.permute.xlu0 %235
    %239 = vset.pattern.permute.xlu0 0
    %240 = vperm.xlu0 %239, %v123
    %v241 = vpop.permute.xlu0 %240
    %v243 = vadd.f32 %v226, %v215
    %v244 = vadd.f32 %v226, %v216
    %v245 = vadd.f32 %v231, %v217
    %v246 = vadd.f32 %v231, %v218
    %v247 = vadd.f32 %v236, %v219
    %v248 = vadd.f32 %v236, %v220
    %v249 = vadd.f32 %v241, %v221
    %v250 = vadd.f32 %v241, %v222
    %251 = vset.pattern.permute.xlu0 1
    %252 = vperm.xlu0 %251, %v116
    %v253 = vpop.permute.xlu0 %252
    %255 = vset.pattern.permute.xlu0 1
    %256 = vperm.xlu0 %255, %v117
    %v257 = vpop.permute.xlu0 %256
    %259 = vset.pattern.permute.xlu0 1
    %260 = vperm.xlu0 %259, %v118
    %v261 = vpop.permute.xlu0 %260
    %263 = vset.pattern.permute.xlu0 1
    %264 = vperm.xlu0 %263, %v119
    %v265 = vpop.permute.xlu0 %264
    %v267 = vlaneseq
    %v268 = vshrl.u32 %v267, 7
    %v269 = vsub.s32 1, %v268
    %v270 = vrot.slane %v175, %v269
    %v271 = vlaneseq
    %v272 = vshrl.u32 %v271, 7
    %v273 = vsub.s32 5, %v272
    %v274 = vrot.slane %v175, %v273
    %v277 = vlaneseq
    %v278 = vshrl.u32 %v277, 7
    %v279 = vsub.s32 1, %v278
    %v280 = vrot.slane %v270, %v279
    %v281 = vlaneseq
    %v282 = vshrl.u32 %v281, 7
    %v283 = vsub.s32 1, %v282
    %v284 = vrot.slane %v274, %v283
    %v285 = vmul.f32 %v253, %v280
    %v286 = vmul.f32 %v253, %v284
    %v287 = vmul.f32 %v257, %v280
    %v288 = vmul.f32 %v257, %v284
    %v289 = vmul.f32 %v261, %v280
    %v290 = vmul.f32 %v261, %v284
    %v291 = vmul.f32 %v265, %v280
    %v292 = vmul.f32 %v265, %v284
    %v293 = vadd.f32 %v243, %v285
    %v294 = vadd.f32 %v244, %v286
    %v295 = vadd.f32 %v245, %v287
    %v296 = vadd.f32 %v246, %v288
    %v297 = vadd.f32 %v247, %v289
    %v298 = vadd.f32 %v248, %v290
    %v299 = vadd.f32 %v249, %v291
    %v300 = vadd.f32 %v250, %v292
    %301 = vset.pattern.permute.xlu0 2
    %302 = vperm.xlu0 %301, %v116
    %v303 = vpop.permute.xlu0 %302
    %305 = vset.pattern.permute.xlu0 2
    %306 = vperm.xlu0 %305, %v117
    %v307 = vpop.permute.xlu0 %306
    %309 = vset.pattern.permute.xlu0 2
    %310 = vperm.xlu0 %309, %v118
    %v311 = vpop.permute.xlu0 %310
    %313 = vset.pattern.permute.xlu0 2
    %314 = vperm.xlu0 %313, %v119
    %v315 = vpop.permute.xlu0 %314
    %v317 = vlaneseq
    %v318 = vshrl.u32 %v317, 7
    %v319 = vsub.s32 2, %v318
    %v320 = vrot.slane %v175, %v319
    %v321 = vlaneseq
    %v322 = vshrl.u32 %v321, 7
    %v323 = vsub.s32 6, %v322
    %v324 = vrot.slane %v175, %v323
    %v327 = vlaneseq
    %v328 = vshrl.u32 %v327, 7
    %v329 = vsub.s32 2, %v328
    %v330 = vrot.slane %v320, %v329
    %v331 = vlaneseq
    %v332 = vshrl.u32 %v331, 7
    %v333 = vsub.s32 2, %v332
    %v334 = vrot.slane %v324, %v333
    %v335 = vmul.f32 %v303, %v330
    %v336 = vmul.f32 %v303, %v334
    %v337 = vmul.f32 %v307, %v330
    %v338 = vmul.f32 %v307, %v334
    %v339 = vmul.f32 %v311, %v330
    %v340 = vmul.f32 %v311, %v334
    %v341 = vmul.f32 %v315, %v330
    %v342 = vmul.f32 %v315, %v334
    %v343 = vadd.f32 %v293, %v335
    %v344 = vadd.f32 %v294, %v336
    %v345 = vadd.f32 %v295, %v337
    %v346 = vadd.f32 %v296, %v338
    %v347 = vadd.f32 %v297, %v339
    %v348 = vadd.f32 %v298, %v340
    %v349 = vadd.f32 %v299, %v341
    %v350 = vadd.f32 %v300, %v342
    %351 = vset.pattern.permute.xlu0 3
    %352 = vperm.xlu0 %351, %v116
    %v353 = vpop.permute.xlu0 %352
    %355 = vset.pattern.permute.xlu0 3
    %356 = vperm.xlu0 %355, %v117
    %v357 = vpop.permute.xlu0 %356
    %359 = vset.pattern.permute.xlu0 3
    %360 = vperm.xlu0 %359, %v118
    %v361 = vpop.permute.xlu0 %360
    %363 = vset.pattern.permute.xlu0 3
    %364 = vperm.xlu0 %363, %v119
    %v365 = vpop.permute.xlu0 %364
    %v367 = vlaneseq
    %v368 = vshrl.u32 %v367, 7
    %v369 = vsub.s32 3, %v368
    %v370 = vrot.slane %v175, %v369
    %v371 = vlaneseq
    %v372 = vshrl.u32 %v371, 7
    %v373 = vsub.s32 7, %v372
    %v374 = vrot.slane %v175, %v373
    %v377 = vlaneseq
    %v378 = vshrl.u32 %v377, 7
    %v379 = vsub.s32 3, %v378
    %v380 = vrot.slane %v370, %v379
    %v381 = vlaneseq
    %v382 = vshrl.u32 %v381, 7
    %v383 = vsub.s32 3, %v382
    %v384 = vrot.slane %v374, %v383
    %v385 = vmul.f32 %v353, %v380
    %v386 = vmul.f32 %v353, %v384
    %v387 = vmul.f32 %v357, %v380
    %v388 = vmul.f32 %v357, %v384
    %v389 = vmul.f32 %v361, %v380
    %v390 = vmul.f32 %v361, %v384
    %v391 = vmul.f32 %v365, %v380
    %v392 = vmul.f32 %v365, %v384
    %v393 = vadd.f32 %v343, %v385
    %v394 = vadd.f32 %v344, %v386
    %v395 = vadd.f32 %v345, %v387
    %v396 = vadd.f32 %v346, %v388
    %v397 = vadd.f32 %v347, %v389
    %v398 = vadd.f32 %v348, %v390
    %v399 = vadd.f32 %v349, %v391
    %v400 = vadd.f32 %v350, %v392
    %v401 = vadd.f32 %v393, %v394
    %v402 = vadd.f32 %v401, %v395
    %v403 = vadd.f32 %v402, %v396
    %v404 = vadd.f32 %v403, %v397
    %v405 = vadd.f32 %v404, %v398
    %v406 = vadd.f32 %v405, %v399
    %v407 = vadd.f32 %v406, %v400
    %408 = vadd.xlane.f32.xlu0 %v407
    %v409 = vpop.xlane.xlu0 %408
    %v410 = vrot.slane %v409, 4
    %v411 = vadd.f32 %v409, %v410
    %v412 = vrot.slane %v411, 2
    %v413 = vadd.f32 %v411, %v412
    %v414 = vrot.slane %v413, 1
    %v415 = vadd.f32 %v413, %v414
    %s416 = vtos %v415
    %v417 = vstv %s416
    %v418 = vmul.f32 %v393, %v393
    %v419 = vmul.f32 %v394, %v394
    %v420 = vmul.f32 %v395, %v395
    %v421 = vmul.f32 %v396, %v396
    %v422 = vmul.f32 %v397, %v397
    %v423 = vmul.f32 %v398, %v398
    %v424 = vmul.f32 %v399, %v399
    %v425 = vmul.f32 %v400, %v400
    %v426 = vadd.f32 %v418, %v419
    %v427 = vadd.f32 %v426, %v420
    %v428 = vadd.f32 %v427, %v421
    %v429 = vadd.f32 %v428, %v422
    %v430 = vadd.f32 %v429, %v423
    %v431 = vadd.f32 %v430, %v424
    %v432 = vadd.f32 %v431, %v425
    %433 = vadd.xlane.f32.xlu0 %v432
    %v434 = vpop.xlane.xlu0 %433
    %v435 = vrot.slane %v434, 4
    %v436 = vadd.f32 %v434, %v435
    %v437 = vrot.slane %v436, 2
    %v438 = vadd.f32 %v436, %v437
    %v439 = vrot.slane %v438, 1
    %v440 = vadd.f32 %v438, %v439
    %s441 = vtos %v440
    %v442 = vstv %s441
    %v443 = vmul.f32 %v417, 0.00012207031
    %v444 = vmul.f32 %v442, 0.00012207031
    %v445 = vmul.f32 %v443, %v443
    %v446 = vsub.f32 %v444, %v445
    %v447 = vmax.f32 %v446, 0.0
    %v448 = vadd.f32 %v447, 1e-05
    %v449 = vrsqrt.pop %v448
    %v450 = vsub.f32 %v393, %v443
    %v451 = vsub.f32 %v394, %v443
    %v452 = vsub.f32 %v395, %v443
    %v453 = vsub.f32 %v396, %v443
    %v454 = vsub.f32 %v397, %v443
    %v455 = vsub.f32 %v398, %v443
    %v456 = vsub.f32 %v399, %v443
    %v457 = vsub.f32 %v400, %v443
    %v458 = vmul.f32 %v450, %v449
    %v459 = vmul.f32 %v451, %v449
    %v460 = vmul.f32 %v452, %v449
    %v461 = vmul.f32 %v453, %v449
    %v462 = vmul.f32 %v454, %v449
    %v463 = vmul.f32 %v455, %v449
    %v464 = vmul.f32 %v456, %v449
    %v465 = vmul.f32 %v457, %v449
    %v466 = vld [vmem:[#allocation5] sm:$0xff]
    %v467 = vld [vmem:[#allocation5 + $0x8] sm:$0xff]
    %v468 = vld [vmem:[#allocation5 + $0x10] sm:$0xff]
    %v469 = vld [vmem:[#allocation5 + $0x18] sm:$0xff]
    %v470 = vld [vmem:[#allocation5 + $0x20] sm:$0xff]
    %v471 = vld [vmem:[#allocation5 + $0x28] sm:$0xff]
    %v472 = vld [vmem:[#allocation5 + $0x30] sm:$0xff]
    %v473 = vld [vmem:[#allocation5 + $0x38] sm:$0xff]
    %v474 = vmul.f32 %v458, %v466
    %v475 = vmul.f32 %v459, %v467
    %v476 = vmul.f32 %v460, %v468
    %v477 = vmul.f32 %v461, %v469
    %v478 = vmul.f32 %v462, %v470
    %v479 = vmul.f32 %v463, %v471
    %v480 = vmul.f32 %v464, %v472
    %v481 = vmul.f32 %v465, %v473
    %v482 = vld [vmem:[#allocation7] sm:$0xff]
    %v483 = vld [vmem:[#allocation7 + $0x8] sm:$0xff]
    %v484 = vld [vmem:[#allocation7 + $0x10] sm:$0xff]
    %v485 = vld [vmem:[#allocation7 + $0x18] sm:$0xff]
    %v486 = vld [vmem:[#allocation7 + $0x20] sm:$0xff]
    %v487 = vld [vmem:[#allocation7 + $0x28] sm:$0xff]
    %v488 = vld [vmem:[#allocation7 + $0x30] sm:$0xff]
    %v489 = vld [vmem:[#allocation7 + $0x38] sm:$0xff]
    %v490 = vadd.f32 %v474, %v482
    %v491 = vadd.f32 %v475, %v483
    %v492 = vadd.f32 %v476, %v484
    %v493 = vadd.f32 %v477, %v485
    %v494 = vadd.f32 %v478, %v486
    %v495 = vadd.f32 %v479, %v487
    %v496 = vadd.f32 %v480, %v488
    %v497 = vadd.f32 %v481, %v489
    %v498 = vmax.f32 %v490, 0.0
    %v499 = vmax.f32 %v491, 0.0
    %v500 = vmax.f32 %v492, 0.0
    %v501 = vmax.f32 %v493, 0.0
    %v502 = vmax.f32 %v494, 0.0
    %v503 = vmax.f32 %v495, 0.0
    %v504 = vmax.f32 %v496, 0.0
    %v505 = vmax.f32 %v497, 0.0
    %507 = vset.pattern.permute.xlu0 0
    %508 = vperm.xlu0 %507, %v132
    %v509 = vpop.permute.xlu0 %508
    %512 = vset.pattern.permute.xlu0 0
    %513 = vperm.xlu0 %512, %v133
    %v514 = vpop.permute.xlu0 %513
    %517 = vset.pattern.permute.xlu0 0
    %518 = vperm.xlu0 %517, %v134
    %v519 = vpop.permute.xlu0 %518
    %522 = vset.pattern.permute.xlu0 0
    %523 = vperm.xlu0 %522, %v135
    %v524 = vpop.permute.xlu0 %523
    %527 = vset.pattern.permute.xlu0 0
    %528 = vperm.xlu0 %527, %v136
    %v529 = vpop.permute.xlu0 %528
    %532 = vset.pattern.permute.xlu0 0
    %533 = vperm.xlu0 %532, %v137
    %v534 = vpop.permute.xlu0 %533
    %537 = vset.pattern.permute.xlu0 0
    %538 = vperm.xlu0 %537, %v138
    %v539 = vpop.permute.xlu0 %538
    %542 = vset.pattern.permute.xlu0 0
    %543 = vperm.xlu0 %542, %v139
    %v544 = vpop.permute.xlu0 %543
    %vm546 = vcmask 261120
    %v548 = vsel %vm546, %v124, 0
    %v551 = vsel %vm546, %v125, 0
    %v554 = vsel %vm546, %v126, 0
    %v557 = vsel %vm546, %v127, 0
    %v560 = vsel %vm546, %v128, 0
    %v563 = vsel %vm546, %v129, 0
    %v566 = vsel %vm546, %v130, 0
    %v569 = vsel %vm546, %v131, 0
    %571 = vmatprep.subr.mxu0 %v499
    %572 = vmatpush1.msra.mxu0 %v498
    %573 = vmatprep.subr.mxu0 %v501
    %574 = vmatpush1.msra.mxu0 %v500
    %575 = vmatprep.subr.mxu0 %v503
    %576 = vmatpush1.msra.mxu0 %v502
    %577 = vmatprep.subr.mxu0 %v505
    %578 = vmatpush1.msra.mxu0 %v504
    %579 = vmatprep.subr.mxu0 0.0
    %580 = vmatpush1.msra.mxu0 0.0
    %581 = vmatprep.subr.mxu0 0.0
    %582 = vmatpush1.msra.mxu0 0.0
    %583 = vmatprep.subr.mxu0 0.0
    %584 = vmatpush1.msra.mxu0 0.0
    %585 = vmatprep.subr.mxu0 0.0
    %586 = vmatpush1.msra.mxu0 0.0
    %587 = vmatprep.subr.mxu0 0.0
    %588 = vmatpush1.msra.mxu0 0.0
    %589 = vmatprep.subr.mxu0 0.0
    %590 = vmatpush1.msra.mxu0 0.0
    %591 = vmatprep.subr.mxu0 0.0
    %592 = vmatpush1.msra.mxu0 0.0
    %593 = vmatprep.subr.mxu0 0.0
    %594 = vmatpush1.msra.mxu0 0.0
    %595 = vmatprep.subr.mxu0 0.0
    %596 = vmatpush1.msra.mxu0 0.0
    %597 = vmatprep.subr.mxu0 0.0
    %598 = vmatpush1.msra.mxu0 0.0
    %599 = vmatprep.subr.mxu0 0.0
    %600 = vmatpush1.msra.mxu0 0.0
    %601 = vmatprep.subr.mxu0 0.0
    %602 = vmatpush1.msra.mxu0 0.0
    %603 = vmatprep.subr.mxu0 0.0
    %604 = vmatpush1.msra.mxu0 0.0
    %605 = vmatprep.subr.mxu0 0.0
    %606 = vmatpush1.msra.mxu0 0.0
    %607 = vmatprep.subr.mxu0 0.0
    %608 = vmatpush1.msra.mxu0 0.0
    %609 = vmatprep.subr.mxu0 0.0
    %610 = vmatpush1.msra.mxu0 0.0
    %611 = vmatprep.subr.mxu0 0.0
    %612 = vmatpush1.msra.mxu0 0.0
    %613 = vmatprep.subr.mxu0 0.0
    %614 = vmatpush1.msra.mxu0 0.0
    %615 = vmatprep.subr.mxu0 0.0
    %616 = vmatpush1.msra.mxu0 0.0
    %617 = vmatprep.subr.mxu0 0.0
    %618 = vmatpush1.msra.mxu0 0.0
    %619 = vmatprep.subr.mxu0 0.0
    %620 = vmatpush1.msra.mxu0 0.0
    %621 = vmatprep.subr.mxu0 0.0
    %622 = vmatpush1.msra.mxu0 0.0
    %623 = vmatprep.subr.mxu0 0.0
    %624 = vmatpush1.msra.mxu0 0.0
    %625 = vmatprep.subr.mxu0 0.0
    %626 = vmatpush1.msra.mxu0 0.0
    %627 = vmatprep.subr.mxu0 0.0
    %628 = vmatpush1.msra.mxu0 0.0
    %629 = vmatprep.subr.mxu0 0.0
    %630 = vmatpush1.msra.mxu0 0.0
    %631 = vmatprep.subr.mxu0 0.0
    %632 = vmatpush1.msra.mxu0 0.0
    %633 = vmatprep.subr.mxu0 0.0
    %634 = vmatpush1.msra.mxu0 0.0
    %635 = vmatprep.mubr.f32.mxu0 0.0
    %636 = vmatmul.mubr.f32.gmra.mrb[0].mxu0 %v548
    %v637 = vpop.f32.mrb[0].mxu0
    %v638 = vadd.f32 %v509, %v637
    %v639 = vpop.f32.mrb[0].mxu0
    %v640 = vadd.f32 %v509, %v639
    %641 = vmatprep.mubr.f32.mxu0 0.0
    %642 = vmatmul.mubr.f32.gmra.mrb[0].mxu0 %v551
    %v643 = vpop.f32.mrb[0].mxu0
    %v644 = vadd.f32 %v514, %v643
    %v645 = vpop.f32.mrb[0].mxu0
    %v646 = vadd.f32 %v514, %v645
    %647 = vmatprep.mubr.f32.mxu0 0.0
    %648 = vmatmul.mubr.f32.gmra.mrb[0].mxu0 %v554
    %v649 = vpop.f32.mrb[0].mxu0
    %v650 = vadd.f32 %v519, %v649
    %v651 = vpop.f32.mrb[0].mxu0
    %v652 = vadd.f32 %v519, %v651
    %653 = vmatprep.mubr.f32.mxu0 0.0
    %654 = vmatmul.mubr.f32.gmra.mrb[0].mxu0 %v557
    %v655 = vpop.f32.mrb[0].mxu0
    %v656 = vadd.f32 %v524, %v655
    %v657 = vpop.f32.mrb[0].mxu0
    %v658 = vadd.f32 %v524, %v657
    %659 = vmatprep.mubr.f32.mxu0 0.0
    %660 = vmatmul.mubr.f32.gmra.mrb[0].mxu0 %v560
    %v661 = vpop.f32.mrb[0].mxu0
    %v662 = vadd.f32 %v529, %v661
    %v663 = vpop.f32.mrb[0].mxu0
    %v664 = vadd.f32 %v529, %v663
    %665 = vmatprep.mubr.f32.mxu0 0.0
    %666 = vmatmul.mubr.f32.gmra.mrb[0].mxu0 %v563
    %v667 = vpop.f32.mrb[0].mxu0
    %v668 = vadd.f32 %v534, %v667
    %v669 = vpop.f32.mrb[0].mxu0
    %v670 = vadd.f32 %v534, %v669
    %671 = vmatprep.mubr.f32.mxu0 0.0
    %672 = vmatmul.mubr.f32.gmra.mrb[0].mxu0 %v566
    %v673 = vpop.f32.mrb[0].mxu0
    %v674 = vadd.f32 %v539, %v673
    %v675 = vpop.f32.mrb[0].mxu0
    %v676 = vadd.f32 %v539, %v675
    %677 = vmatprep.mubr.f32.mxu0 0.0
    %678 = vmatmul.mubr.f32.gmra.mrb[0].mxu0 %v569
    %v679 = vpop.f32.mrb[0].mxu0
    %v680 = vadd.f32 %v544, %v679
    %v681 = vpop.f32.mrb[0].mxu0
    %v682 = vadd.f32 %v544, %v681
    %683 = vdwg.mxu0
    %v684 = vadd.f32 %v638, %v640
    %v685 = vadd.f32 %v684, %v644
    %v686 = vadd.f32 %v685, %v646
    %v687 = vadd.f32 %v686, %v650
    %v688 = vadd.f32 %v687, %v652
    %v689 = vadd.f32 %v688, %v656
    %v690 = vadd.f32 %v689, %v658
    %v691 = vadd.f32 %v690, %v662
    %v692 = vadd.f32 %v691, %v664
    %v693 = vadd.f32 %v692, %v668
    %v694 = vadd.f32 %v693, %v670
    %v695 = vadd.f32 %v694, %v674
    %v696 = vadd.f32 %v695, %v676
    %v697 = vadd.f32 %v696, %v680
    %v698 = vadd.f32 %v697, %v682
    %699 = vadd.xlane.f32.xlu0 %v698
    %v700 = vpop.xlane.xlu0 %699
    %v701 = vrot.slane %v700, 4
    %v702 = vadd.f32 %v700, %v701
    %v703 = vrot.slane %v702, 2
    %v704 = vadd.f32 %v702, %v703
    %v705 = vrot.slane %v704, 1
    %v706 = vadd.f32 %v704, %v705
    %s707 = vtos %v706
    %v708 = vstv %s707
    %v709 = vmul.f32 %v638, %v638
    %v710 = vmul.f32 %v640, %v640
    %v711 = vmul.f32 %v644, %v644
    %v712 = vmul.f32 %v646, %v646
    %v713 = vmul.f32 %v650, %v650
    %v714 = vmul.f32 %v652, %v652
    %v715 = vmul.f32 %v656, %v656
    %v716 = vmul.f32 %v658, %v658
    %v717 = vmul.f32 %v662, %v662
    %v718 = vmul.f32 %v664, %v664
    %v719 = vmul.f32 %v668, %v668
    %v720 = vmul.f32 %v670, %v670
    %v721 = vmul.f32 %v674, %v674
    %v722 = vmul.f32 %v676, %v676
    %v723 = vmul.f32 %v680, %v680
    %v724 = vmul.f32 %v682, %v682
    %v725 = vadd.f32 %v709, %v710
    %v726 = vadd.f32 %v725, %v711
    %v727 = vadd.f32 %v726, %v712
    %v728 = vadd.f32 %v727, %v713
    %v729 = vadd.f32 %v728, %v714
    %v730 = vadd.f32 %v729, %v715
    %v731 = vadd.f32 %v730, %v716
    %v732 = vadd.f32 %v731, %v717
    %v733 = vadd.f32 %v732, %v718
    %v734 = vadd.f32 %v733, %v719
    %v735 = vadd.f32 %v734, %v720
    %v736 = vadd.f32 %v735, %v721
    %v737 = vadd.f32 %v736, %v722
    %v738 = vadd.f32 %v737, %v723
    %v739 = vadd.f32 %v738, %v724
    %740 = vadd.xlane.f32.xlu0 %v739
    %v741 = vpop.xlane.xlu0 %740
    %v742 = vrot.slane %v741, 4
    %v743 = vadd.f32 %v741, %v742
    %v744 = vrot.slane %v743, 2
    %v745 = vadd.f32 %v743, %v744
    %v746 = vrot.slane %v745, 1
    %v747 = vadd.f32 %v745, %v746
    %s748 = vtos %v747
    %v749 = vstv %s748
    %v750 = vmul.f32 %v708, 6.1035156e-05
    %v751 = vmul.f32 %v749, 6.1035156e-05
    %v752 = vmul.f32 %v750, %v750
    %v753 = vsub.f32 %v751, %v752
    %v754 = vmax.f32 %v753, 0.0
    %v755 = vadd.f32 %v754, 1e-05
    %v756 = vrsqrt.pop %v755
    %v757 = vsub.f32 %v638, %v750
    %v758 = vsub.f32 %v640, %v750
    %v759 = vsub.f32 %v644, %v750
    %v760 = vsub.f32 %v646, %v750
    %v761 = vsub.f32 %v650, %v750
    %v762 = vsub.f32 %v652, %v750
    %v763 = vsub.f32 %v656, %v750
    %v764 = vsub.f32 %v658, %v750
    %v765 = vsub.f32 %v662, %v750
    %v766 = vsub.f32 %v664, %v750
    %v767 = vsub.f32 %v668, %v750
    %v768 = vsub.f32 %v670, %v750
    %v769 = vsub.f32 %v674, %v750
    %v770 = vsub.f32 %v676, %v750
    %v771 = vsub.f32 %v680, %v750
    %v772 = vsub.f32 %v682, %v750
    %v773 = vmul.f32 %v757, %v756
    %v774 = vmul.f32 %v758, %v756
    %v775 = vmul.f32 %v759, %v756
    %v776 = vmul.f32 %v760, %v756
    %v777 = vmul.f32 %v761, %v756
    %v778 = vmul.f32 %v762, %v756
    %v779 = vmul.f32 %v763, %v756
    %v780 = vmul.f32 %v764, %v756
    %v781 = vmul.f32 %v765, %v756
    %v782 = vmul.f32 %v766, %v756
    %v783 = vmul.f32 %v767, %v756
    %v784 = vmul.f32 %v768, %v756
    %v785 = vmul.f32 %v769, %v756
    %v786 = vmul.f32 %v770, %v756
    %v787 = vmul.f32 %v771, %v756
    %v788 = vmul.f32 %v772, %v756
    %v789 = vld [vmem:[#allocation8] sm:$0xff]
    %v790 = vld [vmem:[#allocation8 + $0x8] sm:$0xff]
    %v791 = vld [vmem:[#allocation8 + $0x10] sm:$0xff]
    %v792 = vld [vmem:[#allocation8 + $0x18] sm:$0xff]
    %v793 = vld [vmem:[#allocation8 + $0x20] sm:$0xff]
    %v794 = vld [vmem:[#allocation8 + $0x28] sm:$0xff]
    %v795 = vld [vmem:[#allocation8 + $0x30] sm:$0xff]
    %v796 = vld [vmem:[#allocation8 + $0x38] sm:$0xff]
    %v797 = vld [vmem:[#allocation8 + $0x40] sm:$0xff]
    %v798 = vld [vmem:[#allocation8 + $0x48] sm:$0xff]
    %v799 = vld [vmem:[#allocation8 + $0x50] sm:$0xff]
    %v800 = vld [vmem:[#allocation8 + $0x58] sm:$0xff]
    %v801 = vld [vmem:[#allocation8 + $0x60] sm:$0xff]
    %v802 = vld [vmem:[#allocation8 + $0x68] sm:$0xff]
    %v803 = vld [vmem:[#allocation8 + $0x70] sm:$0xff]
    %v804 = vld [vmem:[#allocation8 + $0x78] sm:$0xff]
    %v805 = vmul.f32 %v773, %v789
    %v806 = vmul.f32 %v774, %v790
    %v807 = vmul.f32 %v775, %v791
    %v808 = vmul.f32 %v776, %v792
    %v809 = vmul.f32 %v777, %v793
    %v810 = vmul.f32 %v778, %v794
    %v811 = vmul.f32 %v779, %v795
    %v812 = vmul.f32 %v780, %v796
    %v813 = vmul.f32 %v781, %v797
    %v814 = vmul.f32 %v782, %v798
    %v815 = vmul.f32 %v783, %v799
    %v816 = vmul.f32 %v784, %v800
    %v817 = vmul.f32 %v785, %v801
    %v818 = vmul.f32 %v786, %v802
    %v819 = vmul.f32 %v787, %v803
    %v820 = vmul.f32 %v788, %v804
    %v821 = vld [vmem:[#allocation10] sm:$0xff]
    %v822 = vld [vmem:[#allocation10 + $0x8] sm:$0xff]
    %v823 = vld [vmem:[#allocation10 + $0x10] sm:$0xff]
    %v824 = vld [vmem:[#allocation10 + $0x18] sm:$0xff]
    %v825 = vld [vmem:[#allocation10 + $0x20] sm:$0xff]
    %v826 = vld [vmem:[#allocation10 + $0x28] sm:$0xff]
    %v827 = vld [vmem:[#allocation10 + $0x30] sm:$0xff]
    %v828 = vld [vmem:[#allocation10 + $0x38] sm:$0xff]
    %v829 = vld [vmem:[#allocation10 + $0x40] sm:$0xff]
    %v830 = vld [vmem:[#allocation10 + $0x48] sm:$0xff]
    %v831 = vld [vmem:[#allocation10 + $0x50] sm:$0xff]
    %v832 = vld [vmem:[#allocation10 + $0x58] sm:$0xff]
    %v833 = vld [vmem:[#allocation10 + $0x60] sm:$0xff]
    %v834 = vld [vmem:[#allocation10 + $0x68] sm:$0xff]
    %v835 = vld [vmem:[#allocation10 + $0x70] sm:$0xff]
    %v836 = vld [vmem:[#allocation10 + $0x78] sm:$0xff]
    %v837 = vadd.f32 %v805, %v821
    %v838 = vadd.f32 %v806, %v822
    %v839 = vadd.f32 %v807, %v823
    %v840 = vadd.f32 %v808, %v824
    %v841 = vadd.f32 %v809, %v825
    %v842 = vadd.f32 %v810, %v826
    %v843 = vadd.f32 %v811, %v827
    %v844 = vadd.f32 %v812, %v828
    %v845 = vadd.f32 %v813, %v829
    %v846 = vadd.f32 %v814, %v830
    %v847 = vadd.f32 %v815, %v831
    %v848 = vadd.f32 %v816, %v832
    %v849 = vadd.f32 %v817, %v833
    %v850 = vadd.f32 %v818, %v834
    %v851 = vadd.f32 %v819, %v835
    %v852 = vadd.f32 %v820, %v836
    %v853 = vmax.f32 %v837, 0.0
    %v854 = vmax.f32 %v838, 0.0
    %v855 = vmax.f32 %v839, 0.0
    %v856 = vmax.f32 %v840, 0.0
    %v857 = vmax.f32 %v841, 0.0
    %v858 = vmax.f32 %v842, 0.0
    %v859 = vmax.f32 %v843, 0.0
    %v860 = vmax.f32 %v844, 0.0
    %v861 = vmax.f32 %v845, 0.0
    %v862 = vmax.f32 %v846, 0.0
    %v863 = vmax.f32 %v847, 0.0
    %v864 = vmax.f32 %v848, 0.0
    %v865 = vmax.f32 %v849, 0.0
    %v866 = vmax.f32 %v850, 0.0
    %v867 = vmax.f32 %v851, 0.0
    %v868 = vmax.f32 %v852, 0.0
    %870 = vset.pattern.permute.xlu0 0
    %871 = vperm.xlu0 %870, %v156
    %v872 = vpop.permute.xlu0 %871
    %875 = vset.pattern.permute.xlu0 0
    %876 = vperm.xlu0 %875, %v157
    %v877 = vpop.permute.xlu0 %876
    %880 = vset.pattern.permute.xlu0 0
    %881 = vperm.xlu0 %880, %v158
    %v882 = vpop.permute.xlu0 %881
    %885 = vset.pattern.permute.xlu0 0
    %886 = vperm.xlu0 %885, %v159
    %v887 = vpop.permute.xlu0 %886
    %890 = vset.pattern.permute.xlu0 0
    %891 = vperm.xlu0 %890, %v160
    %v892 = vpop.permute.xlu0 %891
    %895 = vset.pattern.permute.xlu0 0
    %896 = vperm.xlu0 %895, %v161
    %v897 = vpop.permute.xlu0 %896
    %900 = vset.pattern.permute.xlu0 0
    %901 = vperm.xlu0 %900, %v162
    %v902 = vpop.permute.xlu0 %901
    %905 = vset.pattern.permute.xlu0 0
    %906 = vperm.xlu0 %905, %v163
    %v907 = vpop.permute.xlu0 %906
    %910 = vset.pattern.permute.xlu0 0
    %911 = vperm.xlu0 %910, %v164
    %v912 = vpop.permute.xlu0 %911
    %915 = vset.pattern.permute.xlu0 0
    %916 = vperm.xlu0 %915, %v165
    %v917 = vpop.permute.xlu0 %916
    %920 = vset.pattern.permute.xlu0 0
    %921 = vperm.xlu0 %920, %v166
    %v922 = vpop.permute.xlu0 %921
    %925 = vset.pattern.permute.xlu0 0
    %926 = vperm.xlu0 %925, %v167
    %v927 = vpop.permute.xlu0 %926
    %930 = vset.pattern.permute.xlu0 0
    %931 = vperm.xlu0 %930, %v168
    %v932 = vpop.permute.xlu0 %931
    %935 = vset.pattern.permute.xlu0 0
    %936 = vperm.xlu0 %935, %v169
    %v937 = vpop.permute.xlu0 %936
    %940 = vset.pattern.permute.xlu0 0
    %941 = vperm.xlu0 %940, %v170
    %v942 = vpop.permute.xlu0 %941
    %945 = vset.pattern.permute.xlu0 0
    %946 = vperm.xlu0 %945, %v171
    %v947 = vpop.permute.xlu0 %946
    %vm949 = vcmask 523264
    %v951 = vsel %vm949, %v140, 0
    %v954 = vsel %vm949, %v141, 0
    %v957 = vsel %vm949, %v142, 0
    %v960 = vsel %vm949, %v143, 0
    %v963 = vsel %vm949, %v144, 0
    %v966 = vsel %vm949, %v145, 0
    %v969 = vsel %vm949, %v146, 0
    %v972 = vsel %vm949, %v147, 0
    %v975 = vsel %vm949, %v148, 0
    %v978 = vsel %vm949, %v149, 0
    %v981 = vsel %vm949, %v150, 0
    %v984 = vsel %vm949, %v151, 0
    %v987 = vsel %vm949, %v152, 0
    %v990 = vsel %vm949, %v153, 0
    %v993 = vsel %vm949, %v154, 0
    %v996 = vsel %vm949, %v155, 0
    %998 = vmatprep.subr.mxu0 %v854
    %999 = vmatpush1.msra.mxu0 %v853
    %1000 = vmatprep.subr.mxu0 %v856
    %1001 = vmatpush1.msra.mxu0 %v855
    %1002 = vmatprep.subr.mxu0 %v858
    %1003 = vmatpush1.msra.mxu0 %v857
    %1004 = vmatprep.subr.mxu0 %v860
    %1005 = vmatpush1.msra.mxu0 %v859
    %1006 = vmatprep.subr.mxu0 %v862
    %1007 = vmatpush1.msra.mxu0 %v861
    %1008 = vmatprep.subr.mxu0 %v864
    %1009 = vmatpush1.msra.mxu0 %v863
    %1010 = vmatprep.subr.mxu0 %v866
    %1011 = vmatpush1.msra.mxu0 %v865
    %1012 = vmatprep.subr.mxu0 %v868
    %1013 = vmatpush1.msra.mxu0 %v867
    %1014 = vmatprep.subr.mxu0 0.0
    %1015 = vmatpush1.msra.mxu0 0.0
    %1016 = vmatprep.subr.mxu0 0.0
    %1017 = vmatpush1.msra.mxu0 0.0
    %1018 = vmatprep.subr.mxu0 0.0
    %1019 = vmatpush1.msra.mxu0 0.0
    %1020 = vmatprep.subr.mxu0 0.0
    %1021 = vmatpush1.msra.mxu0 0.0
    %1022 = vmatprep.subr.mxu0 0.0
    %1023 = vmatpush1.msra.mxu0 0.0
    %1024 = vmatprep.subr.mxu0 0.0
    %1025 = vmatpush1.msra.mxu0 0.0
    %1026 = vmatprep.subr.mxu0 0.0
    %1027 = vmatpush1.msra.mxu0 0.0
    %1028 = vmatprep.subr.mxu0 0.0
    %1029 = vmatpush1.msra.mxu0 0.0
    %1030 = vmatprep.subr.mxu0 0.0
    %1031 = vmatpush1.msra.mxu0 0.0
    %1032 = vmatprep.subr.mxu0 0.0
    %1033 = vmatpush1.msra.mxu0 0.0
    %1034 = vmatprep.subr.mxu0 0.0
    %1035 = vmatpush1.msra.mxu0 0.0
    %1036 = vmatprep.subr.mxu0 0.0
    %1037 = vmatpush1.msra.mxu0 0.0
    %1038 = vmatprep.subr.mxu0 0.0
    %1039 = vmatpush1.msra.mxu0 0.0
    %1040 = vmatprep.subr.mxu0 0.0
    %1041 = vmatpush1.msra.mxu0 0.0
    %1042 = vmatprep.subr.mxu0 0.0
    %1043 = vmatpush1.msra.mxu0 0.0
    %1044 = vmatprep.subr.mxu0 0.0
    %1045 = vmatpush1.msra.mxu0 0.0
    %1046 = vmatprep.subr.mxu0 0.0
    %1047 = vmatpush1.msra.mxu0 0.0
    %1048 = vmatprep.subr.mxu0 0.0
    %1049 = vmatpush1.msra.mxu0 0.0
    %1050 = vmatprep.subr.mxu0 0.0
    %1051 = vmatpush1.msra.mxu0 0.0
    %1052 = vmatprep.subr.mxu0 0.0
    %1053 = vmatpush1.msra.mxu0 0.0
    %1054 = vmatprep.subr.mxu0 0.0
    %1055 = vmatpush1.msra.mxu0 0.0
    %1056 = vmatprep.subr.mxu0 0.0
    %1057 = vmatpush1.msra.mxu0 0.0
    %1058 = vmatprep.subr.mxu0 0.0
    %1059 = vmatpush1.msra.mxu0 0.0
    %1060 = vmatprep.subr.mxu0 0.0
    %1061 = vmatpush1.msra.mxu0 0.0
    %1062 = vmatprep.mubr.f32.mxu0 0.0
    %1063 = vmatmul.mubr.f32.gmra.mrb[0].mxu0 %v951
    %v1064 = vpop.f32.mrb[0].mxu0
    %v1065 = vadd.f32 %v872, %v1064
    %v1066 = vpop.f32.mrb[0].mxu0
    %v1067 = vadd.f32 %v872, %v1066
    %1068 = vmatprep.mubr.f32.mxu0 0.0
    %1069 = vmatmul.mubr.f32.gmra.mrb[0].mxu0 %v954
    %v1070 = vpop.f32.mrb[0].mxu0
    %v1071 = vadd.f32 %v877, %v1070
    %v1072 = vpop.f32.mrb[0].mxu0
    %v1073 = vadd.f32 %v877, %v1072
    %1074 = vmatprep.mubr.f32.mxu0 0.0
    %1075 = vmatmul.mubr.f32.gmra.mrb[0].mxu0 %v957
    %v1076 = vpop.f32.mrb[0].mxu0
    %v1077 = vadd.f32 %v882, %v1076
    %v1078 = vpop.f32.mrb[0].mxu0
    %v1079 = vadd.f32 %v882, %v1078
    %1080 = vmatprep.mubr.f32.mxu0 0.0
    %1081 = vmatmul.mubr.f32.gmra.mrb[0].mxu0 %v960
    %v1082 = vpop.f32.mrb[0].mxu0
    %v1083 = vadd.f32 %v887, %v1082
    %v1084 = vpop.f32.mrb[0].mxu0
    %v1085 = vadd.f32 %v887, %v1084
    %1086 = vmatprep.mubr.f32.mxu0 0.0
    %1087 = vmatmul.mubr.f32.gmra.mrb[0].mxu0 %v963
    %v1088 = vpop.f32.mrb[0].mxu0
    %v1089 = vadd.f32 %v892, %v1088
    %v1090 = vpop.f32.mrb[0].mxu0
    %v1091 = vadd.f32 %v892, %v1090
    %1092 = vmatprep.mubr.f32.mxu0 0.0
    %1093 = vmatmul.mubr.f32.gmra.mrb[0].mxu0 %v966
    %v1094 = vpop.f32.mrb[0].mxu0
    %v1095 = vadd.f32 %v897, %v1094
    %v1096 = vpop.f32.mrb[0].mxu0
    %v1097 = vadd.f32 %v897, %v1096
    %1098 = vmatprep.mubr.f32.mxu0 0.0
    %1099 = vmatmul.mubr.f32.gmra.mrb[0].mxu0 %v969
    %v1100 = vpop.f32.mrb[0].mxu0
    %v1101 = vadd.f32 %v902, %v1100
    %v1102 = vpop.f32.mrb[0].mxu0
    %v1103 = vadd.f32 %v902, %v1102
    %1104 = vmatprep.mubr.f32.mxu0 0.0
    %1105 = vmatmul.mubr.f32.gmra.mrb[0].mxu0 %v972
    %v1106 = vpop.f32.mrb[0].mxu0
    %v1107 = vadd.f32 %v907, %v1106
    %v1108 = vpop.f32.mrb[0].mxu0
    %v1109 = vadd.f32 %v907, %v1108
    %1110 = vmatprep.mubr.f32.mxu0 0.0
    %1111 = vmatmul.mubr.f32.gmra.mrb[0].mxu0 %v975
    %v1112 = vpop.f32.mrb[0].mxu0
    %v1113 = vadd.f32 %v912, %v1112
    %v1114 = vpop.f32.mrb[0].mxu0
    %v1115 = vadd.f32 %v912, %v1114
    %1116 = vmatprep.mubr.f32.mxu0 0.0
    %1117 = vmatmul.mubr.f32.gmra.mrb[0].mxu0 %v978
    %v1118 = vpop.f32.mrb[0].mxu0
    %v1119 = vadd.f32 %v917, %v1118
    %v1120 = vpop.f32.mrb[0].mxu0
    %v1121 = vadd.f32 %v917, %v1120
    %1122 = vmatprep.mubr.f32.mxu0 0.0
    %1123 = vmatmul.mubr.f32.gmra.mrb[0].mxu0 %v981
    %v1124 = vpop.f32.mrb[0].mxu0
    %v1125 = vadd.f32 %v922, %v1124
    %v1126 = vpop.f32.mrb[0].mxu0
    %v1127 = vadd.f32 %v922, %v1126
    %1128 = vmatprep.mubr.f32.mxu0 0.0
    %1129 = vmatmul.mubr.f32.gmra.mrb[0].mxu0 %v984
    %v1130 = vpop.f32.mrb[0].mxu0
    %v1131 = vadd.f32 %v927, %v1130
    %v1132 = vpop.f32.mrb[0].mxu0
    %v1133 = vadd.f32 %v927, %v1132
    %1134 = vmatprep.mubr.f32.mxu0 0.0
    %1135 = vmatmul.mubr.f32.gmra.mrb[0].mxu0 %v987
    %v1136 = vpop.f32.mrb[0].mxu0
    %v1137 = vadd.f32 %v932, %v1136
    %v1138 = vpop.f32.mrb[0].mxu0
    %v1139 = vadd.f32 %v932, %v1138
    %1140 = vmatprep.mubr.f32.mxu0 0.0
    %1141 = vmatmul.mubr.f32.gmra.mrb[0].mxu0 %v990
    %v1142 = vpop.f32.mrb[0].mxu0
    %v1143 = vadd.f32 %v937, %v1142
    %v1144 = vpop.f32.mrb[0].mxu0
    %v1145 = vadd.f32 %v937, %v1144
    %1146 = vmatprep.mubr.f32.mxu0 0.0
    %1147 = vmatmul.mubr.f32.gmra.mrb[0].mxu0 %v993
    %v1148 = vpop.f32.mrb[0].mxu0
    %v1149 = vadd.f32 %v942, %v1148
    %v1150 = vpop.f32.mrb[0].mxu0
    %v1151 = vadd.f32 %v942, %v1150
    %1152 = vmatprep.mubr.f32.mxu0 0.0
    %1153 = vmatmul.mubr.f32.gmra.mrb[0].mxu0 %v996
    %v1154 = vpop.f32.mrb[0].mxu0
    %v1155 = vadd.f32 %v947, %v1154
    %v1156 = vpop.f32.mrb[0].mxu0
    %v1157 = vadd.f32 %v947, %v1156
    %1158 = vdwg.mxu0
    %v1159 = vadd.f32 %v1065, %v1067
    %v1160 = vadd.f32 %v1159, %v1071
    %v1161 = vadd.f32 %v1160, %v1073
    %v1162 = vadd.f32 %v1161, %v1077
    %v1163 = vadd.f32 %v1162, %v1079
    %v1164 = vadd.f32 %v1163, %v1083
    %v1165 = vadd.f32 %v1164, %v1085
    %v1166 = vadd.f32 %v1165, %v1089
    %v1167 = vadd.f32 %v1166, %v1091
    %v1168 = vadd.f32 %v1167, %v1095
    %v1169 = vadd.f32 %v1168, %v1097
    %v1170 = vadd.f32 %v1169, %v1101
    %v1171 = vadd.f32 %v1170, %v1103
    %v1172 = vadd.f32 %v1171, %v1107
    %v1173 = vadd.f32 %v1172, %v1109
    %v1174 = vadd.f32 %v1173, %v1113
    %v1175 = vadd.f32 %v1174, %v1115
    %v1176 = vadd.f32 %v1175, %v1119
    %v1177 = vadd.f32 %v1176, %v1121
    %v1178 = vadd.f32 %v1177, %v1125
    %v1179 = vadd.f32 %v1178, %v1127
    %v1180 = vadd.f32 %v1179, %v1131
    %v1181 = vadd.f32 %v1180, %v1133
    %v1182 = vadd.f32 %v1181, %v1137
    %v1183 = vadd.f32 %v1182, %v1139
    %v1184 = vadd.f32 %v1183, %v1143
    %v1185 = vadd.f32 %v1184, %v1145
    %v1186 = vadd.f32 %v1185, %v1149
    %v1187 = vadd.f32 %v1186, %v1151
    %v1188 = vadd.f32 %v1187, %v1155
    %v1189 = vadd.f32 %v1188, %v1157
    %1190 = vadd.xlane.f32.xlu0 %v1189
    %v1191 = vpop.xlane.xlu0 %1190
    %v1192 = vrot.slane %v1191, 4
    %v1193 = vadd.f32 %v1191, %v1192
    %v1194 = vrot.slane %v1193, 2
    %v1195 = vadd.f32 %v1193, %v1194
    %v1196 = vrot.slane %v1195, 1
    %v1197 = vadd.f32 %v1195, %v1196
    %s1198 = vtos %v1197
    %v1199 = vstv %s1198
    %v1200 = vmul.f32 %v1065, %v1065
    %v1201 = vmul.f32 %v1067, %v1067
    %v1202 = vmul.f32 %v1071, %v1071
    %v1203 = vmul.f32 %v1073, %v1073
    %v1204 = vmul.f32 %v1077, %v1077
    %v1205 = vmul.f32 %v1079, %v1079
    %v1206 = vmul.f32 %v1083, %v1083
    %v1207 = vmul.f32 %v1085, %v1085
    %v1208 = vmul.f32 %v1089, %v1089
    %v1209 = vmul.f32 %v1091, %v1091
    %v1210 = vmul.f32 %v1095, %v1095
    %v1211 = vmul.f32 %v1097, %v1097
    %v1212 = vmul.f32 %v1101, %v1101
    %v1213 = vmul.f32 %v1103, %v1103
    %v1214 = vmul.f32 %v1107, %v1107
    %v1215 = vmul.f32 %v1109, %v1109
    %v1216 = vmul.f32 %v1113, %v1113
    %v1217 = vmul.f32 %v1115, %v1115
    %v1218 = vmul.f32 %v1119, %v1119
    %v1219 = vmul.f32 %v1121, %v1121
    %v1220 = vmul.f32 %v1125, %v1125
    %v1221 = vmul.f32 %v1127, %v1127
    %v1222 = vmul.f32 %v1131, %v1131
    %v1223 = vmul.f32 %v1133, %v1133
    %v1224 = vmul.f32 %v1137, %v1137
    %v1225 = vmul.f32 %v1139, %v1139
    %v1226 = vmul.f32 %v1143, %v1143
    %v1227 = vmul.f32 %v1145, %v1145
    %v1228 = vmul.f32 %v1149, %v1149
    %v1229 = vmul.f32 %v1151, %v1151
    %v1230 = vmul.f32 %v1155, %v1155
    %v1231 = vmul.f32 %v1157, %v1157
    %v1232 = vadd.f32 %v1200, %v1201
    %v1233 = vadd.f32 %v1232, %v1202
    %v1234 = vadd.f32 %v1233, %v1203
    %v1235 = vadd.f32 %v1234, %v1204
    %v1236 = vadd.f32 %v1235, %v1205
    %v1237 = vadd.f32 %v1236, %v1206
    %v1238 = vadd.f32 %v1237, %v1207
    %v1239 = vadd.f32 %v1238, %v1208
    %v1240 = vadd.f32 %v1239, %v1209
    %v1241 = vadd.f32 %v1240, %v1210
    %v1242 = vadd.f32 %v1241, %v1211
    %v1243 = vadd.f32 %v1242, %v1212
    %v1244 = vadd.f32 %v1243, %v1213
    %v1245 = vadd.f32 %v1244, %v1214
    %v1246 = vadd.f32 %v1245, %v1215
    %v1247 = vadd.f32 %v1246, %v1216
    %v1248 = vadd.f32 %v1247, %v1217
    %v1249 = vadd.f32 %v1248, %v1218
    %v1250 = vadd.f32 %v1249, %v1219
    %v1251 = vadd.f32 %v1250, %v1220
    %v1252 = vadd.f32 %v1251, %v1221
    %v1253 = vadd.f32 %v1252, %v1222
    %v1254 = vadd.f32 %v1253, %v1223
    %v1255 = vadd.f32 %v1254, %v1224
    %v1256 = vadd.f32 %v1255, %v1225
    %v1257 = vadd.f32 %v1256, %v1226
    %v1258 = vadd.f32 %v1257, %v1227
    %v1259 = vadd.f32 %v1258, %v1228
    %v1260 = vadd.f32 %v1259, %v1229
    %v1261 = vadd.f32 %v1260, %v1230
    %v1262 = vadd.f32 %v1261, %v1231
    %1263 = vadd.xlane.f32.xlu0 %v1262
    %v1264 = vpop.xlane.xlu0 %1263
    %v1265 = vrot.slane %v1264, 4
    %v1266 = vadd.f32 %v1264, %v1265
    %v1267 = vrot.slane %v1266, 2
    %v1268 = vadd.f32 %v1266, %v1267
    %v1269 = vrot.slane %v1268, 1
    %v1270 = vadd.f32 %v1268, %v1269
    %s1271 = vtos %v1270
    %v1272 = vstv %s1271
    %v1273 = vmul.f32 %v1199, 3.0517578e-05
    %v1274 = vmul.f32 %v1272, 3.0517578e-05
    %v1275 = vmul.f32 %v1273, %v1273
    %v1276 = vsub.f32 %v1274, %v1275
    %v1277 = vmax.f32 %v1276, 0.0
    %v1278 = vadd.f32 %v1277, 1e-05
    %v1279 = vrsqrt.pop %v1278
    %v1280 = vsub.f32 %v1065, %v1273
    %v1281 = vsub.f32 %v1067, %v1273
    %v1282 = vsub.f32 %v1071, %v1273
    %v1283 = vsub.f32 %v1073, %v1273
    %v1284 = vsub.f32 %v1077, %v1273
    %v1285 = vsub.f32 %v1079, %v1273
    %v1286 = vsub.f32 %v1083, %v1273
    %v1287 = vsub.f32 %v1085, %v1273
    %v1288 = vsub.f32 %v1089, %v1273
    %v1289 = vsub.f32 %v1091, %v1273
    %v1290 = vsub.f32 %v1095, %v1273
    %v1291 = vsub.f32 %v1097, %v1273
    %v1292 = vsub.f32 %v1101, %v1273
    %v1293 = vsub.f32 %v1103, %v1273
    %v1294 = vsub.f32 %v1107, %v1273
    %v1295 = vsub.f32 %v1109, %v1273
    %v1296 = vsub.f32 %v1113, %v1273
    %v1297 = vsub.f32 %v1115, %v1273
    %v1298 = vsub.f32 %v1119, %v1273
    %v1299 = vsub.f32 %v1121, %v1273
    %v1300 = vsub.f32 %v1125, %v1273
    %v1301 = vsub.f32 %v1127, %v1273
    %v1302 = vsub.f32 %v1131, %v1273
    %v1303 = vsub.f32 %v1133, %v1273
    %v1304 = vsub.f32 %v1137, %v1273
    %v1305 = vsub.f32 %v1139, %v1273
    %v1306 = vsub.f32 %v1143, %v1273
    %v1307 = vsub.f32 %v1145, %v1273
    %v1308 = vsub.f32 %v1149, %v1273
    %v1309 = vsub.f32 %v1151, %v1273
    %v1310 = vsub.f32 %v1155, %v1273
    %v1311 = vsub.f32 %v1157, %v1273
    %v1312 = vmul.f32 %v1280, %v1279
    %v1313 = vmul.f32 %v1281, %v1279
    %v1314 = vmul.f32 %v1282, %v1279
    %v1315 = vmul.f32 %v1283, %v1279
    %v1316 = vmul.f32 %v1284, %v1279
    %v1317 = vmul.f32 %v1285, %v1279
    %v1318 = vmul.f32 %v1286, %v1279
    %v1319 = vmul.f32 %v1287, %v1279
    %v1320 = vmul.f32 %v1288, %v1279
    %v1321 = vmul.f32 %v1289, %v1279
    %v1322 = vmul.f32 %v1290, %v1279
    %v1323 = vmul.f32 %v1291, %v1279
    %v1324 = vmul.f32 %v1292, %v1279
    %v1325 = vmul.f32 %v1293, %v1279
    %v1326 = vmul.f32 %v1294, %v1279
    %v1327 = vmul.f32 %v1295, %v1279
    %v1328 = vmul.f32 %v1296, %v1279
    %v1329 = vmul.f32 %v1297, %v1279
    %v1330 = vmul.f32 %v1298, %v1279
    %v1331 = vmul.f32 %v1299, %v1279
    %v1332 = vmul.f32 %v1300, %v1279
    %v1333 = vmul.f32 %v1301, %v1279
    %v1334 = vmul.f32 %v1302, %v1279
    %v1335 = vmul.f32 %v1303, %v1279
    %v1336 = vmul.f32 %v1304, %v1279
    %v1337 = vmul.f32 %v1305, %v1279
    %v1338 = vmul.f32 %v1306, %v1279
    %v1339 = vmul.f32 %v1307, %v1279
    %v1340 = vmul.f32 %v1308, %v1279
    %v1341 = vmul.f32 %v1309, %v1279
    %v1342 = vmul.f32 %v1310, %v1279
    %v1343 = vmul.f32 %v1311, %v1279
    %v1344 = vld [vmem:[%s11] sm:$0xff]
    %v1345 = vld [vmem:[%s11 + $0x8] sm:$0xff]
    %v1346 = vld [vmem:[%s11 + $0x10] sm:$0xff]
    %v1347 = vld [vmem:[%s11 + $0x18] sm:$0xff]
    %v1348 = vld [vmem:[%s11 + $0x20] sm:$0xff]
    %v1349 = vld [vmem:[%s11 + $0x28] sm:$0xff]
    %v1350 = vld [vmem:[%s11 + $0x30] sm:$0xff]
    %v1351 = vld [vmem:[%s11 + $0x38] sm:$0xff]
    %v1352 = vld [vmem:[%s11 + $0x40] sm:$0xff]
    %v1353 = vld [vmem:[%s11 + $0x48] sm:$0xff]
    %v1354 = vld [vmem:[%s11 + $0x50] sm:$0xff]
    %v1355 = vld [vmem:[%s11 + $0x58] sm:$0xff]
    %v1356 = vld [vmem:[%s11 + $0x60] sm:$0xff]
    %v1357 = vld [vmem:[%s11 + $0x68] sm:$0xff]
    %v1358 = vld [vmem:[%s11 + $0x70] sm:$0xff]
    %v1359 = vld [vmem:[%s11 + $0x78] sm:$0xff]
    %v1360 = vld [vmem:[%s11 + $0x80] sm:$0xff]
    %v1361 = vld [vmem:[%s11 + $0x88] sm:$0xff]
    %v1362 = vld [vmem:[%s11 + $0x90] sm:$0xff]
    %v1363 = vld [vmem:[%s11 + $0x98] sm:$0xff]
    %v1364 = vld [vmem:[%s11 + $0xa0] sm:$0xff]
    %v1365 = vld [vmem:[%s11 + $0xa8] sm:$0xff]
    %v1366 = vld [vmem:[%s11 + $0xb0] sm:$0xff]
    %v1367 = vld [vmem:[%s11 + $0xb8] sm:$0xff]
    %v1368 = vld [vmem:[%s11 + $0xc0] sm:$0xff]
    %v1369 = vld [vmem:[%s11 + $0xc8] sm:$0xff]
    %v1370 = vld [vmem:[%s11 + $0xd0] sm:$0xff]
    %v1371 = vld [vmem:[%s11 + $0xd8] sm:$0xff]
    %v1372 = vld [vmem:[%s11 + $0xe0] sm:$0xff]
    %v1373 = vld [vmem:[%s11 + $0xe8] sm:$0xff]
    %v1374 = vld [vmem:[%s11 + $0xf0] sm:$0xff]
    %v1375 = vld [vmem:[%s11 + $0xf8] sm:$0xff]
    %v1376 = vmul.f32 %v1312, %v1344
    %v1377 = vmul.f32 %v1313, %v1345
    %v1378 = vmul.f32 %v1314, %v1346
    %v1379 = vmul.f32 %v1315, %v1347
    %v1380 = vmul.f32 %v1316, %v1348
    %v1381 = vmul.f32 %v1317, %v1349
    %v1382 = vmul.f32 %v1318, %v1350
    %v1383 = vmul.f32 %v1319, %v1351
    %v1384 = vmul.f32 %v1320, %v1352
    %v1385 = vmul.f32 %v1321, %v1353
    %v1386 = vmul.f32 %v1322, %v1354
    %v1387 = vmul.f32 %v1323, %v1355
    %v1388 = vmul.f32 %v1324, %v1356
    %v1389 = vmul.f32 %v1325, %v1357
    %v1390 = vmul.f32 %v1326, %v1358
    %v1391 = vmul.f32 %v1327, %v1359
    %v1392 = vmul.f32 %v1328, %v1360
    %v1393 = vmul.f32 %v1329, %v1361
    %v1394 = vmul.f32 %v1330, %v1362
    %v1395 = vmul.f32 %v1331, %v1363
    %v1396 = vmul.f32 %v1332, %v1364
    %v1397 = vmul.f32 %v1333, %v1365
    %v1398 = vmul.f32 %v1334, %v1366
    %v1399 = vmul.f32 %v1335, %v1367
    %v1400 = vmul.f32 %v1336, %v1368
    %v1401 = vmul.f32 %v1337, %v1369
    %v1402 = vmul.f32 %v1338, %v1370
    %v1403 = vmul.f32 %v1339, %v1371
    %v1404 = vmul.f32 %v1340, %v1372
    %v1405 = vmul.f32 %v1341, %v1373
    %v1406 = vmul.f32 %v1342, %v1374
    %v1407 = vmul.f32 %v1343, %v1375
    %v1408 = vld [vmem:[%s12] sm:$0xff]
    %v1409 = vld [vmem:[%s12 + $0x8] sm:$0xff]
    %v1410 = vld [vmem:[%s12 + $0x10] sm:$0xff]
    %v1411 = vld [vmem:[%s12 + $0x18] sm:$0xff]
    %v1412 = vld [vmem:[%s12 + $0x20] sm:$0xff]
    %v1413 = vld [vmem:[%s12 + $0x28] sm:$0xff]
    %v1414 = vld [vmem:[%s12 + $0x30] sm:$0xff]
    %v1415 = vld [vmem:[%s12 + $0x38] sm:$0xff]
    %v1416 = vld [vmem:[%s12 + $0x40] sm:$0xff]
    %v1417 = vld [vmem:[%s12 + $0x48] sm:$0xff]
    %v1418 = vld [vmem:[%s12 + $0x50] sm:$0xff]
    %v1419 = vld [vmem:[%s12 + $0x58] sm:$0xff]
    %v1420 = vld [vmem:[%s12 + $0x60] sm:$0xff]
    %v1421 = vld [vmem:[%s12 + $0x68] sm:$0xff]
    %v1422 = vld [vmem:[%s12 + $0x70] sm:$0xff]
    %v1423 = vld [vmem:[%s12 + $0x78] sm:$0xff]
    %v1424 = vld [vmem:[%s12 + $0x80] sm:$0xff]
    %v1425 = vld [vmem:[%s12 + $0x88] sm:$0xff]
    %v1426 = vld [vmem:[%s12 + $0x90] sm:$0xff]
    %v1427 = vld [vmem:[%s12 + $0x98] sm:$0xff]
    %v1428 = vld [vmem:[%s12 + $0xa0] sm:$0xff]
    %v1429 = vld [vmem:[%s12 + $0xa8] sm:$0xff]
    %v1430 = vld [vmem:[%s12 + $0xb0] sm:$0xff]
    %v1431 = vld [vmem:[%s12 + $0xb8] sm:$0xff]
    %v1432 = vld [vmem:[%s12 + $0xc0] sm:$0xff]
    %v1433 = vld [vmem:[%s12 + $0xc8] sm:$0xff]
    %v1434 = vld [vmem:[%s12 + $0xd0] sm:$0xff]
    %v1435 = vld [vmem:[%s12 + $0xd8] sm:$0xff]
    %v1436 = vld [vmem:[%s12 + $0xe0] sm:$0xff]
    %v1437 = vld [vmem:[%s12 + $0xe8] sm:$0xff]
    %v1438 = vld [vmem:[%s12 + $0xf0] sm:$0xff]
    %v1439 = vld [vmem:[%s12 + $0xf8] sm:$0xff]
    %v1440 = vadd.f32 %v1376, %v1408
    %v1441 = vadd.f32 %v1377, %v1409
    %v1442 = vadd.f32 %v1378, %v1410
    %v1443 = vadd.f32 %v1379, %v1411
    %v1444 = vadd.f32 %v1380, %v1412
    %v1445 = vadd.f32 %v1381, %v1413
    %v1446 = vadd.f32 %v1382, %v1414
    %v1447 = vadd.f32 %v1383, %v1415
    %v1448 = vadd.f32 %v1384, %v1416
    %v1449 = vadd.f32 %v1385, %v1417
    %v1450 = vadd.f32 %v1386, %v1418
    %v1451 = vadd.f32 %v1387, %v1419
    %v1452 = vadd.f32 %v1388, %v1420
    %v1453 = vadd.f32 %v1389, %v1421
    %v1454 = vadd.f32 %v1390, %v1422
    %v1455 = vadd.f32 %v1391, %v1423
    %v1456 = vadd.f32 %v1392, %v1424
    %v1457 = vadd.f32 %v1393, %v1425
    %v1458 = vadd.f32 %v1394, %v1426
    %v1459 = vadd.f32 %v1395, %v1427
    %v1460 = vadd.f32 %v1396, %v1428
    %v1461 = vadd.f32 %v1397, %v1429
    %v1462 = vadd.f32 %v1398, %v1430
    %v1463 = vadd.f32 %v1399, %v1431
    %v1464 = vadd.f32 %v1400, %v1432
    %v1465 = vadd.f32 %v1401, %v1433
    %v1466 = vadd.f32 %v1402, %v1434
    %v1467 = vadd.f32 %v1403, %v1435
    %v1468 = vadd.f32 %v1404, %v1436
    %v1469 = vadd.f32 %v1405, %v1437
    %v1470 = vadd.f32 %v1406, %v1438
    %v1471 = vadd.f32 %v1407, %v1439
    %v1472 = vmax.f32 %v1440, 0.0
    %v1473 = vmax.f32 %v1441, 0.0
    %v1474 = vmax.f32 %v1442, 0.0
    %v1475 = vmax.f32 %v1443, 0.0
    %v1476 = vmax.f32 %v1444, 0.0
    %v1477 = vmax.f32 %v1445, 0.0
    %v1478 = vmax.f32 %v1446, 0.0
    %v1479 = vmax.f32 %v1447, 0.0
    %v1480 = vmax.f32 %v1448, 0.0
    %v1481 = vmax.f32 %v1449, 0.0
    %v1482 = vmax.f32 %v1450, 0.0
    %v1483 = vmax.f32 %v1451, 0.0
    %v1484 = vmax.f32 %v1452, 0.0
    %v1485 = vmax.f32 %v1453, 0.0
    %v1486 = vmax.f32 %v1454, 0.0
    %v1487 = vmax.f32 %v1455, 0.0
    %v1488 = vmax.f32 %v1456, 0.0
    %v1489 = vmax.f32 %v1457, 0.0
    %v1490 = vmax.f32 %v1458, 0.0
    %v1491 = vmax.f32 %v1459, 0.0
    %v1492 = vmax.f32 %v1460, 0.0
    %v1493 = vmax.f32 %v1461, 0.0
    %v1494 = vmax.f32 %v1462, 0.0
    %v1495 = vmax.f32 %v1463, 0.0
    %v1496 = vmax.f32 %v1464, 0.0
    %v1497 = vmax.f32 %v1465, 0.0
    %v1498 = vmax.f32 %v1466, 0.0
    %v1499 = vmax.f32 %v1467, 0.0
    %v1500 = vmax.f32 %v1468, 0.0
    %v1501 = vmax.f32 %v1469, 0.0
    %v1502 = vmax.f32 %v1470, 0.0
    %v1503 = vmax.f32 %v1471, 0.0
    %v1504 = vmax.f32 %v1472, %v1473
    %1505 = vmax.xlane.f32.xlu0 %v1504
    %v1506 = vpop.xlane.xlu0 %1505
    %v1507 = vmax.f32 %v1474, %v1475
    %1508 = vmax.xlane.f32.xlu0 %v1507
    %v1509 = vpop.xlane.xlu0 %1508
    %v1510 = vmax.f32 %v1476, %v1477
    %1511 = vmax.xlane.f32.xlu0 %v1510
    %v1512 = vpop.xlane.xlu0 %1511
    %v1513 = vmax.f32 %v1478, %v1479
    %1514 = vmax.xlane.f32.xlu0 %v1513
    %v1515 = vpop.xlane.xlu0 %1514
    %v1516 = vmax.f32 %v1480, %v1481
    %1517 = vmax.xlane.f32.xlu0 %v1516
    %v1518 = vpop.xlane.xlu0 %1517
    %v1519 = vmax.f32 %v1482, %v1483
    %1520 = vmax.xlane.f32.xlu0 %v1519
    %v1521 = vpop.xlane.xlu0 %1520
    %v1522 = vmax.f32 %v1484, %v1485
    %1523 = vmax.xlane.f32.xlu0 %v1522
    %v1524 = vpop.xlane.xlu0 %1523
    %v1525 = vmax.f32 %v1486, %v1487
    %1526 = vmax.xlane.f32.xlu0 %v1525
    %v1527 = vpop.xlane.xlu0 %1526
    %v1528 = vmax.f32 %v1488, %v1489
    %1529 = vmax.xlane.f32.xlu0 %v1528
    %v1530 = vpop.xlane.xlu0 %1529
    %v1531 = vmax.f32 %v1490, %v1491
    %1532 = vmax.xlane.f32.xlu0 %v1531
    %v1533 = vpop.xlane.xlu0 %1532
    %v1534 = vmax.f32 %v1492, %v1493
    %1535 = vmax.xlane.f32.xlu0 %v1534
    %v1536 = vpop.xlane.xlu0 %1535
    %v1537 = vmax.f32 %v1494, %v1495
    %1538 = vmax.xlane.f32.xlu0 %v1537
    %v1539 = vpop.xlane.xlu0 %1538
    %v1540 = vmax.f32 %v1496, %v1497
    %1541 = vmax.xlane.f32.xlu0 %v1540
    %v1542 = vpop.xlane.xlu0 %1541
    %v1543 = vmax.f32 %v1498, %v1499
    %1544 = vmax.xlane.f32.xlu0 %v1543
    %v1545 = vpop.xlane.xlu0 %1544
    %v1546 = vmax.f32 %v1500, %v1501
    %1547 = vmax.xlane.f32.xlu0 %v1546
    %v1548 = vpop.xlane.xlu0 %1547
    %v1549 = vmax.f32 %v1502, %v1503
    %1550 = vmax.xlane.f32.xlu0 %v1549
    %v1551 = vpop.xlane.xlu0 %1550
    %vm1552 = vcmp.eq.f32.partialorder %v1472, %v1506
    %vm1553 = vcmp.eq.f32.partialorder %v1473, %v1506
    %vm1554 = vcmp.eq.f32.partialorder %v1474, %v1509
    %vm1555 = vcmp.eq.f32.partialorder %v1475, %v1509
    %vm1556 = vcmp.eq.f32.partialorder %v1476, %v1512
    %vm1557 = vcmp.eq.f32.partialorder %v1477, %v1512
    %vm1558 = vcmp.eq.f32.partialorder %v1478, %v1515
    %vm1559 = vcmp.eq.f32.partialorder %v1479, %v1515
    %vm1560 = vcmp.eq.f32.partialorder %v1480, %v1518
    %vm1561 = vcmp.eq.f32.partialorder %v1481, %v1518
    %vm1562 = vcmp.eq.f32.partialorder %v1482, %v1521
    %vm1563 = vcmp.eq.f32.partialorder %v1483, %v1521
    %vm1564 = vcmp.eq.f32.partialorder %v1484, %v1524
    %vm1565 = vcmp.eq.f32.partialorder %v1485, %v1524
    %vm1566 = vcmp.eq.f32.partialorder %v1486, %v1527
    %vm1567 = vcmp.eq.f32.partialorder %v1487, %v1527
    %vm1568 = vcmp.eq.f32.partialorder %v1488, %v1530
    %vm1569 = vcmp.eq.f32.partialorder %v1489, %v1530
    %vm1570 = vcmp.eq.f32.partialorder %v1490, %v1533
    %vm1571 = vcmp.eq.f32.partialorder %v1491, %v1533
    %vm1572 = vcmp.eq.f32.partialorder %v1492, %v1536
    %vm1573 = vcmp.eq.f32.partialorder %v1493, %v1536
    %vm1574 = vcmp.eq.f32.partialorder %v1494, %v1539
    %vm1575 = vcmp.eq.f32.partialorder %v1495, %v1539
    %vm1576 = vcmp.eq.f32.partialorder %v1496, %v1542
    %vm1577 = vcmp.eq.f32.partialorder %v1497, %v1542
    %vm1578 = vcmp.eq.f32.partialorder %v1498, %v1545
    %vm1579 = vcmp.eq.f32.partialorder %v1499, %v1545
    %vm1580 = vcmp.eq.f32.partialorder %v1500, %v1548
    %vm1581 = vcmp.eq.f32.partialorder %v1501, %v1548
    %vm1582 = vcmp.eq.f32.partialorder %v1502, %v1551
    %vm1583 = vcmp.eq.f32.partialorder %v1503, %v1551
    %v1584 = vsel %vm1552, %v173, 256
    %v1585 = vsel %vm1553, %v174, 256
    %v1586 = vsel %vm1554, %v173, 256
    %v1587 = vsel %vm1555, %v174, 256
    %v1588 = vsel %vm1556, %v173, 256
    %v1589 = vsel %vm1557, %v174, 256
    %v1590 = vsel %vm1558, %v173, 256
    %v1591 = vsel %vm1559, %v174, 256
    %v1592 = vsel %vm1560, %v173, 256
    %v1593 = vsel %vm1561, %v174, 256
    %v1594 = vsel %vm1562, %v173, 256
    %v1595 = vsel %vm1563, %v174, 256
    %v1596 = vsel %vm1564, %v173, 256
    %v1597 = vsel %vm1565, %v174, 256
    %v1598 = vsel %vm1566, %v173, 256
    %v1599 = vsel %vm1567, %v174, 256
    %v1600 = vsel %vm1568, %v173, 256
    %v1601 = vsel %vm1569, %v174, 256
    %v1602 = vsel %vm1570, %v173, 256
    %v1603 = vsel %vm1571, %v174, 256
    %v1604 = vsel %vm1572, %v173, 256
    %v1605 = vsel %vm1573, %v174, 256
    %v1606 = vsel %vm1574, %v173, 256
    %v1607 = vsel %vm1575, %v174, 256
    %v1608 = vsel %vm1576, %v173, 256
    %v1609 = vsel %vm1577, %v174, 256
    %v1610 = vsel %vm1578, %v173, 256
    %v1611 = vsel %vm1579, %v174, 256
    %v1612 = vsel %vm1580, %v173, 256
    %v1613 = vsel %vm1581, %v174, 256
    %v1614 = vsel %vm1582, %v173, 256
    %v1615 = vsel %vm1583, %v174, 256
    %vm1616 = vcmp.lt.s32.totalorder %v1584, %v1585
    %v1617 = vsel %vm1616, %v1584, %v1585
    %v1618 = vand.u32 %v1617, 65535
    %v1619 = vshra.s32 %v1617, 16
    %v1620 = vcvt.s32.f32 %v1618
    %v1621 = vcvt.s32.f32 %v1619
    %1622 = vmin.xlane.f32.xlu0 %v1621
    %v1623 = vpop.xlane.xlu0 %1622
    %vm1624 = vcmp.eq.f32.partialorder %v1621, %v1623
    %v1625 = vsel %vm1624, %v1620, inf
    %1626 = vmin.xlane.f32.xlu0 %v1625
    %v1627 = vpop.xlane.xlu0 %1626
    %v1628 = vcvt.f32.s32 %v1627
    %v1629 = vcvt.f32.s32 %v1623
    %v1630 = vshll.u32 %v1629, 16
    %v1631 = vadd.s32 %v1630, %v1628
    %vm1632 = vcmp.lt.s32.totalorder %v1586, %v1587
    %v1633 = vsel %vm1632, %v1586, %v1587
    %v1634 = vand.u32 %v1633, 65535
    %v1635 = vshra.s32 %v1633, 16
    %v1636 = vcvt.s32.f32 %v1634
    %v1637 = vcvt.s32.f32 %v1635
    %1638 = vmin.xlane.f32.xlu0 %v1637
    %v1639 = vpop.xlane.xlu0 %1638
    %vm1640 = vcmp.eq.f32.partialorder %v1637, %v1639
    %v1641 = vsel %vm1640, %v1636, inf
    %1642 = vmin.xlane.f32.xlu0 %v1641
    %v1643 = vpop.xlane.xlu0 %1642
    %v1644 = vcvt.f32.s32 %v1643
    %v1645 = vcvt.f32.s32 %v1639
    %v1646 = vshll.u32 %v1645, 16
    %v1647 = vadd.s32 %v1646, %v1644
    %vm1648 = vcmp.lt.s32.totalorder %v1588, %v1589
    %v1649 = vsel %vm1648, %v1588, %v1589
    %v1650 = vand.u32 %v1649, 65535
    %v1651 = vshra.s32 %v1649, 16
    %v1652 = vcvt.s32.f32 %v1650
    %v1653 = vcvt.s32.f32 %v1651
    %1654 = vmin.xlane.f32.xlu0 %v1653
    %v1655 = vpop.xlane.xlu0 %1654
    %vm1656 = vcmp.eq.f32.partialorder %v1653, %v1655
    %v1657 = vsel %vm1656, %v1652, inf
    %1658 = vmin.xlane.f32.xlu0 %v1657
    %v1659 = vpop.xlane.xlu0 %1658
    %v1660 = vcvt.f32.s32 %v1659
    %v1661 = vcvt.f32.s32 %v1655
    %v1662 = vshll.u32 %v1661, 16
    %v1663 = vadd.s32 %v1662, %v1660
    %vm1664 = vcmp.lt.s32.totalorder %v1590, %v1591
    %v1665 = vsel %vm1664, %v1590, %v1591
    %v1666 = vand.u32 %v1665, 65535
    %v1667 = vshra.s32 %v1665, 16
    %v1668 = vcvt.s32.f32 %v1666
    %v1669 = vcvt.s32.f32 %v1667
    %1670 = vmin.xlane.f32.xlu0 %v1669
    %v1671 = vpop.xlane.xlu0 %1670
    %vm1672 = vcmp.eq.f32.partialorder %v1669, %v1671
    %v1673 = vsel %vm1672, %v1668, inf
    %1674 = vmin.xlane.f32.xlu0 %v1673
    %v1675 = vpop.xlane.xlu0 %1674
    %v1676 = vcvt.f32.s32 %v1675
    %v1677 = vcvt.f32.s32 %v1671
    %v1678 = vshll.u32 %v1677, 16
    %v1679 = vadd.s32 %v1678, %v1676
    %vm1680 = vcmp.lt.s32.totalorder %v1592, %v1593
    %v1681 = vsel %vm1680, %v1592, %v1593
    %v1682 = vand.u32 %v1681, 65535
    %v1683 = vshra.s32 %v1681, 16
    %v1684 = vcvt.s32.f32 %v1682
    %v1685 = vcvt.s32.f32 %v1683
    %1686 = vmin.xlane.f32.xlu0 %v1685
    %v1687 = vpop.xlane.xlu0 %1686
    %vm1688 = vcmp.eq.f32.partialorder %v1685, %v1687
    %v1689 = vsel %vm1688, %v1684, inf
    %1690 = vmin.xlane.f32.xlu0 %v1689
    %v1691 = vpop.xlane.xlu0 %1690
    %v1692 = vcvt.f32.s32 %v1691
    %v1693 = vcvt.f32.s32 %v1687
    %v1694 = vshll.u32 %v1693, 16
    %v1695 = vadd.s32 %v1694, %v1692
    %vm1696 = vcmp.lt.s32.totalorder %v1594, %v1595
    %v1697 = vsel %vm1696, %v1594, %v1595
    %v1698 = vand.u32 %v1697, 65535
    %v1699 = vshra.s32 %v1697, 16
    %v1700 = vcvt.s32.f32 %v1698
    %v1701 = vcvt.s32.f32 %v1699
    %1702 = vmin.xlane.f32.xlu0 %v1701
    %v1703 = vpop.xlane.xlu0 %1702
    %vm1704 = vcmp.eq.f32.partialorder %v1701, %v1703
    %v1705 = vsel %vm1704, %v1700, inf
    %1706 = vmin.xlane.f32.xlu0 %v1705
    %v1707 = vpop.xlane.xlu0 %1706
    %v1708 = vcvt.f32.s32 %v1707
    %v1709 = vcvt.f32.s32 %v1703
    %v1710 = vshll.u32 %v1709, 16
    %v1711 = vadd.s32 %v1710, %v1708
    %vm1712 = vcmp.lt.s32.totalorder %v1596, %v1597
    %v1713 = vsel %vm1712, %v1596, %v1597
    %v1714 = vand.u32 %v1713, 65535
    %v1715 = vshra.s32 %v1713, 16
    %v1716 = vcvt.s32.f32 %v1714
    %v1717 = vcvt.s32.f32 %v1715
    %1718 = vmin.xlane.f32.xlu0 %v1717
    %v1719 = vpop.xlane.xlu0 %1718
    %vm1720 = vcmp.eq.f32.partialorder %v1717, %v1719
    %v1721 = vsel %vm1720, %v1716, inf
    %1722 = vmin.xlane.f32.xlu0 %v1721
    %v1723 = vpop.xlane.xlu0 %1722
    %v1724 = vcvt.f32.s32 %v1723
    %v1725 = vcvt.f32.s32 %v1719
    %v1726 = vshll.u32 %v1725, 16
    %v1727 = vadd.s32 %v1726, %v1724
    %vm1728 = vcmp.lt.s32.totalorder %v1598, %v1599
    %v1729 = vsel %vm1728, %v1598, %v1599
    %v1730 = vand.u32 %v1729, 65535
    %v1731 = vshra.s32 %v1729, 16
    %v1732 = vcvt.s32.f32 %v1730
    %v1733 = vcvt.s32.f32 %v1731
    %1734 = vmin.xlane.f32.xlu0 %v1733
    %v1735 = vpop.xlane.xlu0 %1734
    %vm1736 = vcmp.eq.f32.partialorder %v1733, %v1735
    %v1737 = vsel %vm1736, %v1732, inf
    %1738 = vmin.xlane.f32.xlu0 %v1737
    %v1739 = vpop.xlane.xlu0 %1738
    %v1740 = vcvt.f32.s32 %v1739
    %v1741 = vcvt.f32.s32 %v1735
    %v1742 = vshll.u32 %v1741, 16
    %v1743 = vadd.s32 %v1742, %v1740
    %vm1744 = vcmp.lt.s32.totalorder %v1600, %v1601
    %v1745 = vsel %vm1744, %v1600, %v1601
    %v1746 = vand.u32 %v1745, 65535
    %v1747 = vshra.s32 %v1745, 16
    %v1748 = vcvt.s32.f32 %v1746
    %v1749 = vcvt.s32.f32 %v1747
    %1750 = vmin.xlane.f32.xlu0 %v1749
    %v1751 = vpop.xlane.xlu0 %1750
    %vm1752 = vcmp.eq.f32.partialorder %v1749, %v1751
    %v1753 = vsel %vm1752, %v1748, inf
    %1754 = vmin.xlane.f32.xlu0 %v1753
    %v1755 = vpop.xlane.xlu0 %1754
    %v1756 = vcvt.f32.s32 %v1755
    %v1757 = vcvt.f32.s32 %v1751
    %v1758 = vshll.u32 %v1757, 16
    %v1759 = vadd.s32 %v1758, %v1756
    %vm1760 = vcmp.lt.s32.totalorder %v1602, %v1603
    %v1761 = vsel %vm1760, %v1602, %v1603
    %v1762 = vand.u32 %v1761, 65535
    %v1763 = vshra.s32 %v1761, 16
    %v1764 = vcvt.s32.f32 %v1762
    %v1765 = vcvt.s32.f32 %v1763
    %1766 = vmin.xlane.f32.xlu0 %v1765
    %v1767 = vpop.xlane.xlu0 %1766
    %vm1768 = vcmp.eq.f32.partialorder %v1765, %v1767
    %v1769 = vsel %vm1768, %v1764, inf
    %1770 = vmin.xlane.f32.xlu0 %v1769
    %v1771 = vpop.xlane.xlu0 %1770
    %v1772 = vcvt.f32.s32 %v1771
    %v1773 = vcvt.f32.s32 %v1767
    %v1774 = vshll.u32 %v1773, 16
    %v1775 = vadd.s32 %v1774, %v1772
    %vm1776 = vcmp.lt.s32.totalorder %v1604, %v1605
    %v1777 = vsel %vm1776, %v1604, %v1605
    %v1778 = vand.u32 %v1777, 65535
    %v1779 = vshra.s32 %v1777, 16
    %v1780 = vcvt.s32.f32 %v1778
    %v1781 = vcvt.s32.f32 %v1779
    %1782 = vmin.xlane.f32.xlu0 %v1781
    %v1783 = vpop.xlane.xlu0 %1782
    %vm1784 = vcmp.eq.f32.partialorder %v1781, %v1783
    %v1785 = vsel %vm1784, %v1780, inf
    %1786 = vmin.xlane.f32.xlu0 %v1785
    %v1787 = vpop.xlane.xlu0 %1786
    %v1788 = vcvt.f32.s32 %v1787
    %v1789 = vcvt.f32.s32 %v1783
    %v1790 = vshll.u32 %v1789, 16
    %v1791 = vadd.s32 %v1790, %v1788
    %vm1792 = vcmp.lt.s32.totalorder %v1606, %v1607
    %v1793 = vsel %vm1792, %v1606, %v1607
    %v1794 = vand.u32 %v1793, 65535
    %v1795 = vshra.s32 %v1793, 16
    %v1796 = vcvt.s32.f32 %v1794
    %v1797 = vcvt.s32.f32 %v1795
    %1798 = vmin.xlane.f32.xlu0 %v1797
    %v1799 = vpop.xlane.xlu0 %1798
    %vm1800 = vcmp.eq.f32.partialorder %v1797, %v1799
    %v1801 = vsel %vm1800, %v1796, inf
    %1802 = vmin.xlane.f32.xlu0 %v1801
    %v1803 = vpop.xlane.xlu0 %1802
    %v1804 = vcvt.f32.s32 %v1803
    %v1805 = vcvt.f32.s32 %v1799
    %v1806 = vshll.u32 %v1805, 16
    %v1807 = vadd.s32 %v1806, %v1804
    %vm1808 = vcmp.lt.s32.totalorder %v1608, %v1609
    %v1809 = vsel %vm1808, %v1608, %v1609
    %v1810 = vand.u32 %v1809, 65535
    %v1811 = vshra.s32 %v1809, 16
    %v1812 = vcvt.s32.f32 %v1810
    %v1813 = vcvt.s32.f32 %v1811
    %1814 = vmin.xlane.f32.xlu0 %v1813
    %v1815 = vpop.xlane.xlu0 %1814
    %vm1816 = vcmp.eq.f32.partialorder %v1813, %v1815
    %v1817 = vsel %vm1816, %v1812, inf
    %1818 = vmin.xlane.f32.xlu0 %v1817
    %v1819 = vpop.xlane.xlu0 %1818
    %v1820 = vcvt.f32.s32 %v1819
    %v1821 = vcvt.f32.s32 %v1815
    %v1822 = vshll.u32 %v1821, 16
    %v1823 = vadd.s32 %v1822, %v1820
    %vm1824 = vcmp.lt.s32.totalorder %v1610, %v1611
    %v1825 = vsel %vm1824, %v1610, %v1611
    %v1826 = vand.u32 %v1825, 65535
    %v1827 = vshra.s32 %v1825, 16
    %v1828 = vcvt.s32.f32 %v1826
    %v1829 = vcvt.s32.f32 %v1827
    %1830 = vmin.xlane.f32.xlu0 %v1829
    %v1831 = vpop.xlane.xlu0 %1830
    %vm1832 = vcmp.eq.f32.partialorder %v1829, %v1831
    %v1833 = vsel %vm1832, %v1828, inf
    %1834 = vmin.xlane.f32.xlu0 %v1833
    %v1835 = vpop.xlane.xlu0 %1834
    %v1836 = vcvt.f32.s32 %v1835
    %v1837 = vcvt.f32.s32 %v1831
    %v1838 = vshll.u32 %v1837, 16
    %v1839 = vadd.s32 %v1838, %v1836
    %vm1840 = vcmp.lt.s32.totalorder %v1612, %v1613
    %v1841 = vsel %vm1840, %v1612, %v1613
    %v1842 = vand.u32 %v1841, 65535
    %v1843 = vshra.s32 %v1841, 16
    %v1844 = vcvt.s32.f32 %v1842
    %v1845 = vcvt.s32.f32 %v1843
    %1846 = vmin.xlane.f32.xlu0 %v1845
    %v1847 = vpop.xlane.xlu0 %1846
    %vm1848 = vcmp.eq.f32.partialorder %v1845, %v1847
    %v1849 = vsel %vm1848, %v1844, inf
    %1850 = vmin.xlane.f32.xlu0 %v1849
    %v1851 = vpop.xlane.xlu0 %1850
    %v1852 = vcvt.f32.s32 %v1851
    %v1853 = vcvt.f32.s32 %v1847
    %v1854 = vshll.u32 %v1853, 16
    %v1855 = vadd.s32 %v1854, %v1852
    %vm1856 = vcmp.lt.s32.totalorder %v1614, %v1615
    %v1857 = vsel %vm1856, %v1614, %v1615
    %v1858 = vand.u32 %v1857, 65535
    %v1859 = vshra.s32 %v1857, 16
    %v1860 = vcvt.s32.f32 %v1858
    %v1861 = vcvt.s32.f32 %v1859
    %1862 = vmin.xlane.f32.xlu0 %v1861
    %v1863 = vpop.xlane.xlu0 %1862
    %vm1864 = vcmp.eq.f32.partialorder %v1861, %v1863
    %v1865 = vsel %vm1864, %v1860, inf
    %1866 = vmin.xlane.f32.xlu0 %v1865
    %v1867 = vpop.xlane.xlu0 %1866
    %v1868 = vcvt.f32.s32 %v1867
    %v1869 = vcvt.f32.s32 %v1863
    %v1870 = vshll.u32 %v1869, 16
    %v1871 = vadd.s32 %v1870, %v1868
    %v1888 = vlaneseq
    %v1889 = vshrl.u32 %v1888, 7
    %v1890 = vsub.s32 %v173, %v1889
    %v1891 = vrot.slane %v1506, %v1890
    %v1892 = vadd.s32 %v173, 4294967288
    %v1893 = vlaneseq
    %v1894 = vshrl.u32 %v1893, 7
    %v1895 = vsub.s32 %v1892, %v1894
    %v1896 = vrot.slane %v1509, %v1895
    %vm1897 = vcmask 130112
    %v1898 = vsel %vm1897, %v1896, %v1891
    %v1899 = vadd.s32 %v173, 4294967280
    %v1900 = vlaneseq
    %v1901 = vshrl.u32 %v1900, 7
    %v1902 = vsub.s32 %v1899, %v1901
    %v1903 = vrot.slane %v1512, %v1902
    %vm1904 = vcmask 195712
    %v1905 = vsel %vm1904, %v1903, %v1898
    %v1906 = vadd.s32 %v173, 4294967272
    %v1907 = vlaneseq
    %v1908 = vshrl.u32 %v1907, 7
    %v1909 = vsub.s32 %v1906, %v1908
    %v1910 = vrot.slane %v1515, %v1909
    %vm1911 = vcmask 261312
    %v1912 = vsel %vm1911, %v1910, %v1905
    %v1913 = vadd.s32 %v173, 4294967264
    %v1914 = vlaneseq
    %v1915 = vshrl.u32 %v1914, 7
    %v1916 = vsub.s32 %v1913, %v1915
    %v1917 = vrot.slane %v1518, %v1916
    %vm1918 = vcmask 326912
    %v1919 = vsel %vm1918, %v1917, %v1912
    %v1920 = vadd.s32 %v173, 4294967256
    %v1921 = vlaneseq
    %v1922 = vshrl.u32 %v1921, 7
    %v1923 = vsub.s32 %v1920, %v1922
    %v1924 = vrot.slane %v1521, %v1923
    %vm1925 = vcmask 392512
    %v1926 = vsel %vm1925, %v1924, %v1919
    %v1927 = vadd.s32 %v173, 4294967248
    %v1928 = vlaneseq
    %v1929 = vshrl.u32 %v1928, 7
    %v1930 = vsub.s32 %v1927, %v1929
    %v1931 = vrot.slane %v1524, %v1930
    %vm1932 = vcmask 458112
    %v1933 = vsel %vm1932, %v1931, %v1926
    %v1934 = vadd.s32 %v173, 4294967240
    %v1935 = vlaneseq
    %v1936 = vshrl.u32 %v1935, 7
    %v1937 = vsub.s32 %v1934, %v1936
    %v1938 = vrot.slane %v1527, %v1937
    %vm1939 = vcmask 523712
    %v1940 = vsel %vm1939, %v1938, %v1933
    %v1941 = vadd.s32 %v173, 4294967232
    %v1942 = vlaneseq
    %v1943 = vshrl.u32 %v1942, 7
    %v1944 = vsub.s32 %v1941, %v1943
    %v1945 = vrot.slane %v1530, %v1944
    %vm1946 = vcmask 589312
    %v1947 = vsel %vm1946, %v1945, %v1940
    %v1948 = vadd.s32 %v173, 4294967224
    %v1949 = vlaneseq
    %v1950 = vshrl.u32 %v1949, 7
    %v1951 = vsub.s32 %v1948, %v1950
    %v1952 = vrot.slane %v1533, %v1951
    %vm1953 = vcmask 654912
    %v1954 = vsel %vm1953, %v1952, %v1947
    %v1955 = vadd.s32 %v173, 4294967216
    %v1956 = vlaneseq
    %v1957 = vshrl.u32 %v1956, 7
    %v1958 = vsub.s32 %v1955, %v1957
    %v1959 = vrot.slane %v1536, %v1958
    %vm1960 = vcmask 720512
    %v1961 = vsel %vm1960, %v1959, %v1954
    %v1962 = vadd.s32 %v173, 4294967208
    %v1963 = vlaneseq
    %v1964 = vshrl.u32 %v1963, 7
    %v1965 = vsub.s32 %v1962, %v1964
    %v1966 = vrot.slane %v1539, %v1965
    %vm1967 = vcmask 786112
    %v1968 = vsel %vm1967, %v1966, %v1961
    %v1969 = vadd.s32 %v173, 4294967200
    %v1970 = vlaneseq
    %v1971 = vshrl.u32 %v1970, 7
    %v1972 = vsub.s32 %v1969, %v1971
    %v1973 = vrot.slane %v1542, %v1972
    %vm1974 = vcmask 851712
    %v1975 = vsel %vm1974, %v1973, %v1968
    %v1976 = vadd.s32 %v173, 4294967192
    %v1977 = vlaneseq
    %v1978 = vshrl.u32 %v1977, 7
    %v1979 = vsub.s32 %v1976, %v1978
    %v1980 = vrot.slane %v1545, %v1979
    %vm1981 = vcmask 917312
    %v1982 = vsel %vm1981, %v1980, %v1975
    %v1983 = vadd.s32 %v173, 4294967184
    %v1984 = vlaneseq
    %v1985 = vshrl.u32 %v1984, 7
    %v1986 = vsub.s32 %v1983, %v1985
    %v1987 = vrot.slane %v1548, %v1986
    %vm1988 = vcmask 982912
    %v1989 = vsel %vm1988, %v1987, %v1982
    %v1990 = vadd.s32 %v173, 4294967176
    %v1991 = vlaneseq
    %v1992 = vshrl.u32 %v1991, 7
    %v1993 = vsub.s32 %v1990, %v1992
    %v1994 = vrot.slane %v1551, %v1993
    %vm1995 = vcmask 1048512
    %v1996 = vsel %vm1995, %v1994, %v1989
    %1998 = vst [vmem:[#allocation11] sm:$0x1] %v1996
    %v1999 = vlaneseq
    %v2000 = vshrl.u32 %v1999, 7
    %v2001 = vsub.s32 %v173, %v2000
    %v2002 = vrot.slane %v1631, %v2001
    %v2003 = vlaneseq
    %v2004 = vshrl.u32 %v2003, 7
    %v2005 = vsub.s32 %v1892, %v2004
    %v2006 = vrot.slane %v1647, %v2005
    %v2007 = vsel %vm1897, %v2006, %v2002
    %v2008 = vlaneseq
    %v2009 = vshrl.u32 %v2008, 7
    %v2010 = vsub.s32 %v1899, %v2009
    %v2011 = vrot.slane %v1663, %v2010
    %v2012 = vsel %vm1904, %v2011, %v2007
    %v2013 = vlaneseq
    %v2014 = vshrl.u32 %v2013, 7
    %v2015 = vsub.s32 %v1906, %v2014
    %v2016 = vrot.slane %v1679, %v2015
    %v2017 = vsel %vm1911, %v2016, %v2012
    %v2018 = vlaneseq
    %v2019 = vshrl.u32 %v2018, 7
    %v2020 = vsub.s32 %v1913, %v2019
    %v2021 = vrot.slane %v1695, %v2020
    %v2022 = vsel %vm1918, %v2021, %v2017
    %v2023 = vlaneseq
    %v2024 = vshrl.u32 %v2023, 7
    %v2025 = vsub.s32 %v1920, %v2024
    %v2026 = vrot.slane %v1711, %v2025
    %v2027 = vsel %vm1925, %v2026, %v2022
    %v2028 = vlaneseq
    %v2029 = vshrl.u32 %v2028, 7
    %v2030 = vsub.s32 %v1927, %v2029
    %v2031 = vrot.slane %v1727, %v2030
    %v2032 = vsel %vm1932, %v2031, %v2027
    %v2033 = vlaneseq
    %v2034 = vshrl.u32 %v2033, 7
    %v2035 = vsub.s32 %v1934, %v2034
    %v2036 = vrot.slane %v1743, %v2035
    %v2037 = vsel %vm1939, %v2036, %v2032
    %v2038 = vlaneseq
    %v2039 = vshrl.u32 %v2038, 7
    %v2040 = vsub.s32 %v1941, %v2039
    %v2041 = vrot.slane %v1759, %v2040
    %v2042 = vsel %vm1946, %v2041, %v2037
    %v2043 = vlaneseq
    %v2044 = vshrl.u32 %v2043, 7
    %v2045 = vsub.s32 %v1948, %v2044
    %v2046 = vrot.slane %v1775, %v2045
    %v2047 = vsel %vm1953, %v2046, %v2042
    %v2048 = vlaneseq
    %v2049 = vshrl.u32 %v2048, 7
    %v2050 = vsub.s32 %v1955, %v2049
    %v2051 = vrot.slane %v1791, %v2050
    %v2052 = vsel %vm1960, %v2051, %v2047
    %v2053 = vlaneseq
    %v2054 = vshrl.u32 %v2053, 7
    %v2055 = vsub.s32 %v1962, %v2054
    %v2056 = vrot.slane %v1807, %v2055
    %v2057 = vsel %vm1967, %v2056, %v2052
    %v2058 = vlaneseq
    %v2059 = vshrl.u32 %v2058, 7
    %v2060 = vsub.s32 %v1969, %v2059
    %v2061 = vrot.slane %v1823, %v2060
    %v2062 = vsel %vm1974, %v2061, %v2057
    %v2063 = vlaneseq
    %v2064 = vshrl.u32 %v2063, 7
    %v2065 = vsub.s32 %v1976, %v2064
    %v2066 = vrot.slane %v1839, %v2065
    %v2067 = vsel %vm1981, %v2066, %v2062
    %v2068 = vlaneseq
    %v2069 = vshrl.u32 %v2068, 7
    %v2070 = vsub.s32 %v1983, %v2069
    %v2071 = vrot.slane %v1855, %v2070
    %v2072 = vsel %vm1988, %v2071, %v2067
    %v2073 = vlaneseq
    %v2074 = vshrl.u32 %v2073, 7
    %v2075 = vsub.s32 %v1990, %v2074
    %v2076 = vrot.slane %v1871, %v2075
    %v2077 = vsel %vm1995, %v2076, %v2072
    %2078 = vst [vmem:[#allocation12] sm:$0x1] %v2077
    %s2079 = scalar_lea.vmem [#allocation2], 8
    %v2080 = vld [vmem:[%s2079] sm:$0xff]
    %v2082 = vlaneseq
    %v2083 = vshrl.u32 %v2082, 7
    %v2084 = vsub.s32 0, %v2083
    %v2085 = vrot.slane %v2080, %v2084
    %v2086 = vlaneseq
    %v2087 = vshrl.u32 %v2086, 7
    %v2088 = vsub.s32 4, %v2087
    %v2089 = vrot.slane %v2080, %v2088
    %v2092 = vlaneseq
    %v2093 = vshrl.u32 %v2092, 7
    %v2094 = vsub.s32 0, %v2093
    %v2095 = vrot.slane %v2085, %v2094
    %v2096 = vlaneseq
    %v2097 = vshrl.u32 %v2096, 7
    %v2098 = vsub.s32 0, %v2097
    %v2099 = vrot.slane %v2089, %v2098
    %v2100 = vmul.f32 %v179, %v2095
    %v2101 = vmul.f32 %v179, %v2099
    %v2102 = vmul.f32 %v184, %v2095
    %v2103 = vmul.f32 %v184, %v2099
    %v2104 = vmul.f32 %v189, %v2095
    %v2105 = vmul.f32 %v189, %v2099
    %v2106 = vmul.f32 %v194, %v2095
    %v2107 = vmul.f32 %v194, %v2099
    %v2108 = vadd.f32 %v226, %v2100
    %v2109 = vadd.f32 %v226, %v2101
    %v2110 = vadd.f32 %v231, %v2102
    %v2111 = vadd.f32 %v231, %v2103
    %v2112 = vadd.f32 %v236, %v2104
    %v2113 = vadd.f32 %v236, %v2105
    %v2114 = vadd.f32 %v241, %v2106
    %v2115 = vadd.f32 %v241, %v2107
    %v2116 = vlaneseq
    %v2117 = vshrl.u32 %v2116, 7
    %v2118 = vsub.s32 1, %v2117
    %v2119 = vrot.slane %v2080, %v2118
    %v2120 = vlaneseq
    %v2121 = vshrl.u32 %v2120, 7
    %v2122 = vsub.s32 5, %v2121
    %v2123 = vrot.slane %v2080, %v2122
    %v2126 = vlaneseq
    %v2127 = vshrl.u32 %v2126, 7
    %v2128 = vsub.s32 1, %v2127
    %v2129 = vrot.slane %v2119, %v2128
    %v2130 = vlaneseq
    %v2131 = vshrl.u32 %v2130, 7
    %v2132 = vsub.s32 1, %v2131
    %v2133 = vrot.slane %v2123, %v2132
    %v2134 = vmul.f32 %v253, %v2129
    %v2135 = vmul.f32 %v253, %v2133
    %v2136 = vmul.f32 %v257, %v2129
    %v2137 = vmul.f32 %v257, %v2133
    %v2138 = vmul.f32 %v261, %v2129
    %v2139 = vmul.f32 %v261, %v2133
    %v2140 = vmul.f32 %v265, %v2129
    %v2141 = vmul.f32 %v265, %v2133
    %v2142 = vadd.f32 %v2108, %v2134
    %v2143 = vadd.f32 %v2109, %v2135
    %v2144 = vadd.f32 %v2110, %v2136
    %v2145 = vadd.f32 %v2111, %v2137
    %v2146 = vadd.f32 %v2112, %v2138
    %v2147 = vadd.f32 %v2113, %v2139
    %v2148 = vadd.f32 %v2114, %v2140
    %v2149 = vadd.f32 %v2115, %v2141
    %v2150 = vlaneseq
    %v2151 = vshrl.u32 %v2150, 7
    %v2152 = vsub.s32 2, %v2151
    %v2153 = vrot.slane %v2080, %v2152
    %v2154 = vlaneseq
    %v2155 = vshrl.u32 %v2154, 7
    %v2156 = vsub.s32 6, %v2155
    %v2157 = vrot.slane %v2080, %v2156
    %v2160 = vlaneseq
    %v2161 = vshrl.u32 %v2160, 7
    %v2162 = vsub.s32 2, %v2161
    %v2163 = vrot.slane %v2153, %v2162
    %v2164 = vlaneseq
    %v2165 = vshrl.u32 %v2164, 7
    %v2166 = vsub.s32 2, %v2165
    %v2167 = vrot.slane %v2157, %v2166
    %v2168 = vmul.f32 %v303, %v2163
    %v2169 = vmul.f32 %v303, %v2167
    %v2170 = vmul.f32 %v307, %v2163
    %v2171 = vmul.f32 %v307, %v2167
    %v2172 = vmul.f32 %v311, %v2163
    %v2173 = vmul.f32 %v311, %v2167
    %v2174 = vmul.f32 %v315, %v2163
    %v2175 = vmul.f32 %v315, %v2167
    %v2176 = vadd.f32 %v2142, %v2168
    %v2177 = vadd.f32 %v2143, %v2169
    %v2178 = vadd.f32 %v2144, %v2170
    %v2179 = vadd.f32 %v2145, %v2171
    %v2180 = vadd.f32 %v2146, %v2172
    %v2181 = vadd.f32 %v2147, %v2173
    %v2182 = vadd.f32 %v2148, %v2174
    %v2183 = vadd.f32 %v2149, %v2175
    %v2184 = vlaneseq
    %v2185 = vshrl.u32 %v2184, 7
    %v2186 = vsub.s32 3, %v2185
    %v2187 = vrot.slane %v2080, %v2186
    %v2188 = vlaneseq
    %v2189 = vshrl.u32 %v2188, 7
    %v2190 = vsub.s32 7, %v2189
    %v2191 = vrot.slane %v2080, %v2190
    %v2194 = vlaneseq
    %v2195 = vshrl.u32 %v2194, 7
    %v2196 = vsub.s32 3, %v2195
    %v2197 = vrot.slane %v2187, %v2196
    %v2198 = vlaneseq
    %v2199 = vshrl.u32 %v2198, 7
    %v2200 = vsub.s32 3, %v2199
    %v2201 = vrot.slane %v2191, %v2200
    %v2202 = vmul.f32 %v353, %v2197
    %v2203 = vmul.f32 %v353, %v2201
    %v2204 = vmul.f32 %v357, %v2197
    %v2205 = vmul.f32 %v357, %v2201
    %v2206 = vmul.f32 %v361, %v2197
    %v2207 = vmul.f32 %v361, %v2201
    %v2208 = vmul.f32 %v365, %v2197
    %v2209 = vmul.f32 %v365, %v2201
    %v2210 = vadd.f32 %v2176, %v2202
    %v2211 = vadd.f32 %v2177, %v2203
    %v2212 = vadd.f32 %v2178, %v2204
    %v2213 = vadd.f32 %v2179, %v2205
    %v2214 = vadd.f32 %v2180, %v2206
    %v2215 = vadd.f32 %v2181, %v2207
    %v2216 = vadd.f32 %v2182, %v2208
    %v2217 = vadd.f32 %v2183, %v2209
    %v2218 = vadd.f32 %v2210, %v2211
    %v2219 = vadd.f32 %v2218, %v2212
    %v2220 = vadd.f32 %v2219, %v2213
    %v2221 = vadd.f32 %v2220, %v2214
    %v2222 = vadd.f32 %v2221, %v2215
    %v2223 = vadd.f32 %v2222, %v2216
    %v2224 = vadd.f32 %v2223, %v2217
    %2225 = vadd.xlane.f32.xlu0 %v2224
    %v2226 = vpop.xlane.xlu0 %2225
    %v2227 = vrot.slane %v2226, 4
    %v2228 = vadd.f32 %v2226, %v2227
    %v2229 = vrot.slane %v2228, 2
    %v2230 = vadd.f32 %v2228, %v2229
    %v2231 = vrot.slane %v2230, 1
    %v2232 = vadd.f32 %v2230, %v2231
    %s2233 = vtos %v2232
    %v2234 = vstv %s2233
    %v2235 = vmul.f32 %v2210, %v2210
    %v2236 = vmul.f32 %v2211, %v2211
    %v2237 = vmul.f32 %v2212, %v2212
    %v2238 = vmul.f32 %v2213, %v2213
    %v2239 = vmul.f32 %v2214, %v2214
    %v2240 = vmul.f32 %v2215, %v2215
    %v2241 = vmul.f32 %v2216, %v2216
    %v2242 = vmul.f32 %v2217, %v2217
    %v2243 = vadd.f32 %v2235, %v2236
    %v2244 = vadd.f32 %v2243, %v2237
    %v2245 = vadd.f32 %v2244, %v2238
    %v2246 = vadd.f32 %v2245, %v2239
    %v2247 = vadd.f32 %v2246, %v2240
    %v2248 = vadd.f32 %v2247, %v2241
    %v2249 = vadd.f32 %v2248, %v2242
    %2250 = vadd.xlane.f32.xlu0 %v2249
    %v2251 = vpop.xlane.xlu0 %2250
    %v2252 = vrot.slane %v2251, 4
    %v2253 = vadd.f32 %v2251, %v2252
    %v2254 = vrot.slane %v2253, 2
    %v2255 = vadd.f32 %v2253, %v2254
    %v2256 = vrot.slane %v2255, 1
    %v2257 = vadd.f32 %v2255, %v2256
    %s2258 = vtos %v2257
    %v2259 = vstv %s2258
    %v2260 = vmul.f32 %v2234, 0.00012207031
    %v2261 = vmul.f32 %v2259, 0.00012207031
    %v2262 = vmul.f32 %v2260, %v2260
    %v2263 = vsub.f32 %v2261, %v2262
    %v2264 = vmax.f32 %v2263, 0.0
    %v2265 = vadd.f32 %v2264, 1e-05
    %v2266 = vrsqrt.pop %v2265
    %v2267 = vsub.f32 %v2210, %v2260
    %v2268 = vsub.f32 %v2211, %v2260
    %v2269 = vsub.f32 %v2212, %v2260
    %v2270 = vsub.f32 %v2213, %v2260
    %v2271 = vsub.f32 %v2214, %v2260
    %v2272 = vsub.f32 %v2215, %v2260
    %v2273 = vsub.f32 %v2216, %v2260
    %v2274 = vsub.f32 %v2217, %v2260
    %v2275 = vmul.f32 %v2267, %v2266
    %v2276 = vmul.f32 %v2268, %v2266
    %v2277 = vmul.f32 %v2269, %v2266
    %v2278 = vmul.f32 %v2270, %v2266
    %v2279 = vmul.f32 %v2271, %v2266
    %v2280 = vmul.f32 %v2272, %v2266
    %v2281 = vmul.f32 %v2273, %v2266
    %v2282 = vmul.f32 %v2274, %v2266
    %v2283 = vld [vmem:[#allocation5] sm:$0xff]
    %v2284 = vld [vmem:[#allocation5 + $0x8] sm:$0xff]
    %v2285 = vld [vmem:[#allocation5 + $0x10] sm:$0xff]
    %v2286 = vld [vmem:[#allocation5 + $0x18] sm:$0xff]
    %v2287 = vld [vmem:[#allocation5 + $0x20] sm:$0xff]
    %v2288 = vld [vmem:[#allocation5 + $0x28] sm:$0xff]
    %v2289 = vld [vmem:[#allocation5 + $0x30] sm:$0xff]
    %v2290 = vld [vmem:[#allocation5 + $0x38] sm:$0xff]
    %v2291 = vmul.f32 %v2275, %v2283
    %v2292 = vmul.f32 %v2276, %v2284
    %v2293 = vmul.f32 %v2277, %v2285
    %v2294 = vmul.f32 %v2278, %v2286
    %v2295 = vmul.f32 %v2279, %v2287
    %v2296 = vmul.f32 %v2280, %v2288
    %v2297 = vmul.f32 %v2281, %v2289
    %v2298 = vmul.f32 %v2282, %v2290
    %v2299 = vld [vmem:[#allocation7] sm:$0xff]
    %v2300 = vld [vmem:[#allocation7 + $0x8] sm:$0xff]
    %v2301 = vld [vmem:[#allocation7 + $0x10] sm:$0xff]
    %v2302 = vld [vmem:[#allocation7 + $0x18] sm:$0xff]
    %v2303 = vld [vmem:[#allocation7 + $0x20] sm:$0xff]
    %v2304 = vld [vmem:[#allocation7 + $0x28] sm:$0xff]
    %v2305 = vld [vmem:[#allocation7 + $0x30] sm:$0xff]
    %v2306 = vld [vmem:[#allocation7 + $0x38] sm:$0xff]
    %v2307 = vadd.f32 %v2291, %v2299
    %v2308 = vadd.f32 %v2292, %v2300
    %v2309 = vadd.f32 %v2293, %v2301
    %v2310 = vadd.f32 %v2294, %v2302
    %v2311 = vadd.f32 %v2295, %v2303
    %v2312 = vadd.f32 %v2296, %v2304
    %v2313 = vadd.f32 %v2297, %v2305
    %v2314 = vadd.f32 %v2298, %v2306
    %v2315 = vmax.f32 %v2307, 0.0
    %v2316 = vmax.f32 %v2308, 0.0
    %v2317 = vmax.f32 %v2309, 0.0
    %v2318 = vmax.f32 %v2310, 0.0
    %v2319 = vmax.f32 %v2311, 0.0
    %v2320 = vmax.f32 %v2312, 0.0
    %v2321 = vmax.f32 %v2313, 0.0
    %v2322 = vmax.f32 %v2314, 0.0
    %2323 = vmatprep.subr.mxu0 %v2316
    %2324 = vmatpush1.msra.mxu0 %v2315
    %2325 = vmatprep.subr.mxu0 %v2318
    %2326 = vmatpush1.msra.mxu0 %v2317
    %2327 = vmatprep.subr.mxu0 %v2320
    %2328 = vmatpush1.msra.mxu0 %v2319
    %2329 = vmatprep.subr.mxu0 %v2322
    %2330 = vmatpush1.msra.mxu0 %v2321
    %2331 = vmatprep.subr.mxu0 0.0
    %2332 = vmatpush1.msra.mxu0 0.0
    %2333 = vmatprep.subr.mxu0 0.0
    %2334 = vmatpush1.msra.mxu0 0.0
    %2335 = vmatprep.subr.mxu0 0.0
    %2336 = vmatpush1.msra.mxu0 0.0
    %2337 = vmatprep.subr.mxu0 0.0
    %2338 = vmatpush1.msra.mxu0 0.0
    %2339 = vmatprep.subr.mxu0 0.0
    %2340 = vmatpush1.msra.mxu0 0.0
    %2341 = vmatprep.subr.mxu0 0.0
    %2342 = vmatpush1.msra.mxu0 0.0
    %2343 = vmatprep.subr.mxu0 0.0
    %2344 = vmatpush1.msra.mxu0 0.0
    %2345 = vmatprep.subr.mxu0 0.0
    %2346 = vmatpush1.msra.mxu0 0.0
    %2347 = vmatprep.subr.mxu0 0.0
    %2348 = vmatpush1.msra.mxu0 0.0
    %2349 = vmatprep.subr.mxu0 0.0
    %2350 = vmatpush1.msra.mxu0 0.0
    %2351 = vmatprep.subr.mxu0 0.0
    %2352 = vmatpush1.msra.mxu0 0.0
    %2353 = vmatprep.subr.mxu0 0.0
    %2354 = vmatpush1.msra.mxu0 0.0
    %2355 = vmatprep.subr.mxu0 0.0
    %2356 = vmatpush1.msra.mxu0 0.0
    %2357 = vmatprep.subr.mxu0 0.0
    %2358 = vmatpush1.msra.mxu0 0.0
    %2359 = vmatprep.subr.mxu0 0.0
    %2360 = vmatpush1.msra.mxu0 0.0
    %2361 = vmatprep.subr.mxu0 0.0
    %2362 = vmatpush1.msra.mxu0 0.0
    %2363 = vmatprep.subr.mxu0 0.0
    %2364 = vmatpush1.msra.mxu0 0.0
    %2365 = vmatprep.subr.mxu0 0.0
    %2366 = vmatpush1.msra.mxu0 0.0
    %2367 = vmatprep.subr.mxu0 0.0
    %2368 = vmatpush1.msra.mxu0 0.0
    %2369 = vmatprep.subr.mxu0 0.0
    %2370 = vmatpush1.msra.mxu0 0.0
    %2371 = vmatprep.subr.mxu0 0.0
    %2372 = vmatpush1.msra.mxu0 0.0
    %2373 = vmatprep.subr.mxu0 0.0
    %2374 = vmatpush1.msra.mxu0 0.0
    %2375 = vmatprep.subr.mxu0 0.0
    %2376 = vmatpush1.msra.mxu0 0.0
    %2377 = vmatprep.subr.mxu0 0.0
    %2378 = vmatpush1.msra.mxu0 0.0
    %2379 = vmatprep.subr.mxu0 0.0
    %2380 = vmatpush1.msra.mxu0 0.0
    %2381 = vmatprep.subr.mxu0 0.0
    %2382 = vmatpush1.msra.mxu0 0.0
    %2383 = vmatprep.subr.mxu0 0.0
    %2384 = vmatpush1.msra.mxu0 0.0
    %2385 = vmatprep.subr.mxu0 0.0
    %2386 = vmatpush1.msra.mxu0 0.0
    %2387 = vmatprep.mubr.f32.mxu0 0.0
    %2388 = vmatmul.mubr.f32.gmra.mrb[0].mxu0 %v548
    %v2389 = vpop.f32.mrb[0].mxu0
    %v2390 = vadd.f32 %v509, %v2389
    %v2391 = vpop.f32.mrb[0].mxu0
    %v2392 = vadd.f32 %v509, %v2391
    %2393 = vmatprep.mubr.f32.mxu0 0.0
    %2394 = vmatmul.mubr.f32.gmra.mrb[0].mxu0 %v551
    %v2395 = vpop.f32.mrb[0].mxu0
    %v2396 = vadd.f32 %v514, %v2395
    %v2397 = vpop.f32.mrb[0].mxu0
    %v2398 = vadd.f32 %v514, %v2397
    %2399 = vmatprep.mubr.f32.mxu0 0.0
    %2400 = vmatmul.mubr.f32.gmra.mrb[0].mxu0 %v554
    %v2401 = vpop.f32.mrb[0].mxu0
    %v2402 = vadd.f32 %v519, %v2401
    %v2403 = vpop.f32.mrb[0].mxu0
    %v2404 = vadd.f32 %v519, %v2403
    %2405 = vmatprep.mubr.f32.mxu0 0.0
    %2406 = vmatmul.mubr.f32.gmra.mrb[0].mxu0 %v557
    %v2407 = vpop.f32.mrb[0].mxu0
    %v2408 = vadd.f32 %v524, %v2407
    %v2409 = vpop.f32.mrb[0].mxu0
    %v2410 = vadd.f32 %v524, %v2409
    %2411 = vmatprep.mubr.f32.mxu0 0.0
    %2412 = vmatmul.mubr.f32.gmra.mrb[0].mxu0 %v560
    %v2413 = vpop.f32.mrb[0].mxu0
    %v2414 = vadd.f32 %v529, %v2413
    %v2415 = vpop.f32.mrb[0].mxu0
    %v2416 = vadd.f32 %v529, %v2415
    %2417 = vmatprep.mubr.f32.mxu0 0.0
    %2418 = vmatmul.mubr.f32.gmra.mrb[0].mxu0 %v563
    %v2419 = vpop.f32.mrb[0].mxu0
    %v2420 = vadd.f32 %v534, %v2419
    %v2421 = vpop.f32.mrb[0].mxu0
    %v2422 = vadd.f32 %v534, %v2421
    %2423 = vmatprep.mubr.f32.mxu0 0.0
    %2424 = vmatmul.mubr.f32.gmra.mrb[0].mxu0 %v566
    %v2425 = vpop.f32.mrb[0].mxu0
    %v2426 = vadd.f32 %v539, %v2425
    %v2427 = vpop.f32.mrb[0].mxu0
    %v2428 = vadd.f32 %v539, %v2427
    %2429 = vmatprep.mubr.f32.mxu0 0.0
    %2430 = vmatmul.mubr.f32.gmra.mrb[0].mxu0 %v569
    %v2431 = vpop.f32.mrb[0].mxu0
    %v2432 = vadd.f32 %v544, %v2431
    %v2433 = vpop.f32.mrb[0].mxu0
    %v2434 = vadd.f32 %v544, %v2433
    %2435 = vdwg.mxu0
    %v2436 = vadd.f32 %v2390, %v2392
    %v2437 = vadd.f32 %v2436, %v2396
    %v2438 = vadd.f32 %v2437, %v2398
    %v2439 = vadd.f32 %v2438, %v2402
    %v2440 = vadd.f32 %v2439, %v2404
    %v2441 = vadd.f32 %v2440, %v2408
    %v2442 = vadd.f32 %v2441, %v2410
    %v2443 = vadd.f32 %v2442, %v2414
    %v2444 = vadd.f32 %v2443, %v2416
    %v2445 = vadd.f32 %v2444, %v2420
    %v2446 = vadd.f32 %v2445, %v2422
    %v2447 = vadd.f32 %v2446, %v2426
    %v2448 = vadd.f32 %v2447, %v2428
    %v2449 = vadd.f32 %v2448, %v2432
    %v2450 = vadd.f32 %v2449, %v2434
    %2451 = vadd.xlane.f32.xlu0 %v2450
    %v2452 = vpop.xlane.xlu0 %2451
    %v2453 = vrot.slane %v2452, 4
    %v2454 = vadd.f32 %v2452, %v2453
    %v2455 = vrot.slane %v2454, 2
    %v2456 = vadd.f32 %v2454, %v2455
    %v2457 = vrot.slane %v2456, 1
    %v2458 = vadd.f32 %v2456, %v2457
    %s2459 = vtos %v2458
    %v2460 = vstv %s2459
    %v2461 = vmul.f32 %v2390, %v2390
    %v2462 = vmul.f32 %v2392, %v2392
    %v2463 = vmul.f32 %v2396, %v2396
    %v2464 = vmul.f32 %v2398, %v2398
    %v2465 = vmul.f32 %v2402, %v2402
    %v2466 = vmul.f32 %v2404, %v2404
    %v2467 = vmul.f32 %v2408, %v2408
    %v2468 = vmul.f32 %v2410, %v2410
    %v2469 = vmul.f32 %v2414, %v2414
    %v2470 = vmul.f32 %v2416, %v2416
    %v2471 = vmul.f32 %v2420, %v2420
    %v2472 = vmul.f32 %v2422, %v2422
    %v2473 = vmul.f32 %v2426, %v2426
    %v2474 = vmul.f32 %v2428, %v2428
    %v2475 = vmul.f32 %v2432, %v2432
    %v2476 = vmul.f32 %v2434, %v2434
    %v2477 = vadd.f32 %v2461, %v2462
    %v2478 = vadd.f32 %v2477, %v2463
    %v2479 = vadd.f32 %v2478, %v2464
    %v2480 = vadd.f32 %v2479, %v2465
    %v2481 = vadd.f32 %v2480, %v2466
    %v2482 = vadd.f32 %v2481, %v2467
    %v2483 = vadd.f32 %v2482, %v2468
    %v2484 = vadd.f32 %v2483, %v2469
    %v2485 = vadd.f32 %v2484, %v2470
    %v2486 = vadd.f32 %v2485, %v2471
    %v2487 = vadd.f32 %v2486, %v2472
    %v2488 = vadd.f32 %v2487, %v2473
    %v2489 = vadd.f32 %v2488, %v2474
    %v2490 = vadd.f32 %v2489, %v2475
    %v2491 = vadd.f32 %v2490, %v2476
    %2492 = vadd.xlane.f32.xlu0 %v2491
    %v2493 = vpop.xlane.xlu0 %2492
    %v2494 = vrot.slane %v2493, 4
    %v2495 = vadd.f32 %v2493, %v2494
    %v2496 = vrot.slane %v2495, 2
    %v2497 = vadd.f32 %v2495, %v2496
    %v2498 = vrot.slane %v2497, 1
    %v2499 = vadd.f32 %v2497, %v2498
    %s2500 = vtos %v2499
    %v2501 = vstv %s2500
    %v2502 = vmul.f32 %v2460, 6.1035156e-05
    %v2503 = vmul.f32 %v2501, 6.1035156e-05
    %v2504 = vmul.f32 %v2502, %v2502
    %v2505 = vsub.f32 %v2503, %v2504
    %v2506 = vmax.f32 %v2505, 0.0
    %v2507 = vadd.f32 %v2506, 1e-05
    %v2508 = vrsqrt.pop %v2507
    %v2509 = vsub.f32 %v2390, %v2502
    %v2510 = vsub.f32 %v2392, %v2502
    %v2511 = vsub.f32 %v2396, %v2502
    %v2512 = vsub.f32 %v2398, %v2502
    %v2513 = vsub.f32 %v2402, %v2502
    %v2514 = vsub.f32 %v2404, %v2502
    %v2515 = vsub.f32 %v2408, %v2502
    %v2516 = vsub.f32 %v2410, %v2502
    %v2517 = vsub.f32 %v2414, %v2502
    %v2518 = vsub.f32 %v2416, %v2502
    %v2519 = vsub.f32 %v2420, %v2502
    %v2520 = vsub.f32 %v2422, %v2502
    %v2521 = vsub.f32 %v2426, %v2502
    %v2522 = vsub.f32 %v2428, %v2502
    %v2523 = vsub.f32 %v2432, %v2502
    %v2524 = vsub.f32 %v2434, %v2502
    %v2525 = vmul.f32 %v2509, %v2508
    %v2526 = vmul.f32 %v2510, %v2508
    %v2527 = vmul.f32 %v2511, %v2508
    %v2528 = vmul.f32 %v2512, %v2508
    %v2529 = vmul.f32 %v2513, %v2508
    %v2530 = vmul.f32 %v2514, %v2508
    %v2531 = vmul.f32 %v2515, %v2508
    %v2532 = vmul.f32 %v2516, %v2508
    %v2533 = vmul.f32 %v2517, %v2508
    %v2534 = vmul.f32 %v2518, %v2508
    %v2535 = vmul.f32 %v2519, %v2508
    %v2536 = vmul.f32 %v2520, %v2508
    %v2537 = vmul.f32 %v2521, %v2508
    %v2538 = vmul.f32 %v2522, %v2508
    %v2539 = vmul.f32 %v2523, %v2508
    %v2540 = vmul.f32 %v2524, %v2508
    %v2541 = vld [vmem:[#allocation8] sm:$0xff]
    %v2542 = vld [vmem:[#allocation8 + $0x8] sm:$0xff]
    %v2543 = vld [vmem:[#allocation8 + $0x10] sm:$0xff]
    %v2544 = vld [vmem:[#allocation8 + $0x18] sm:$0xff]
    %v2545 = vld [vmem:[#allocation8 + $0x20] sm:$0xff]
    %v2546 = vld [vmem:[#allocation8 + $0x28] sm:$0xff]
    %v2547 = vld [vmem:[#allocation8 + $0x30] sm:$0xff]
    %v2548 = vld [vmem:[#allocation8 + $0x38] sm:$0xff]
    %v2549 = vld [vmem:[#allocation8 + $0x40] sm:$0xff]
    %v2550 = vld [vmem:[#allocation8 + $0x48] sm:$0xff]
    %v2551 = vld [vmem:[#allocation8 + $0x50] sm:$0xff]
    %v2552 = vld [vmem:[#allocation8 + $0x58] sm:$0xff]
    %v2553 = vld [vmem:[#allocation8 + $0x60] sm:$0xff]
    %v2554 = vld [vmem:[#allocation8 + $0x68] sm:$0xff]
    %v2555 = vld [vmem:[#allocation8 + $0x70] sm:$0xff]
    %v2556 = vld [vmem:[#allocation8 + $0x78] sm:$0xff]
    %v2557 = vmul.f32 %v2525, %v2541
    %v2558 = vmul.f32 %v2526, %v2542
    %v2559 = vmul.f32 %v2527, %v2543
    %v2560 = vmul.f32 %v2528, %v2544
    %v2561 = vmul.f32 %v2529, %v2545
    %v2562 = vmul.f32 %v2530, %v2546
    %v2563 = vmul.f32 %v2531, %v2547
    %v2564 = vmul.f32 %v2532, %v2548
    %v2565 = vmul.f32 %v2533, %v2549
    %v2566 = vmul.f32 %v2534, %v2550
    %v2567 = vmul.f32 %v2535, %v2551
    %v2568 = vmul.f32 %v2536, %v2552
    %v2569 = vmul.f32 %v2537, %v2553
    %v2570 = vmul.f32 %v2538, %v2554
    %v2571 = vmul.f32 %v2539, %v2555
    %v2572 = vmul.f32 %v2540, %v2556
    %v2573 = vld [vmem:[#allocation10] sm:$0xff]
    %v2574 = vld [vmem:[#allocation10 + $0x8] sm:$0xff]
    %v2575 = vld [vmem:[#allocation10 + $0x10] sm:$0xff]
    %v2576 = vld [vmem:[#allocation10 + $0x18] sm:$0xff]
    %v2577 = vld [vmem:[#allocation10 + $0x20] sm:$0xff]
    %v2578 = vld [vmem:[#allocation10 + $0x28] sm:$0xff]
    %v2579 = vld [vmem:[#allocation10 + $0x30] sm:$0xff]
    %v2580 = vld [vmem:[#allocation10 + $0x38] sm:$0xff]
    %v2581 = vld [vmem:[#allocation10 + $0x40] sm:$0xff]
    %v2582 = vld [vmem:[#allocation10 + $0x48] sm:$0xff]
    %v2583 = vld [vmem:[#allocation10 + $0x50] sm:$0xff]
    %v2584 = vld [vmem:[#allocation10 + $0x58] sm:$0xff]
    %v2585 = vld [vmem:[#allocation10 + $0x60] sm:$0xff]
    %v2586 = vld [vmem:[#allocation10 + $0x68] sm:$0xff]
    %v2587 = vld [vmem:[#allocation10 + $0x70] sm:$0xff]
    %v2588 = vld [vmem:[#allocation10 + $0x78] sm:$0xff]
    %v2589 = vadd.f32 %v2557, %v2573
    %v2590 = vadd.f32 %v2558, %v2574
    %v2591 = vadd.f32 %v2559, %v2575
    %v2592 = vadd.f32 %v2560, %v2576
    %v2593 = vadd.f32 %v2561, %v2577
    %v2594 = vadd.f32 %v2562, %v2578
    %v2595 = vadd.f32 %v2563, %v2579
    %v2596 = vadd.f32 %v2564, %v2580
    %v2597 = vadd.f32 %v2565, %v2581
    %v2598 = vadd.f32 %v2566, %v2582
    %v2599 = vadd.f32 %v2567, %v2583
    %v2600 = vadd.f32 %v2568, %v2584
    %v2601 = vadd.f32 %v2569, %v2585
    %v2602 = vadd.f32 %v2570, %v2586
    %v2603 = vadd.f32 %v2571, %v2587
    %v2604 = vadd.f32 %v2572, %v2588
    %v2605 = vmax.f32 %v2589, 0.0
    %v2606 = vmax.f32 %v2590, 0.0
    %v2607 = vmax.f32 %v2591, 0.0
    %v2608 = vmax.f32 %v2592, 0.0
    %v2609 = vmax.f32 %v2593, 0.0
    %v2610 = vmax.f32 %v2594, 0.0
    %v2611 = vmax.f32 %v2595, 0.0
    %v2612 = vmax.f32 %v2596, 0.0
    %v2613 = vmax.f32 %v2597, 0.0
    %v2614 = vmax.f32 %v2598, 0.0
    %v2615 = vmax.f32 %v2599, 0.0
    %v2616 = vmax.f32 %v2600, 0.0
    %v2617 = vmax.f32 %v2601, 0.0
    %v2618 = vmax.f32 %v2602, 0.0
    %v2619 = vmax.f32 %v2603, 0.0
    %v2620 = vmax.f32 %v2604, 0.0
    %2621 = vmatprep.subr.mxu0 %v2606
    %2622 = vmatpush1.msra.mxu0 %v2605
    %2623 = vmatprep.subr.mxu0 %v2608
    %2624 = vmatpush1.msra.mxu0 %v2607
    %2625 = vmatprep.subr.mxu0 %v2610
    %2626 = vmatpush1.msra.mxu0 %v2609
    %2627 = vmatprep.subr.mxu0 %v2612
    %2628 = vmatpush1.msra.mxu0 %v2611
    %2629 = vmatprep.subr.mxu0 %v2614
    %2630 = vmatpush1.msra.mxu0 %v2613
    %2631 = vmatprep.subr.mxu0 %v2616
    %2632 = vmatpush1.msra.mxu0 %v2615
    %2633 = vmatprep.subr.mxu0 %v2618
    %2634 = vmatpush1.msra.mxu0 %v2617
    %2635 = vmatprep.subr.mxu0 %v2620
    %2636 = vmatpush1.msra.mxu0 %v2619
    %2637 = vmatprep.subr.mxu0 0.0
    %2638 = vmatpush1.msra.mxu0 0.0
    %2639 = vmatprep.subr.mxu0 0.0
    %2640 = vmatpush1.msra.mxu0 0.0
    %2641 = vmatprep.subr.mxu0 0.0
    %2642 = vmatpush1.msra.mxu0 0.0
    %2643 = vmatprep.subr.mxu0 0.0
    %2644 = vmatpush1.msra.mxu0 0.0
    %2645 = vmatprep.subr.mxu0 0.0
    %2646 = vmatpush1.msra.mxu0 0.0
    %2647 = vmatprep.subr.mxu0 0.0
    %2648 = vmatpush1.msra.mxu0 0.0
    %2649 = vmatprep.subr.mxu0 0.0
    %2650 = vmatpush1.msra.mxu0 0.0
    %2651 = vmatprep.subr.mxu0 0.0
    %2652 = vmatpush1.msra.mxu0 0.0
    %2653 = vmatprep.subr.mxu0 0.0
    %2654 = vmatpush1.msra.mxu0 0.0
    %2655 = vmatprep.subr.mxu0 0.0
    %2656 = vmatpush1.msra.mxu0 0.0
    %2657 = vmatprep.subr.mxu0 0.0
    %2658 = vmatpush1.msra.mxu0 0.0
    %2659 = vmatprep.subr.mxu0 0.0
    %2660 = vmatpush1.msra.mxu0 0.0
    %2661 = vmatprep.subr.mxu0 0.0
    %2662 = vmatpush1.msra.mxu0 0.0
    %2663 = vmatprep.subr.mxu0 0.0
    %2664 = vmatpush1.msra.mxu0 0.0
    %2665 = vmatprep.subr.mxu0 0.0
    %2666 = vmatpush1.msra.mxu0 0.0
    %2667 = vmatprep.subr.mxu0 0.0
    %2668 = vmatpush1.msra.mxu0 0.0
    %2669 = vmatprep.subr.mxu0 0.0
    %2670 = vmatpush1.msra.mxu0 0.0
    %2671 = vmatprep.subr.mxu0 0.0
    %2672 = vmatpush1.msra.mxu0 0.0
    %2673 = vmatprep.subr.mxu0 0.0
    %2674 = vmatpush1.msra.mxu0 0.0
    %2675 = vmatprep.subr.mxu0 0.0
    %2676 = vmatpush1.msra.mxu0 0.0
    %2677 = vmatprep.subr.mxu0 0.0
    %2678 = vmatpush1.msra.mxu0 0.0
    %2679 = vmatprep.subr.mxu0 0.0
    %2680 = vmatpush1.msra.mxu0 0.0
    %2681 = vmatprep.subr.mxu0 0.0
    %2682 = vmatpush1.msra.mxu0 0.0
    %2683 = vmatprep.subr.mxu0 0.0
    %2684 = vmatpush1.msra.mxu0 0.0
    %2685 = vmatprep.mubr.f32.mxu0 0.0
    %2686 = vmatmul.mubr.f32.gmra.mrb[0].mxu0 %v951
    %v2687 = vpop.f32.mrb[0].mxu0
    %v2688 = vadd.f32 %v872, %v2687
    %v2689 = vpop.f32.mrb[0].mxu0
    %v2690 = vadd.f32 %v872, %v2689
    %2691 = vmatprep.mubr.f32.mxu0 0.0
    %2692 = vmatmul.mubr.f32.gmra.mrb[0].mxu0 %v954
    %v2693 = vpop.f32.mrb[0].mxu0
    %v2694 = vadd.f32 %v877, %v2693
    %v2695 = vpop.f32.mrb[0].mxu0
    %v2696 = vadd.f32 %v877, %v2695
    %2697 = vmatprep.mubr.f32.mxu0 0.0
    %2698 = vmatmul.mubr.f32.gmra.mrb[0].mxu0 %v957
    %v2699 = vpop.f32.mrb[0].mxu0
    %v2700 = vadd.f32 %v882, %v2699
    %v2701 = vpop.f32.mrb[0].mxu0
    %v2702 = vadd.f32 %v882, %v2701
    %2703 = vmatprep.mubr.f32.mxu0 0.0
    %2704 = vmatmul.mubr.f32.gmra.mrb[0].mxu0 %v960
    %v2705 = vpop.f32.mrb[0].mxu0
    %v2706 = vadd.f32 %v887, %v2705
    %v2707 = vpop.f32.mrb[0].mxu0
    %v2708 = vadd.f32 %v887, %v2707
    %2709 = vmatprep.mubr.f32.mxu0 0.0
    %2710 = vmatmul.mubr.f32.gmra.mrb[0].mxu0 %v963
    %v2711 = vpop.f32.mrb[0].mxu0
    %v2712 = vadd.f32 %v892, %v2711
    %v2713 = vpop.f32.mrb[0].mxu0
    %v2714 = vadd.f32 %v892, %v2713
    %2715 = vmatprep.mubr.f32.mxu0 0.0
    %2716 = vmatmul.mubr.f32.gmra.mrb[0].mxu0 %v966
    %v2717 = vpop.f32.mrb[0].mxu0
    %v2718 = vadd.f32 %v897, %v2717
    %v2719 = vpop.f32.mrb[0].mxu0
    %v2720 = vadd.f32 %v897, %v2719
    %2721 = vmatprep.mubr.f32.mxu0 0.0
    %2722 = vmatmul.mubr.f32.gmra.mrb[0].mxu0 %v969
    %v2723 = vpop.f32.mrb[0].mxu0
    %v2724 = vadd.f32 %v902, %v2723
    %v2725 = vpop.f32.mrb[0].mxu0
    %v2726 = vadd.f32 %v902, %v2725
    %2727 = vmatprep.mubr.f32.mxu0 0.0
    %2728 = vmatmul.mubr.f32.gmra.mrb[0].mxu0 %v972
    %v2729 = vpop.f32.mrb[0].mxu0
    %v2730 = vadd.f32 %v907, %v2729
    %v2731 = vpop.f32.mrb[0].mxu0
    %v2732 = vadd.f32 %v907, %v2731
    %2733 = vmatprep.mubr.f32.mxu0 0.0
    %2734 = vmatmul.mubr.f32.gmra.mrb[0].mxu0 %v975
    %v2735 = vpop.f32.mrb[0].mxu0
    %v2736 = vadd.f32 %v912, %v2735
    %v2737 = vpop.f32.mrb[0].mxu0
    %v2738 = vadd.f32 %v912, %v2737
    %2739 = vmatprep.mubr.f32.mxu0 0.0
    %2740 = vmatmul.mubr.f32.gmra.mrb[0].mxu0 %v978
    %v2741 = vpop.f32.mrb[0].mxu0
    %v2742 = vadd.f32 %v917, %v2741
    %v2743 = vpop.f32.mrb[0].mxu0
    %v2744 = vadd.f32 %v917, %v2743
    %2745 = vmatprep.mubr.f32.mxu0 0.0
    %2746 = vmatmul.mubr.f32.gmra.mrb[0].mxu0 %v981
    %v2747 = vpop.f32.mrb[0].mxu0
    %v2748 = vadd.f32 %v922, %v2747
    %v2749 = vpop.f32.mrb[0].mxu0
    %v2750 = vadd.f32 %v922, %v2749
    %2751 = vmatprep.mubr.f32.mxu0 0.0
    %2752 = vmatmul.mubr.f32.gmra.mrb[0].mxu0 %v984
    %v2753 = vpop.f32.mrb[0].mxu0
    %v2754 = vadd.f32 %v927, %v2753
    %v2755 = vpop.f32.mrb[0].mxu0
    %v2756 = vadd.f32 %v927, %v2755
    %2757 = vmatprep.mubr.f32.mxu0 0.0
    %2758 = vmatmul.mubr.f32.gmra.mrb[0].mxu0 %v987
    %v2759 = vpop.f32.mrb[0].mxu0
    %v2760 = vadd.f32 %v932, %v2759
    %v2761 = vpop.f32.mrb[0].mxu0
    %v2762 = vadd.f32 %v932, %v2761
    %2763 = vmatprep.mubr.f32.mxu0 0.0
    %2764 = vmatmul.mubr.f32.gmra.mrb[0].mxu0 %v990
    %v2765 = vpop.f32.mrb[0].mxu0
    %v2766 = vadd.f32 %v937, %v2765
    %v2767 = vpop.f32.mrb[0].mxu0
    %v2768 = vadd.f32 %v937, %v2767
    %2769 = vmatprep.mubr.f32.mxu0 0.0
    %2770 = vmatmul.mubr.f32.gmra.mrb[0].mxu0 %v993
    %v2771 = vpop.f32.mrb[0].mxu0
    %v2772 = vadd.f32 %v942, %v2771
    %v2773 = vpop.f32.mrb[0].mxu0
    %v2774 = vadd.f32 %v942, %v2773
    %2775 = vmatprep.mubr.f32.mxu0 0.0
    %2776 = vmatmul.mubr.f32.gmra.mrb[0].mxu0 %v996
    %v2777 = vpop.f32.mrb[0].mxu0
    %v2778 = vadd.f32 %v947, %v2777
    %v2779 = vpop.f32.mrb[0].mxu0
    %v2780 = vadd.f32 %v947, %v2779
    %2781 = vdwg.mxu0
    %v2782 = vadd.f32 %v2688, %v2690
    %v2783 = vadd.f32 %v2782, %v2694
    %v2784 = vadd.f32 %v2783, %v2696
    %v2785 = vadd.f32 %v2784, %v2700
    %v2786 = vadd.f32 %v2785, %v2702
    %v2787 = vadd.f32 %v2786, %v2706
    %v2788 = vadd.f32 %v2787, %v2708
    %v2789 = vadd.f32 %v2788, %v2712
    %v2790 = vadd.f32 %v2789, %v2714
    %v2791 = vadd.f32 %v2790, %v2718
    %v2792 = vadd.f32 %v2791, %v2720
    %v2793 = vadd.f32 %v2792, %v2724
    %v2794 = vadd.f32 %v2793, %v2726
    %v2795 = vadd.f32 %v2794, %v2730
    %v2796 = vadd.f32 %v2795, %v2732
    %v2797 = vadd.f32 %v2796, %v2736
    %v2798 = vadd.f32 %v2797, %v2738
    %v2799 = vadd.f32 %v2798, %v2742
    %v2800 = vadd.f32 %v2799, %v2744
    %v2801 = vadd.f32 %v2800, %v2748
    %v2802 = vadd.f32 %v2801, %v2750
    %v2803 = vadd.f32 %v2802, %v2754
    %v2804 = vadd.f32 %v2803, %v2756
    %v2805 = vadd.f32 %v2804, %v2760
    %v2806 = vadd.f32 %v2805, %v2762
    %v2807 = vadd.f32 %v2806, %v2766
    %v2808 = vadd.f32 %v2807, %v2768
    %v2809 = vadd.f32 %v2808, %v2772
    %v2810 = vadd.f32 %v2809, %v2774
    %v2811 = vadd.f32 %v2810, %v2778
    %v2812 = vadd.f32 %v2811, %v2780
    %2813 = vadd.xlane.f32.xlu0 %v2812
    %v2814 = vpop.xlane.xlu0 %2813
    %v2815 = vrot.slane %v2814, 4
    %v2816 = vadd.f32 %v2814, %v2815
    %v2817 = vrot.slane %v2816, 2
    %v2818 = vadd.f32 %v2816, %v2817
    %v2819 = vrot.slane %v2818, 1
    %v2820 = vadd.f32 %v2818, %v2819
    %s2821 = vtos %v2820
    %v2822 = vstv %s2821
    %v2823 = vmul.f32 %v2688, %v2688
    %v2824 = vmul.f32 %v2690, %v2690
    %v2825 = vmul.f32 %v2694, %v2694
    %v2826 = vmul.f32 %v2696, %v2696
    %v2827 = vmul.f32 %v2700, %v2700
    %v2828 = vmul.f32 %v2702, %v2702
    %v2829 = vmul.f32 %v2706, %v2706
    %v2830 = vmul.f32 %v2708, %v2708
    %v2831 = vmul.f32 %v2712, %v2712
    %v2832 = vmul.f32 %v2714, %v2714
    %v2833 = vmul.f32 %v2718, %v2718
    %v2834 = vmul.f32 %v2720, %v2720
    %v2835 = vmul.f32 %v2724, %v2724
    %v2836 = vmul.f32 %v2726, %v2726
    %v2837 = vmul.f32 %v2730, %v2730
    %v2838 = vmul.f32 %v2732, %v2732
    %v2839 = vmul.f32 %v2736, %v2736
    %v2840 = vmul.f32 %v2738, %v2738
    %v2841 = vmul.f32 %v2742, %v2742
    %v2842 = vmul.f32 %v2744, %v2744
    %v2843 = vmul.f32 %v2748, %v2748
    %v2844 = vmul.f32 %v2750, %v2750
    %v2845 = vmul.f32 %v2754, %v2754
    %v2846 = vmul.f32 %v2756, %v2756
    %v2847 = vmul.f32 %v2760, %v2760
    %v2848 = vmul.f32 %v2762, %v2762
    %v2849 = vmul.f32 %v2766, %v2766
    %v2850 = vmul.f32 %v2768, %v2768
    %v2851 = vmul.f32 %v2772, %v2772
    %v2852 = vmul.f32 %v2774, %v2774
    %v2853 = vmul.f32 %v2778, %v2778
    %v2854 = vmul.f32 %v2780, %v2780
    %v2855 = vadd.f32 %v2823, %v2824
    %v2856 = vadd.f32 %v2855, %v2825
    %v2857 = vadd.f32 %v2856, %v2826
    %v2858 = vadd.f32 %v2857, %v2827
    %v2859 = vadd.f32 %v2858, %v2828
    %v2860 = vadd.f32 %v2859, %v2829
    %v2861 = vadd.f32 %v2860, %v2830
    %v2862 = vadd.f32 %v2861, %v2831
    %v2863 = vadd.f32 %v2862, %v2832
    %v2864 = vadd.f32 %v2863, %v2833
    %v2865 = vadd.f32 %v2864, %v2834
    %v2866 = vadd.f32 %v2865, %v2835
    %v2867 = vadd.f32 %v2866, %v2836
    %v2868 = vadd.f32 %v2867, %v2837
    %v2869 = vadd.f32 %v2868, %v2838
    %v2870 = vadd.f32 %v2869, %v2839
    %v2871 = vadd.f32 %v2870, %v2840
    %v2872 = vadd.f32 %v2871, %v2841
    %v2873 = vadd.f32 %v2872, %v2842
    %v2874 = vadd.f32 %v2873, %v2843
    %v2875 = vadd.f32 %v2874, %v2844
    %v2876 = vadd.f32 %v2875, %v2845
    %v2877 = vadd.f32 %v2876, %v2846
    %v2878 = vadd.f32 %v2877, %v2847
    %v2879 = vadd.f32 %v2878, %v2848
    %v2880 = vadd.f32 %v2879, %v2849
    %v2881 = vadd.f32 %v2880, %v2850
    %v2882 = vadd.f32 %v2881, %v2851
    %v2883 = vadd.f32 %v2882, %v2852
    %v2884 = vadd.f32 %v2883, %v2853
    %v2885 = vadd.f32 %v2884, %v2854
    %2886 = vadd.xlane.f32.xlu0 %v2885
    %v2887 = vpop.xlane.xlu0 %2886
    %v2888 = vrot.slane %v2887, 4
    %v2889 = vadd.f32 %v2887, %v2888
    %v2890 = vrot.slane %v2889, 2
    %v2891 = vadd.f32 %v2889, %v2890
    %v2892 = vrot.slane %v2891, 1
    %v2893 = vadd.f32 %v2891, %v2892
    %s2894 = vtos %v2893
    %v2895 = vstv %s2894
    %v2896 = vmul.f32 %v2822, 3.0517578e-05
    %v2897 = vmul.f32 %v2895, 3.0517578e-05
    %v2898 = vmul.f32 %v2896, %v2896
    %v2899 = vsub.f32 %v2897, %v2898
    %v2900 = vmax.f32 %v2899, 0.0
    %v2901 = vadd.f32 %v2900, 1e-05
    %v2902 = vrsqrt.pop %v2901
    %v2903 = vsub.f32 %v2688, %v2896
    %v2904 = vsub.f32 %v2690, %v2896
    %v2905 = vsub.f32 %v2694, %v2896
    %v2906 = vsub.f32 %v2696, %v2896
    %v2907 = vsub.f32 %v2700, %v2896
    %v2908 = vsub.f32 %v2702, %v2896
    %v2909 = vsub.f32 %v2706, %v2896
    %v2910 = vsub.f32 %v2708, %v2896
    %v2911 = vsub.f32 %v2712, %v2896
    %v2912 = vsub.f32 %v2714, %v2896
    %v2913 = vsub.f32 %v2718, %v2896
    %v2914 = vsub.f32 %v2720, %v2896
    %v2915 = vsub.f32 %v2724, %v2896
    %v2916 = vsub.f32 %v2726, %v2896
    %v2917 = vsub.f32 %v2730, %v2896
    %v2918 = vsub.f32 %v2732, %v2896
    %v2919 = vsub.f32 %v2736, %v2896
    %v2920 = vsub.f32 %v2738, %v2896
    %v2921 = vsub.f32 %v2742, %v2896
    %v2922 = vsub.f32 %v2744, %v2896
    %v2923 = vsub.f32 %v2748, %v2896
    %v2924 = vsub.f32 %v2750, %v2896
    %v2925 = vsub.f32 %v2754, %v2896
    %v2926 = vsub.f32 %v2756, %v2896
    %v2927 = vsub.f32 %v2760, %v2896
    %v2928 = vsub.f32 %v2762, %v2896
    %v2929 = vsub.f32 %v2766, %v2896
    %v2930 = vsub.f32 %v2768, %v2896
    %v2931 = vsub.f32 %v2772, %v2896
    %v2932 = vsub.f32 %v2774, %v2896
    %v2933 = vsub.f32 %v2778, %v2896
    %v2934 = vsub.f32 %v2780, %v2896
    %v2935 = vmul.f32 %v2903, %v2902
    %v2936 = vmul.f32 %v2904, %v2902
    %v2937 = vmul.f32 %v2905, %v2902
    %v2938 = vmul.f32 %v2906, %v2902
    %v2939 = vmul.f32 %v2907, %v2902
    %v2940 = vmul.f32 %v2908, %v2902
    %v2941 = vmul.f32 %v2909, %v2902
    %v2942 = vmul.f32 %v2910, %v2902
    %v2943 = vmul.f32 %v2911, %v2902
    %v2944 = vmul.f32 %v2912, %v2902
    %v2945 = vmul.f32 %v2913, %v2902
    %v2946 = vmul.f32 %v2914, %v2902
    %v2947 = vmul.f32 %v2915, %v2902
    %v2948 = vmul.f32 %v2916, %v2902
    %v2949 = vmul.f32 %v2917, %v2902
    %v2950 = vmul.f32 %v2918, %v2902
    %v2951 = vmul.f32 %v2919, %v2902
    %v2952 = vmul.f32 %v2920, %v2902
    %v2953 = vmul.f32 %v2921, %v2902
    %v2954 = vmul.f32 %v2922, %v2902
    %v2955 = vmul.f32 %v2923, %v2902
    %v2956 = vmul.f32 %v2924, %v2902
    %v2957 = vmul.f32 %v2925, %v2902
    %v2958 = vmul.f32 %v2926, %v2902
    %v2959 = vmul.f32 %v2927, %v2902
    %v2960 = vmul.f32 %v2928, %v2902
    %v2961 = vmul.f32 %v2929, %v2902
    %v2962 = vmul.f32 %v2930, %v2902
    %v2963 = vmul.f32 %v2931, %v2902
    %v2964 = vmul.f32 %v2932, %v2902
    %v2965 = vmul.f32 %v2933, %v2902
    %v2966 = vmul.f32 %v2934, %v2902
    %v2967 = vld [vmem:[%s11] sm:$0xff]
    %v2968 = vld [vmem:[%s11 + $0x8] sm:$0xff]
    %v2969 = vld [vmem:[%s11 + $0x10] sm:$0xff]
    %v2970 = vld [vmem:[%s11 + $0x18] sm:$0xff]
    %v2971 = vld [vmem:[%s11 + $0x20] sm:$0xff]
    %v2972 = vld [vmem:[%s11 + $0x28] sm:$0xff]
    %v2973 = vld [vmem:[%s11 + $0x30] sm:$0xff]
    %v2974 = vld [vmem:[%s11 + $0x38] sm:$0xff]
    %v2975 = vld [vmem:[%s11 + $0x40] sm:$0xff]
    %v2976 = vld [vmem:[%s11 + $0x48] sm:$0xff]
    %v2977 = vld [vmem:[%s11 + $0x50] sm:$0xff]
    %v2978 = vld [vmem:[%s11 + $0x58] sm:$0xff]
    %v2979 = vld [vmem:[%s11 + $0x60] sm:$0xff]
    %v2980 = vld [vmem:[%s11 + $0x68] sm:$0xff]
    %v2981 = vld [vmem:[%s11 + $0x70] sm:$0xff]
    %v2982 = vld [vmem:[%s11 + $0x78] sm:$0xff]
    %v2983 = vld [vmem:[%s11 + $0x80] sm:$0xff]
    %v2984 = vld [vmem:[%s11 + $0x88] sm:$0xff]
    %v2985 = vld [vmem:[%s11 + $0x90] sm:$0xff]
    %v2986 = vld [vmem:[%s11 + $0x98] sm:$0xff]
    %v2987 = vld [vmem:[%s11 + $0xa0] sm:$0xff]
    %v2988 = vld [vmem:[%s11 + $0xa8] sm:$0xff]
    %v2989 = vld [vmem:[%s11 + $0xb0] sm:$0xff]
    %v2990 = vld [vmem:[%s11 + $0xb8] sm:$0xff]
    %v2991 = vld [vmem:[%s11 + $0xc0] sm:$0xff]
    %v2992 = vld [vmem:[%s11 + $0xc8] sm:$0xff]
    %v2993 = vld [vmem:[%s11 + $0xd0] sm:$0xff]
    %v2994 = vld [vmem:[%s11 + $0xd8] sm:$0xff]
    %v2995 = vld [vmem:[%s11 + $0xe0] sm:$0xff]
    %v2996 = vld [vmem:[%s11 + $0xe8] sm:$0xff]
    %v2997 = vld [vmem:[%s11 + $0xf0] sm:$0xff]
    %v2998 = vld [vmem:[%s11 + $0xf8] sm:$0xff]
    %v2999 = vmul.f32 %v2935, %v2967
    %v3000 = vmul.f32 %v2936, %v2968
    %v3001 = vmul.f32 %v2937, %v2969
    %v3002 = vmul.f32 %v2938, %v2970
    %v3003 = vmul.f32 %v2939, %v2971
    %v3004 = vmul.f32 %v2940, %v2972
    %v3005 = vmul.f32 %v2941, %v2973
    %v3006 = vmul.f32 %v2942, %v2974
    %v3007 = vmul.f32 %v2943, %v2975
    %v3008 = vmul.f32 %v2944, %v2976
    %v3009 = vmul.f32 %v2945, %v2977
    %v3010 = vmul.f32 %v2946, %v2978
    %v3011 = vmul.f32 %v2947, %v2979
    %v3012 = vmul.f32 %v2948, %v2980
    %v3013 = vmul.f32 %v2949, %v2981
    %v3014 = vmul.f32 %v2950, %v2982
    %v3015 = vmul.f32 %v2951, %v2983
    %v3016 = vmul.f32 %v2952, %v2984
    %v3017 = vmul.f32 %v2953, %v2985
    %v3018 = vmul.f32 %v2954, %v2986
    %v3019 = vmul.f32 %v2955, %v2987
    %v3020 = vmul.f32 %v2956, %v2988
    %v3021 = vmul.f32 %v2957, %v2989
    %v3022 = vmul.f32 %v2958, %v2990
    %v3023 = vmul.f32 %v2959, %v2991
    %v3024 = vmul.f32 %v2960, %v2992
    %v3025 = vmul.f32 %v2961, %v2993
    %v3026 = vmul.f32 %v2962, %v2994
    %v3027 = vmul.f32 %v2963, %v2995
    %v3028 = vmul.f32 %v2964, %v2996
    %v3029 = vmul.f32 %v2965, %v2997
    %v3030 = vmul.f32 %v2966, %v2998
    %v3031 = vld [vmem:[%s12] sm:$0xff]
    %v3032 = vld [vmem:[%s12 + $0x8] sm:$0xff]
    %v3033 = vld [vmem:[%s12 + $0x10] sm:$0xff]
    %v3034 = vld [vmem:[%s12 + $0x18] sm:$0xff]
    %v3035 = vld [vmem:[%s12 + $0x20] sm:$0xff]
    %v3036 = vld [vmem:[%s12 + $0x28] sm:$0xff]
    %v3037 = vld [vmem:[%s12 + $0x30] sm:$0xff]
    %v3038 = vld [vmem:[%s12 + $0x38] sm:$0xff]
    %v3039 = vld [vmem:[%s12 + $0x40] sm:$0xff]
    %v3040 = vld [vmem:[%s12 + $0x48] sm:$0xff]
    %v3041 = vld [vmem:[%s12 + $0x50] sm:$0xff]
    %v3042 = vld [vmem:[%s12 + $0x58] sm:$0xff]
    %v3043 = vld [vmem:[%s12 + $0x60] sm:$0xff]
    %v3044 = vld [vmem:[%s12 + $0x68] sm:$0xff]
    %v3045 = vld [vmem:[%s12 + $0x70] sm:$0xff]
    %v3046 = vld [vmem:[%s12 + $0x78] sm:$0xff]
    %v3047 = vld [vmem:[%s12 + $0x80] sm:$0xff]
    %v3048 = vld [vmem:[%s12 + $0x88] sm:$0xff]
    %v3049 = vld [vmem:[%s12 + $0x90] sm:$0xff]
    %v3050 = vld [vmem:[%s12 + $0x98] sm:$0xff]
    %v3051 = vld [vmem:[%s12 + $0xa0] sm:$0xff]
    %v3052 = vld [vmem:[%s12 + $0xa8] sm:$0xff]
    %v3053 = vld [vmem:[%s12 + $0xb0] sm:$0xff]
    %v3054 = vld [vmem:[%s12 + $0xb8] sm:$0xff]
    %v3055 = vld [vmem:[%s12 + $0xc0] sm:$0xff]
    %v3056 = vld [vmem:[%s12 + $0xc8] sm:$0xff]
    %v3057 = vld [vmem:[%s12 + $0xd0] sm:$0xff]
    %v3058 = vld [vmem:[%s12 + $0xd8] sm:$0xff]
    %v3059 = vld [vmem:[%s12 + $0xe0] sm:$0xff]
    %v3060 = vld [vmem:[%s12 + $0xe8] sm:$0xff]
    %v3061 = vld [vmem:[%s12 + $0xf0] sm:$0xff]
    %v3062 = vld [vmem:[%s12 + $0xf8] sm:$0xff]
    %v3063 = vadd.f32 %v2999, %v3031
    %v3064 = vadd.f32 %v3000, %v3032
    %v3065 = vadd.f32 %v3001, %v3033
    %v3066 = vadd.f32 %v3002, %v3034
    %v3067 = vadd.f32 %v3003, %v3035
    %v3068 = vadd.f32 %v3004, %v3036
    %v3069 = vadd.f32 %v3005, %v3037
    %v3070 = vadd.f32 %v3006, %v3038
    %v3071 = vadd.f32 %v3007, %v3039
    %v3072 = vadd.f32 %v3008, %v3040
    %v3073 = vadd.f32 %v3009, %v3041
    %v3074 = vadd.f32 %v3010, %v3042
    %v3075 = vadd.f32 %v3011, %v3043
    %v3076 = vadd.f32 %v3012, %v3044
    %v3077 = vadd.f32 %v3013, %v3045
    %v3078 = vadd.f32 %v3014, %v3046
    %v3079 = vadd.f32 %v3015, %v3047
    %v3080 = vadd.f32 %v3016, %v3048
    %v3081 = vadd.f32 %v3017, %v3049
    %v3082 = vadd.f32 %v3018, %v3050
    %v3083 = vadd.f32 %v3019, %v3051
    %v3084 = vadd.f32 %v3020, %v3052
    %v3085 = vadd.f32 %v3021, %v3053
    %v3086 = vadd.f32 %v3022, %v3054
    %v3087 = vadd.f32 %v3023, %v3055
    %v3088 = vadd.f32 %v3024, %v3056
    %v3089 = vadd.f32 %v3025, %v3057
    %v3090 = vadd.f32 %v3026, %v3058
    %v3091 = vadd.f32 %v3027, %v3059
    %v3092 = vadd.f32 %v3028, %v3060
    %v3093 = vadd.f32 %v3029, %v3061
    %v3094 = vadd.f32 %v3030, %v3062
    %v3095 = vmax.f32 %v3063, 0.0
    %v3096 = vmax.f32 %v3064, 0.0
    %v3097 = vmax.f32 %v3065, 0.0
    %v3098 = vmax.f32 %v3066, 0.0
    %v3099 = vmax.f32 %v3067, 0.0
    %v3100 = vmax.f32 %v3068, 0.0
    %v3101 = vmax.f32 %v3069, 0.0
    %v3102 = vmax.f32 %v3070, 0.0
    %v3103 = vmax.f32 %v3071, 0.0
    %v3104 = vmax.f32 %v3072, 0.0
    %v3105 = vmax.f32 %v3073, 0.0
    %v3106 = vmax.f32 %v3074, 0.0
    %v3107 = vmax.f32 %v3075, 0.0
    %v3108 = vmax.f32 %v3076, 0.0
    %v3109 = vmax.f32 %v3077, 0.0
    %v3110 = vmax.f32 %v3078, 0.0
    %v3111 = vmax.f32 %v3079, 0.0
    %v3112 = vmax.f32 %v3080, 0.0
    %v3113 = vmax.f32 %v3081, 0.0
    %v3114 = vmax.f32 %v3082, 0.0
    %v3115 = vmax.f32 %v3083, 0.0
    %v3116 = vmax.f32 %v3084, 0.0
    %v3117 = vmax.f32 %v3085, 0.0
    %v3118 = vmax.f32 %v3086, 0.0
    %v3119 = vmax.f32 %v3087, 0.0
    %v3120 = vmax.f32 %v3088, 0.0
    %v3121 = vmax.f32 %v3089, 0.0
    %v3122 = vmax.f32 %v3090, 0.0
    %v3123 = vmax.f32 %v3091, 0.0
    %v3124 = vmax.f32 %v3092, 0.0
    %v3125 = vmax.f32 %v3093, 0.0
    %v3126 = vmax.f32 %v3094, 0.0
    %v3127 = vmax.f32 %v3095, %v3096
    %3128 = vmax.xlane.f32.xlu0 %v3127
    %v3129 = vpop.xlane.xlu0 %3128
    %v3130 = vmax.f32 %v3097, %v3098
    %3131 = vmax.xlane.f32.xlu0 %v3130
    %v3132 = vpop.xlane.xlu0 %3131
    %v3133 = vmax.f32 %v3099, %v3100
    %3134 = vmax.xlane.f32.xlu0 %v3133
    %v3135 = vpop.xlane.xlu0 %3134
    %v3136 = vmax.f32 %v3101, %v3102
    %3137 = vmax.xlane.f32.xlu0 %v3136
    %v3138 = vpop.xlane.xlu0 %3137
    %v3139 = vmax.f32 %v3103, %v3104
    %3140 = vmax.xlane.f32.xlu0 %v3139
    %v3141 = vpop.xlane.xlu0 %3140
    %v3142 = vmax.f32 %v3105, %v3106
    %3143 = vmax.xlane.f32.xlu0 %v3142
    %v3144 = vpop.xlane.xlu0 %3143
    %v3145 = vmax.f32 %v3107, %v3108
    %3146 = vmax.xlane.f32.xlu0 %v3145
    %v3147 = vpop.xlane.xlu0 %3146
    %v3148 = vmax.f32 %v3109, %v3110
    %3149 = vmax.xlane.f32.xlu0 %v3148
    %v3150 = vpop.xlane.xlu0 %3149
    %v3151 = vmax.f32 %v3111, %v3112
    %3152 = vmax.xlane.f32.xlu0 %v3151
    %v3153 = vpop.xlane.xlu0 %3152
    %v3154 = vmax.f32 %v3113, %v3114
    %3155 = vmax.xlane.f32.xlu0 %v3154
    %v3156 = vpop.xlane.xlu0 %3155
    %v3157 = vmax.f32 %v3115, %v3116
    %3158 = vmax.xlane.f32.xlu0 %v3157
    %v3159 = vpop.xlane.xlu0 %3158
    %v3160 = vmax.f32 %v3117, %v3118
    %3161 = vmax.xlane.f32.xlu0 %v3160
    %v3162 = vpop.xlane.xlu0 %3161
    %v3163 = vmax.f32 %v3119, %v3120
    %3164 = vmax.xlane.f32.xlu0 %v3163
    %v3165 = vpop.xlane.xlu0 %3164
    %v3166 = vmax.f32 %v3121, %v3122
    %3167 = vmax.xlane.f32.xlu0 %v3166
    %v3168 = vpop.xlane.xlu0 %3167
    %v3169 = vmax.f32 %v3123, %v3124
    %3170 = vmax.xlane.f32.xlu0 %v3169
    %v3171 = vpop.xlane.xlu0 %3170
    %v3172 = vmax.f32 %v3125, %v3126
    %3173 = vmax.xlane.f32.xlu0 %v3172
    %v3174 = vpop.xlane.xlu0 %3173
    %vm3175 = vcmp.eq.f32.partialorder %v3095, %v3129
    %vm3176 = vcmp.eq.f32.partialorder %v3096, %v3129
    %vm3177 = vcmp.eq.f32.partialorder %v3097, %v3132
    %vm3178 = vcmp.eq.f32.partialorder %v3098, %v3132
    %vm3179 = vcmp.eq.f32.partialorder %v3099, %v3135
    %vm3180 = vcmp.eq.f32.partialorder %v3100, %v3135
    %vm3181 = vcmp.eq.f32.partialorder %v3101, %v3138
    %vm3182 = vcmp.eq.f32.partialorder %v3102, %v3138
    %vm3183 = vcmp.eq.f32.partialorder %v3103, %v3141
    %vm3184 = vcmp.eq.f32.partialorder %v3104, %v3141
    %vm3185 = vcmp.eq.f32.partialorder %v3105, %v3144
    %vm3186 = vcmp.eq.f32.partialorder %v3106, %v3144
    %vm3187 = vcmp.eq.f32.partialorder %v3107, %v3147
    %vm3188 = vcmp.eq.f32.partialorder %v3108, %v3147
    %vm3189 = vcmp.eq.f32.partialorder %v3109, %v3150
    %vm3190 = vcmp.eq.f32.partialorder %v3110, %v3150
    %vm3191 = vcmp.eq.f32.partialorder %v3111, %v3153
    %vm3192 = vcmp.eq.f32.partialorder %v3112, %v3153
    %vm3193 = vcmp.eq.f32.partialorder %v3113, %v3156
    %vm3194 = vcmp.eq.f32.partialorder %v3114, %v3156
    %vm3195 = vcmp.eq.f32.partialorder %v3115, %v3159
    %vm3196 = vcmp.eq.f32.partialorder %v3116, %v3159
    %vm3197 = vcmp.eq.f32.partialorder %v3117, %v3162
    %vm3198 = vcmp.eq.f32.partialorder %v3118, %v3162
    %vm3199 = vcmp.eq.f32.partialorder %v3119, %v3165
    %vm3200 = vcmp.eq.f32.partialorder %v3120, %v3165
    %vm3201 = vcmp.eq.f32.partialorder %v3121, %v3168
    %vm3202 = vcmp.eq.f32.partialorder %v3122, %v3168
    %vm3203 = vcmp.eq.f32.partialorder %v3123, %v3171
    %vm3204 = vcmp.eq.f32.partialorder %v3124, %v3171
    %vm3205 = vcmp.eq.f32.partialorder %v3125, %v3174
    %vm3206 = vcmp.eq.f32.partialorder %v3126, %v3174
    %v3207 = vsel %vm3175, %v173, 256
    %v3208 = vsel %vm3176, %v174, 256
    %v3209 = vsel %vm3177, %v173, 256
    %v3210 = vsel %vm3178, %v174, 256
    %v3211 = vsel %vm3179, %v173, 256
    %v3212 = vsel %vm3180, %v174, 256
    %v3213 = vsel %vm3181, %v173, 256
    %v3214 = vsel %vm3182, %v174, 256
    %v3215 = vsel %vm3183, %v173, 256
    %v3216 = vsel %vm3184, %v174, 256
    %v3217 = vsel %vm3185, %v173, 256
    %v3218 = vsel %vm3186, %v174, 256
    %v3219 = vsel %vm3187, %v173, 256
    %v3220 = vsel %vm3188, %v174, 256
    %v3221 = vsel %vm3189, %v173, 256
    %v3222 = vsel %vm3190, %v174, 256
    %v3223 = vsel %vm3191, %v173, 256
    %v3224 = vsel %vm3192, %v174, 256
    %v3225 = vsel %vm3193, %v173, 256
    %v3226 = vsel %vm3194, %v174, 256
    %v3227 = vsel %vm3195, %v173, 256
    %v3228 = vsel %vm3196, %v174, 256
    %v3229 = vsel %vm3197, %v173, 256
    %v3230 = vsel %vm3198, %v174, 256
    %v3231 = vsel %vm3199, %v173, 256
    %v3232 = vsel %vm3200, %v174, 256
    %v3233 = vsel %vm3201, %v173, 256
    %v3234 = vsel %vm3202, %v174, 256
    %v3235 = vsel %vm3203, %v173, 256
    %v3236 = vsel %vm3204, %v174, 256
    %v3237 = vsel %vm3205, %v173, 256
    %v3238 = vsel %vm3206, %v174, 256
    %vm3239 = vcmp.lt.s32.totalorder %v3207, %v3208
    %v3240 = vsel %vm3239, %v3207, %v3208
    %v3241 = vand.u32 %v3240, 65535
    %v3242 = vshra.s32 %v3240, 16
    %v3243 = vcvt.s32.f32 %v3241
    %v3244 = vcvt.s32.f32 %v3242
    %3245 = vmin.xlane.f32.xlu0 %v3244
    %v3246 = vpop.xlane.xlu0 %3245
    %vm3247 = vcmp.eq.f32.partialorder %v3244, %v3246
    %v3248 = vsel %vm3247, %v3243, inf
    %3249 = vmin.xlane.f32.xlu0 %v3248
    %v3250 = vpop.xlane.xlu0 %3249
    %v3251 = vcvt.f32.s32 %v3250
    %v3252 = vcvt.f32.s32 %v3246
    %v3253 = vshll.u32 %v3252, 16
    %v3254 = vadd.s32 %v3253, %v3251
    %vm3255 = vcmp.lt.s32.totalorder %v3209, %v3210
    %v3256 = vsel %vm3255, %v3209, %v3210
    %v3257 = vand.u32 %v3256, 65535
    %v3258 = vshra.s32 %v3256, 16
    %v3259 = vcvt.s32.f32 %v3257
    %v3260 = vcvt.s32.f32 %v3258
    %3261 = vmin.xlane.f32.xlu0 %v3260
    %v3262 = vpop.xlane.xlu0 %3261
    %vm3263 = vcmp.eq.f32.partialorder %v3260, %v3262
    %v3264 = vsel %vm3263, %v3259, inf
    %3265 = vmin.xlane.f32.xlu0 %v3264
    %v3266 = vpop.xlane.xlu0 %3265
    %v3267 = vcvt.f32.s32 %v3266
    %v3268 = vcvt.f32.s32 %v3262
    %v3269 = vshll.u32 %v3268, 16
    %v3270 = vadd.s32 %v3269, %v3267
    %vm3271 = vcmp.lt.s32.totalorder %v3211, %v3212
    %v3272 = vsel %vm3271, %v3211, %v3212
    %v3273 = vand.u32 %v3272, 65535
    %v3274 = vshra.s32 %v3272, 16
    %v3275 = vcvt.s32.f32 %v3273
    %v3276 = vcvt.s32.f32 %v3274
    %3277 = vmin.xlane.f32.xlu0 %v3276
    %v3278 = vpop.xlane.xlu0 %3277
    %vm3279 = vcmp.eq.f32.partialorder %v3276, %v3278
    %v3280 = vsel %vm3279, %v3275, inf
    %3281 = vmin.xlane.f32.xlu0 %v3280
    %v3282 = vpop.xlane.xlu0 %3281
    %v3283 = vcvt.f32.s32 %v3282
    %v3284 = vcvt.f32.s32 %v3278
    %v3285 = vshll.u32 %v3284, 16
    %v3286 = vadd.s32 %v3285, %v3283
    %vm3287 = vcmp.lt.s32.totalorder %v3213, %v3214
    %v3288 = vsel %vm3287, %v3213, %v3214
    %v3289 = vand.u32 %v3288, 65535
    %v3290 = vshra.s32 %v3288, 16
    %v3291 = vcvt.s32.f32 %v3289
    %v3292 = vcvt.s32.f32 %v3290
    %3293 = vmin.xlane.f32.xlu0 %v3292
    %v3294 = vpop.xlane.xlu0 %3293
    %vm3295 = vcmp.eq.f32.partialorder %v3292, %v3294
    %v3296 = vsel %vm3295, %v3291, inf
    %3297 = vmin.xlane.f32.xlu0 %v3296
    %v3298 = vpop.xlane.xlu0 %3297
    %v3299 = vcvt.f32.s32 %v3298
    %v3300 = vcvt.f32.s32 %v3294
    %v3301 = vshll.u32 %v3300, 16
    %v3302 = vadd.s32 %v3301, %v3299
    %vm3303 = vcmp.lt.s32.totalorder %v3215, %v3216
    %v3304 = vsel %vm3303, %v3215, %v3216
    %v3305 = vand.u32 %v3304, 65535
    %v3306 = vshra.s32 %v3304, 16
    %v3307 = vcvt.s32.f32 %v3305
    %v3308 = vcvt.s32.f32 %v3306
    %3309 = vmin.xlane.f32.xlu0 %v3308
    %v3310 = vpop.xlane.xlu0 %3309
    %vm3311 = vcmp.eq.f32.partialorder %v3308, %v3310
    %v3312 = vsel %vm3311, %v3307, inf
    %3313 = vmin.xlane.f32.xlu0 %v3312
    %v3314 = vpop.xlane.xlu0 %3313
    %v3315 = vcvt.f32.s32 %v3314
    %v3316 = vcvt.f32.s32 %v3310
    %v3317 = vshll.u32 %v3316, 16
    %v3318 = vadd.s32 %v3317, %v3315
    %vm3319 = vcmp.lt.s32.totalorder %v3217, %v3218
    %v3320 = vsel %vm3319, %v3217, %v3218
    %v3321 = vand.u32 %v3320, 65535
    %v3322 = vshra.s32 %v3320, 16
    %v3323 = vcvt.s32.f32 %v3321
    %v3324 = vcvt.s32.f32 %v3322
    %3325 = vmin.xlane.f32.xlu0 %v3324
    %v3326 = vpop.xlane.xlu0 %3325
    %vm3327 = vcmp.eq.f32.partialorder %v3324, %v3326
    %v3328 = vsel %vm3327, %v3323, inf
    %3329 = vmin.xlane.f32.xlu0 %v3328
    %v3330 = vpop.xlane.xlu0 %3329
    %v3331 = vcvt.f32.s32 %v3330
    %v3332 = vcvt.f32.s32 %v3326
    %v3333 = vshll.u32 %v3332, 16
    %v3334 = vadd.s32 %v3333, %v3331
    %vm3335 = vcmp.lt.s32.totalorder %v3219, %v3220
    %v3336 = vsel %vm3335, %v3219, %v3220
    %v3337 = vand.u32 %v3336, 65535
    %v3338 = vshra.s32 %v3336, 16
    %v3339 = vcvt.s32.f32 %v3337
    %v3340 = vcvt.s32.f32 %v3338
    %3341 = vmin.xlane.f32.xlu0 %v3340
    %v3342 = vpop.xlane.xlu0 %3341
    %vm3343 = vcmp.eq.f32.partialorder %v3340, %v3342
    %v3344 = vsel %vm3343, %v3339, inf
    %3345 = vmin.xlane.f32.xlu0 %v3344
    %v3346 = vpop.xlane.xlu0 %3345
    %v3347 = vcvt.f32.s32 %v3346
    %v3348 = vcvt.f32.s32 %v3342
    %v3349 = vshll.u32 %v3348, 16
    %v3350 = vadd.s32 %v3349, %v3347
    %vm3351 = vcmp.lt.s32.totalorder %v3221, %v3222
    %v3352 = vsel %vm3351, %v3221, %v3222
    %v3353 = vand.u32 %v3352, 65535
    %v3354 = vshra.s32 %v3352, 16
    %v3355 = vcvt.s32.f32 %v3353
    %v3356 = vcvt.s32.f32 %v3354
    %3357 = vmin.xlane.f32.xlu0 %v3356
    %v3358 = vpop.xlane.xlu0 %3357
    %vm3359 = vcmp.eq.f32.partialorder %v3356, %v3358
    %v3360 = vsel %vm3359, %v3355, inf
    %3361 = vmin.xlane.f32.xlu0 %v3360
    %v3362 = vpop.xlane.xlu0 %3361
    %v3363 = vcvt.f32.s32 %v3362
    %v3364 = vcvt.f32.s32 %v3358
    %v3365 = vshll.u32 %v3364, 16
    %v3366 = vadd.s32 %v3365, %v3363
    %vm3367 = vcmp.lt.s32.totalorder %v3223, %v3224
    %v3368 = vsel %vm3367, %v3223, %v3224
    %v3369 = vand.u32 %v3368, 65535
    %v3370 = vshra.s32 %v3368, 16
    %v3371 = vcvt.s32.f32 %v3369
    %v3372 = vcvt.s32.f32 %v3370
    %3373 = vmin.xlane.f32.xlu0 %v3372
    %v3374 = vpop.xlane.xlu0 %3373
    %vm3375 = vcmp.eq.f32.partialorder %v3372, %v3374
    %v3376 = vsel %vm3375, %v3371, inf
    %3377 = vmin.xlane.f32.xlu0 %v3376
    %v3378 = vpop.xlane.xlu0 %3377
    %v3379 = vcvt.f32.s32 %v3378
    %v3380 = vcvt.f32.s32 %v3374
    %v3381 = vshll.u32 %v3380, 16
    %v3382 = vadd.s32 %v3381, %v3379
    %vm3383 = vcmp.lt.s32.totalorder %v3225, %v3226
    %v3384 = vsel %vm3383, %v3225, %v3226
    %v3385 = vand.u32 %v3384, 65535
    %v3386 = vshra.s32 %v3384, 16
    %v3387 = vcvt.s32.f32 %v3385
    %v3388 = vcvt.s32.f32 %v3386
    %3389 = vmin.xlane.f32.xlu0 %v3388
    %v3390 = vpop.xlane.xlu0 %3389
    %vm3391 = vcmp.eq.f32.partialorder %v3388, %v3390
    %v3392 = vsel %vm3391, %v3387, inf
    %3393 = vmin.xlane.f32.xlu0 %v3392
    %v3394 = vpop.xlane.xlu0 %3393
    %v3395 = vcvt.f32.s32 %v3394
    %v3396 = vcvt.f32.s32 %v3390
    %v3397 = vshll.u32 %v3396, 16
    %v3398 = vadd.s32 %v3397, %v3395
    %vm3399 = vcmp.lt.s32.totalorder %v3227, %v3228
    %v3400 = vsel %vm3399, %v3227, %v3228
    %v3401 = vand.u32 %v3400, 65535
    %v3402 = vshra.s32 %v3400, 16
    %v3403 = vcvt.s32.f32 %v3401
    %v3404 = vcvt.s32.f32 %v3402
    %3405 = vmin.xlane.f32.xlu0 %v3404
    %v3406 = vpop.xlane.xlu0 %3405
    %vm3407 = vcmp.eq.f32.partialorder %v3404, %v3406
    %v3408 = vsel %vm3407, %v3403, inf
    %3409 = vmin.xlane.f32.xlu0 %v3408
    %v3410 = vpop.xlane.xlu0 %3409
    %v3411 = vcvt.f32.s32 %v3410
    %v3412 = vcvt.f32.s32 %v3406
    %v3413 = vshll.u32 %v3412, 16
    %v3414 = vadd.s32 %v3413, %v3411
    %vm3415 = vcmp.lt.s32.totalorder %v3229, %v3230
    %v3416 = vsel %vm3415, %v3229, %v3230
    %v3417 = vand.u32 %v3416, 65535
    %v3418 = vshra.s32 %v3416, 16
    %v3419 = vcvt.s32.f32 %v3417
    %v3420 = vcvt.s32.f32 %v3418
    %3421 = vmin.xlane.f32.xlu0 %v3420
    %v3422 = vpop.xlane.xlu0 %3421
    %vm3423 = vcmp.eq.f32.partialorder %v3420, %v3422
    %v3424 = vsel %vm3423, %v3419, inf
    %3425 = vmin.xlane.f32.xlu0 %v3424
    %v3426 = vpop.xlane.xlu0 %3425
    %v3427 = vcvt.f32.s32 %v3426
    %v3428 = vcvt.f32.s32 %v3422
    %v3429 = vshll.u32 %v3428, 16
    %v3430 = vadd.s32 %v3429, %v3427
    %vm3431 = vcmp.lt.s32.totalorder %v3231, %v3232
    %v3432 = vsel %vm3431, %v3231, %v3232
    %v3433 = vand.u32 %v3432, 65535
    %v3434 = vshra.s32 %v3432, 16
    %v3435 = vcvt.s32.f32 %v3433
    %v3436 = vcvt.s32.f32 %v3434
    %3437 = vmin.xlane.f32.xlu0 %v3436
    %v3438 = vpop.xlane.xlu0 %3437
    %vm3439 = vcmp.eq.f32.partialorder %v3436, %v3438
    %v3440 = vsel %vm3439, %v3435, inf
    %3441 = vmin.xlane.f32.xlu0 %v3440
    %v3442 = vpop.xlane.xlu0 %3441
    %v3443 = vcvt.f32.s32 %v3442
    %v3444 = vcvt.f32.s32 %v3438
    %v3445 = vshll.u32 %v3444, 16
    %v3446 = vadd.s32 %v3445, %v3443
    %vm3447 = vcmp.lt.s32.totalorder %v3233, %v3234
    %v3448 = vsel %vm3447, %v3233, %v3234
    %v3449 = vand.u32 %v3448, 65535
    %v3450 = vshra.s32 %v3448, 16
    %v3451 = vcvt.s32.f32 %v3449
    %v3452 = vcvt.s32.f32 %v3450
    %3453 = vmin.xlane.f32.xlu0 %v3452
    %v3454 = vpop.xlane.xlu0 %3453
    %vm3455 = vcmp.eq.f32.partialorder %v3452, %v3454
    %v3456 = vsel %vm3455, %v3451, inf
    %3457 = vmin.xlane.f32.xlu0 %v3456
    %v3458 = vpop.xlane.xlu0 %3457
    %v3459 = vcvt.f32.s32 %v3458
    %v3460 = vcvt.f32.s32 %v3454
    %v3461 = vshll.u32 %v3460, 16
    %v3462 = vadd.s32 %v3461, %v3459
    %vm3463 = vcmp.lt.s32.totalorder %v3235, %v3236
    %v3464 = vsel %vm3463, %v3235, %v3236
    %v3465 = vand.u32 %v3464, 65535
    %v3466 = vshra.s32 %v3464, 16
    %v3467 = vcvt.s32.f32 %v3465
    %v3468 = vcvt.s32.f32 %v3466
    %3469 = vmin.xlane.f32.xlu0 %v3468
    %v3470 = vpop.xlane.xlu0 %3469
    %vm3471 = vcmp.eq.f32.partialorder %v3468, %v3470
    %v3472 = vsel %vm3471, %v3467, inf
    %3473 = vmin.xlane.f32.xlu0 %v3472
    %v3474 = vpop.xlane.xlu0 %3473
    %v3475 = vcvt.f32.s32 %v3474
    %v3476 = vcvt.f32.s32 %v3470
    %v3477 = vshll.u32 %v3476, 16
    %v3478 = vadd.s32 %v3477, %v3475
    %vm3479 = vcmp.lt.s32.totalorder %v3237, %v3238
    %v3480 = vsel %vm3479, %v3237, %v3238
    %v3481 = vand.u32 %v3480, 65535
    %v3482 = vshra.s32 %v3480, 16
    %v3483 = vcvt.s32.f32 %v3481
    %v3484 = vcvt.s32.f32 %v3482
    %3485 = vmin.xlane.f32.xlu0 %v3484
    %v3486 = vpop.xlane.xlu0 %3485
    %vm3487 = vcmp.eq.f32.partialorder %v3484, %v3486
    %v3488 = vsel %vm3487, %v3483, inf
    %3489 = vmin.xlane.f32.xlu0 %v3488
    %v3490 = vpop.xlane.xlu0 %3489
    %v3491 = vcvt.f32.s32 %v3490
    %v3492 = vcvt.f32.s32 %v3486
    %v3493 = vshll.u32 %v3492, 16
    %v3494 = vadd.s32 %v3493, %v3491
    %v3511 = vlaneseq
    %v3512 = vshrl.u32 %v3511, 7
    %v3513 = vsub.s32 %v173, %v3512
    %v3514 = vrot.slane %v3129, %v3513
    %v3515 = vlaneseq
    %v3516 = vshrl.u32 %v3515, 7
    %v3517 = vsub.s32 %v1892, %v3516
    %v3518 = vrot.slane %v3132, %v3517
    %v3519 = vsel %vm1897, %v3518, %v3514
    %v3520 = vlaneseq
    %v3521 = vshrl.u32 %v3520, 7
    %v3522 = vsub.s32 %v1899, %v3521
    %v3523 = vrot.slane %v3135, %v3522
    %v3524 = vsel %vm1904, %v3523, %v3519
    %v3525 = vlaneseq
    %v3526 = vshrl.u32 %v3525, 7
    %v3527 = vsub.s32 %v1906, %v3526
    %v3528 = vrot.slane %v3138, %v3527
    %v3529 = vsel %vm1911, %v3528, %v3524
    %v3530 = vlaneseq
    %v3531 = vshrl.u32 %v3530, 7
    %v3532 = vsub.s32 %v1913, %v3531
    %v3533 = vrot.slane %v3141, %v3532
    %v3534 = vsel %vm1918, %v3533, %v3529
    %v3535 = vlaneseq
    %v3536 = vshrl.u32 %v3535, 7
    %v3537 = vsub.s32 %v1920, %v3536
    %v3538 = vrot.slane %v3144, %v3537
    %v3539 = vsel %vm1925, %v3538, %v3534
    %v3540 = vlaneseq
    %v3541 = vshrl.u32 %v3540, 7
    %v3542 = vsub.s32 %v1927, %v3541
    %v3543 = vrot.slane %v3147, %v3542
    %v3544 = vsel %vm1932, %v3543, %v3539
    %v3545 = vlaneseq
    %v3546 = vshrl.u32 %v3545, 7
    %v3547 = vsub.s32 %v1934, %v3546
    %v3548 = vrot.slane %v3150, %v3547
    %v3549 = vsel %vm1939, %v3548, %v3544
    %v3550 = vlaneseq
    %v3551 = vshrl.u32 %v3550, 7
    %v3552 = vsub.s32 %v1941, %v3551
    %v3553 = vrot.slane %v3153, %v3552
    %v3554 = vsel %vm1946, %v3553, %v3549
    %v3555 = vlaneseq
    %v3556 = vshrl.u32 %v3555, 7
    %v3557 = vsub.s32 %v1948, %v3556
    %v3558 = vrot.slane %v3156, %v3557
    %v3559 = vsel %vm1953, %v3558, %v3554
    %v3560 = vlaneseq
    %v3561 = vshrl.u32 %v3560, 7
    %v3562 = vsub.s32 %v1955, %v3561
    %v3563 = vrot.slane %v3159, %v3562
    %v3564 = vsel %vm1960, %v3563, %v3559
    %v3565 = vlaneseq
    %v3566 = vshrl.u32 %v3565, 7
    %v3567 = vsub.s32 %v1962, %v3566
    %v3568 = vrot.slane %v3162, %v3567
    %v3569 = vsel %vm1967, %v3568, %v3564
    %v3570 = vlaneseq
    %v3571 = vshrl.u32 %v3570, 7
    %v3572 = vsub.s32 %v1969, %v3571
    %v3573 = vrot.slane %v3165, %v3572
    %v3574 = vsel %vm1974, %v3573, %v3569
    %v3575 = vlaneseq
    %v3576 = vshrl.u32 %v3575, 7
    %v3577 = vsub.s32 %v1976, %v3576
    %v3578 = vrot.slane %v3168, %v3577
    %v3579 = vsel %vm1981, %v3578, %v3574
    %v3580 = vlaneseq
    %v3581 = vshrl.u32 %v3580, 7
    %v3582 = vsub.s32 %v1983, %v3581
    %v3583 = vrot.slane %v3171, %v3582
    %v3584 = vsel %vm1988, %v3583, %v3579
    %v3585 = vlaneseq
    %v3586 = vshrl.u32 %v3585, 7
    %v3587 = vsub.s32 %v1990, %v3586
    %v3588 = vrot.slane %v3174, %v3587
    %v3589 = vsel %vm1995, %v3588, %v3584
    %3591 = vst [vmem:[#allocation11 + $0x1] sm:$0x1] %v3589
    %v3592 = vlaneseq
    %v3593 = vshrl.u32 %v3592, 7
    %v3594 = vsub.s32 %v173, %v3593
    %v3595 = vrot.slane %v3254, %v3594
    %v3596 = vlaneseq
    %v3597 = vshrl.u32 %v3596, 7
    %v3598 = vsub.s32 %v1892, %v3597
    %v3599 = vrot.slane %v3270, %v3598
    %v3600 = vsel %vm1897, %v3599, %v3595
    %v3601 = vlaneseq
    %v3602 = vshrl.u32 %v3601, 7
    %v3603 = vsub.s32 %v1899, %v3602
    %v3604 = vrot.slane %v3286, %v3603
    %v3605 = vsel %vm1904, %v3604, %v3600
    %v3606 = vlaneseq
    %v3607 = vshrl.u32 %v3606, 7
    %v3608 = vsub.s32 %v1906, %v3607
    %v3609 = vrot.slane %v3302, %v3608
    %v3610 = vsel %vm1911, %v3609, %v3605
    %v3611 = vlaneseq
    %v3612 = vshrl.u32 %v3611, 7
    %v3613 = vsub.s32 %v1913, %v3612
    %v3614 = vrot.slane %v3318, %v3613
    %v3615 = vsel %vm1918, %v3614, %v3610
    %v3616 = vlaneseq
    %v3617 = vshrl.u32 %v3616, 7
    %v3618 = vsub.s32 %v1920, %v3617
    %v3619 = vrot.slane %v3334, %v3618
    %v3620 = vsel %vm1925, %v3619, %v3615
    %v3621 = vlaneseq
    %v3622 = vshrl.u32 %v3621, 7
    %v3623 = vsub.s32 %v1927, %v3622
    %v3624 = vrot.slane %v3350, %v3623
    %v3625 = vsel %vm1932, %v3624, %v3620
    %v3626 = vlaneseq
    %v3627 = vshrl.u32 %v3626, 7
    %v3628 = vsub.s32 %v1934, %v3627
    %v3629 = vrot.slane %v3366, %v3628
    %v3630 = vsel %vm1939, %v3629, %v3625
    %v3631 = vlaneseq
    %v3632 = vshrl.u32 %v3631, 7
    %v3633 = vsub.s32 %v1941, %v3632
    %v3634 = vrot.slane %v3382, %v3633
    %v3635 = vsel %vm1946, %v3634, %v3630
    %v3636 = vlaneseq
    %v3637 = vshrl.u32 %v3636, 7
    %v3638 = vsub.s32 %v1948, %v3637
    %v3639 = vrot.slane %v3398, %v3638
    %v3640 = vsel %vm1953, %v3639, %v3635
    %v3641 = vlaneseq
    %v3642 = vshrl.u32 %v3641, 7
    %v3643 = vsub.s32 %v1955, %v3642
    %v3644 = vrot.slane %v3414, %v3643
    %v3645 = vsel %vm1960, %v3644, %v3640
    %v3646 = vlaneseq
    %v3647 = vshrl.u32 %v3646, 7
    %v3648 = vsub.s32 %v1962, %v3647
    %v3649 = vrot.slane %v3430, %v3648
    %v3650 = vsel %vm1967, %v3649, %v3645
    %v3651 = vlaneseq
    %v3652 = vshrl.u32 %v3651, 7
    %v3653 = vsub.s32 %v1969, %v3652
    %v3654 = vrot.slane %v3446, %v3653
    %v3655 = vsel %vm1974, %v3654, %v3650
    %v3656 = vlaneseq
    %v3657 = vshrl.u32 %v3656, 7
    %v3658 = vsub.s32 %v1976, %v3657
    %v3659 = vrot.slane %v3462, %v3658
    %v3660 = vsel %vm1981, %v3659, %v3655
    %v3661 = vlaneseq
    %v3662 = vshrl.u32 %v3661, 7
    %v3663 = vsub.s32 %v1983, %v3662
    %v3664 = vrot.slane %v3478, %v3663
    %v3665 = vsel %vm1988, %v3664, %v3660
    %v3666 = vlaneseq
    %v3667 = vshrl.u32 %v3666, 7
    %v3668 = vsub.s32 %v1990, %v3667
    %v3669 = vrot.slane %v3494, %v3668
    %v3670 = vsel %vm1995, %v3669, %v3665
    %3671 = vst [vmem:[#allocation12 + $0x1] sm:$0x1] %v3670
    // Predicated region
    $region74: #{tpu_custom_call.1} parent=1 // pred_check
      _
    $region75: #{tpu_custom_call.1} parent=1 // pred_check_branch
      %3673 = sbr.rel (0) target = $region77
    $region76: #{tpu_custom_call.1} parent=1 // pred_region
      %s3675 = ssub.s32 32, 32
      %3676 = vsyncadd [#allocation4], %s3675
      %s3678 = sshll.u32 [#allocation11], 4
      %s3679 = int_to_ptr.vmem [resolvable:$true] %s3678
      %3681 = dma.vmem_to_hbm [thread:$0]  %s3679, 32, %s13, [#allocation4]
    $region77: #{tpu_custom_call.1} parent=1 // pred_fallthru
      _
    // Predicated region
    $region78: #{tpu_custom_call.1} parent=1 // pred_check
      _
    $region79: #{tpu_custom_call.1} parent=1 // pred_check_branch
      %3683 = sbr.rel (0) target = $region81
    $region80: #{tpu_custom_call.1} parent=1 // pred_region
      %s3685 = ssub.s32 32, 32
      %3686 = vsyncadd [#allocation13], %s3685
      %s3688 = sshll.u32 [#allocation12], 4
      %s3689 = int_to_ptr.vmem [resolvable:$true] %s3688
      %3691 = dma.vmem_to_hbm [thread:$0]  %s3689, 32, %s14, [#allocation13]
    $region81: #{tpu_custom_call.1} parent=1 // pred_fallthru
      _
    // Predicated region
    $region82: #{tpu_custom_call.1} parent=1 // pred_check
      _
    $region83: #{tpu_custom_call.1} parent=1 // pred_check_branch
      %3693 = sbr.rel (0) target = $region85
    $region84: #{tpu_custom_call.1} parent=1 // pred_region
      %3694 = dma.done [#allocation4], 32
    $region85: #{tpu_custom_call.1} parent=1 // pred_fallthru
      _
    // Predicated region
    $region86: #{tpu_custom_call.1} parent=1 // pred_check
      _
    $region87: #{tpu_custom_call.1} parent=1 // pred_check_branch
      %3696 = sbr.rel (0) target = $region89
    $region88: #{tpu_custom_call.1} parent=1 // pred_region
      %3697 = dma.done [#allocation13], 32
    $region89: #{tpu_custom_call.1} parent=1 // pred_fallthru
      _
    %3698 = vsyncpa [#allocation3], 1
    %3699 = vsyncpa [#allocation6], 1
    %3700 = vsyncpa [#allocation9], 1
    %3701 = vsyncpa [#allocation4], 1
    %3702 = vsyncpa [#allocation13], 1

</llo_original>
